<compile_context>
chip_gen: v7x
topology: tpu7x:2x2x1
jax: 0.10.0
libtpu: 0.0.40
codegen_flags: <defaults>
</compile_context>

<pallas_src>
import functools

import numpy as np
import jax
import jax.numpy as jnp
from jax.experimental import pallas as pl
from jax.experimental.pallas import tpu as pltpu


# ----------------------------------------------------------------------------
# Fused Pallas kernel:  LeakyReLU(concat(xs)) -> 3x3 conv -> bias -> BatchNorm
# ----------------------------------------------------------------------------
def _block_kernel(*refs, n_inputs, H, W, neg_slope):
    x_refs = refs[:n_inputs]                 # each (1, H, W, Ci)  f32
    w_refs = refs[n_inputs:2 * n_inputs]     # each (9, Ci, Cout)  bf16 (BN scale folded)
    b_ref = refs[2 * n_inputs]               # (1, Cout)           f32 (fused bias/shift)
    o_ref = refs[2 * n_inputs + 1]           # (1, H*W, Cout)      f32

    HW = H * W
    cout = o_ref.shape[-1]

    # Accumulator starts at the fused conv-bias + BatchNorm shift (bias folded into
    # the accumulator init instead of an epilogue add / extra operand stream).
    acc = jnp.broadcast_to(b_ref[...], (HW, cout)).astype(jnp.float32)

    for x_ref, w_ref in zip(x_refs, w_refs):
        ci = x_ref.shape[-1]
        x = x_ref[0]                                           # (H, W, Ci)
        # LeakyReLU(0.2) in f32 on the VPU (elementwise commutes with channel concat).
        x = jnp.where(x >= 0.0, x, x * neg_slope)
        # Zero-pad H and W by 1 entirely in VMEM (concatenate, no HBM im2col).
        zr = jnp.zeros((1, W, ci), x.dtype)
        xp = jnp.concatenate([zr, x, zr], axis=0)              # (H+2, W,   Ci)
        zc = jnp.zeros((H + 2, 1, ci), x.dtype)
        xp = jnp.concatenate([zc, xp, zc], axis=1)             # (H+2, W+2, Ci)
        # 3x3 conv = 9 accumulated MXU matmuls over shifted views.
        for dh in range(3):
            for dw in range(3):
                patch = xp[dh:dh + H, dw:dw + W, :].reshape(HW, ci)
                acc = acc + jnp.dot(patch.astype(jnp.bfloat16),
                                    w_ref[dh * 3 + dw],
                                    preferred_element_type=jnp.float32)

    o_ref[...] = acc[None].astype(o_ref.dtype)


# ----------------------------------------------------------------------------
# Wrapper
# ----------------------------------------------------------------------------
def block_forward(xs_nchw, params, *, neg_slope=0.2):
    n_inputs = len(xs_nchw)
    N, _, H, W = xs_nchw[0].shape
    cout = int(params["bias_folded"].shape[-1])

    # NCHW -> NHWC (one-time layout plumbing; channels go on the lane axis for the MXU).
    xs_nhwc = [jnp.transpose(x, (0, 2, 3, 1)) for x in xs_nchw]

    kern = functools.partial(_block_kernel, n_inputs=n_inputs, H=H, W=W,
                             neg_slope=neg_slope)

    in_specs = (
        [pl.BlockSpec((1, H, W, int(x.shape[-1])), lambda n: (n, 0, 0, 0))
         for x in xs_nhwc]
        + [pl.BlockSpec(tuple(int(d) for d in w.shape), lambda n: (0, 0, 0))
           for w in params["w_folded"]]
        + [pl.BlockSpec((1, cout), lambda n: (0, 0))]
    )

    out = pl.pallas_call(
        kern,
        out_shape=jax.ShapeDtypeStruct((N, H * W, cout), jnp.float32),
        grid=(N,),
        in_specs=in_specs,
        out_specs=pl.BlockSpec((1, H * W, cout), lambda n: (n, 0, 0)),
        compiler_params=pltpu.CompilerParams(
            dimension_semantics=("parallel",),
            vmem_limit_bytes=32 * 1024 * 1024),
    )(*xs_nhwc, *params["w_folded"], params["bias_folded"])

    # back to NCHW
    return jnp.transpose(out.reshape(N, H, W, cout), (0, 3, 1, 2))


# ----------------------------------------------------------------------------
# Parameters (synthetic, deterministic): 3x3 conv + eval-mode BatchNorm, pre-folded
# ----------------------------------------------------------------------------
def init_block(key, in_channels_list, out_channels, eps=1e-5):
    cin = int(sum(in_channels_list))
    ks = jax.random.split(key, 6)
    w_full = (jax.random.normal(ks[0], (out_channels, cin, 3, 3), jnp.float32)
              / np.sqrt(9.0 * cin))
    conv_b = 0.01 * jax.random.normal(ks[1], (out_channels,), jnp.float32)
    gamma = 1.0 + 0.1 * jax.random.normal(ks[2], (out_channels,), jnp.float32)
    beta = 0.1 * jax.random.normal(ks[3], (out_channels,), jnp.float32)
    mean = 0.1 * jax.random.normal(ks[4], (out_channels,), jnp.float32)
    var = 1.0 + 0.1 * jnp.abs(jax.random.normal(ks[5], (out_channels,), jnp.float32))

    # Fold eval-mode BatchNorm into the conv:  y = (conv + b - mean) * s + beta
    scale = gamma / jnp.sqrt(var + eps)                                # (Cout,)
    bias_folded = ((conv_b - mean) * scale + beta).reshape(1, out_channels)

    # Split the conv weight along the input-channel axis (one chunk per input of
    # Block.forward(*xs)), re-layout to (9, Ci, Cout), fold the BN scale in, cast bf16.
    w_folded = []
    off = 0
    for ci in in_channels_list:
        wi = w_full[:, off:off + ci, :, :]                             # (Cout, Ci, 3, 3)
        wi = jnp.transpose(wi, (2, 3, 1, 0)).reshape(9, ci, out_channels)
        w_folded.append((wi * scale[None, None, :]).astype(jnp.bfloat16))
        off += ci

    return dict(w_folded=w_folded, bias_folded=bias_folded,
                w_full=w_full, conv_b=conv_b, bn_gamma=gamma, bn_beta=beta,
                bn_mean=mean, bn_var=var, bn_eps=eps)


# ----------------------------------------------------------------------------
# Pure-JAX reference (for correctness check)
# ----------------------------------------------------------------------------
def block_reference(xs_nchw, p, *, neg_slope=0.2):
    x = jnp.concatenate(xs_nchw, axis=1)
    x = jnp.where(x >= 0.0, x, neg_slope * x)
    y = jax.lax.conv_general_dilated(
        x, p["w_full"], window_strides=(1, 1), padding=((1, 1), (1, 1)),
        dimension_numbers=("NCHW", "OIHW", "NCHW"),
        precision=jax.lax.Precision.HIGHEST)
    y = y + p["conv_b"][None, :, None, None]
    s = (p["bn_gamma"] / jnp.sqrt(p["bn_var"] + p["bn_eps"]))[None, :, None, None]
    return (y - p["bn_mean"][None, :, None, None]) * s + p["bn_beta"][None, :, None, None]


# ----------------------------------------------------------------------------
# main
# ----------------------------------------------------------------------------
if __name__ == "__main__":
    key = jax.random.PRNGKey(0)
    k_p, k_x1, k_x2 = jax.random.split(key, 3)

    N, H, W = 2, 16, 16
    in_channels = (4, 4)        # Block.forward(*xs): two inputs concatenated on channels
    out_channels = 8

    params = init_block(k_p, in_channels, out_channels)
    x1 = jax.random.normal(k_x1, (N, in_channels[0], H, W), jnp.float32)
    x2 = jax.random.normal(k_x2, (N, in_channels[1], H, W), jnp.float32)

    fwd = jax.jit(lambda a, b: block_forward([a, b], params))
    y = fwd(x1, x2)
    jax.block_until_ready(y)

    assert y.shape == (N, out_channels, H, W)
    assert bool(jnp.all(jnp.isfinite(y)))

    # correctness vs pure-JAX/XLA reference (bf16 MXU operands -> loose tolerance)
    y_ref = block_reference([x1, x2], params)
    np.testing.assert_allclose(np.asarray(y), np.asarray(y_ref), rtol=5e-2, atol=5e-2)

    print("KERNEL_OK")
</pallas_src>

<mosaic_0001>
module attributes {stable_mosaic.version = 11 : i64} {
  func.func @_block_kernel(%arg0: i32, %arg1: memref<1x16x16x4xf32, #tpu.memory_space<vmem>>, %arg2: memref<1x16x16x4xf32, #tpu.memory_space<vmem>>, %arg3: memref<9x4x8xbf16, #tpu.memory_space<vmem>>, %arg4: memref<9x4x8xbf16, #tpu.memory_space<vmem>>, %arg5: memref<1x8xf32, #tpu.memory_space<vmem>>, %arg6: memref<1x256x8xf32, #tpu.memory_space<vmem>>) attributes {dimension_semantics = [#tpu.dimension_semantics<parallel>], iteration_bounds = array<i64: 2>, scalar_prefetch = 0 : i64, scratch_operands = 0 : i64, tpu.core_type = #tpu.core_type<tc>, window_params = [{transform_indices = @transform_0, window_bounds = array<i64: 1, 16, 16, 4>}, {transform_indices = @transform_1, window_bounds = array<i64: 1, 16, 16, 4>}, {pipeline_mode = #tpu.pipeline_mode<synchronous>, transform_indices = @transform_2, window_bounds = array<i64: 9, 4, 8>}, {pipeline_mode = #tpu.pipeline_mode<synchronous>, transform_indices = @transform_3, window_bounds = array<i64: 9, 4, 8>}, {pipeline_mode = #tpu.pipeline_mode<synchronous>, transform_indices = @transform_4, window_bounds = array<i64: 1, 8>}, {transform_indices = @transform_5, window_bounds = array<i64: 1, 256, 8>}]} {
    %c0 = arith.constant 0 : index
    %c0_0 = arith.constant 0 : index
    %0 = vector.load %arg5[%c0, %c0_0] : memref<1x8xf32, #tpu.memory_space<vmem>>, vector<1x8xf32>
    %1 = vector.shape_cast %0 : vector<1x8xf32> to vector<1x8xf32>
    %2 = vector.broadcast %1 : vector<1x8xf32> to vector<256x8xf32>
    %c0_1 = arith.constant 0 : index
    %c0_2 = arith.constant 0 : index
    %c0_3 = arith.constant 0 : index
    %c0_4 = arith.constant 0 : index
    %3 = vector.load %arg1[%c0_1, %c0_2, %c0_3, %c0_4] : memref<1x16x16x4xf32, #tpu.memory_space<vmem>>, vector<1x16x16x4xf32>
    %4 = vector.shape_cast %3 : vector<1x16x16x4xf32> to vector<16x16x4xf32>
    %cst = arith.constant 0.000000e+00 : f32
    %5 = vector.broadcast %cst : f32 to vector<16x16x4xf32>
    %6 = arith.cmpf oge, %4, %5 : vector<16x16x4xf32>
    %cst_5 = arith.constant 2.000000e-01 : f32
    %7 = vector.broadcast %cst_5 : f32 to vector<16x16x4xf32>
    %8 = arith.mulf %4, %7 : vector<16x16x4xf32>
    %9 = arith.select %6, %4, %8 : vector<16x16x4xi1>, vector<16x16x4xf32>
    %cst_6 = arith.constant 0.000000e+00 : f32
    %10 = vector.broadcast %cst_6 : f32 to vector<1x16x4xf32>
    %11 = tpu.concatenate %10, %9, %10 in 0 : vector<1x16x4xf32>, vector<16x16x4xf32>, vector<1x16x4xf32> -> vector<18x16x4xf32>
    %cst_7 = arith.constant 0.000000e+00 : f32
    %12 = vector.broadcast %cst_7 : f32 to vector<18x1x4xf32>
    %13 = tpu.concatenate %12, %11, %12 in 1 : vector<18x1x4xf32>, vector<18x16x4xf32>, vector<18x1x4xf32> -> vector<18x18x4xf32>
    %14 = vector.extract_strided_slice %13 {offsets = [0, 0, 0], sizes = [16, 16, 4], strides = [1, 1, 1]} : vector<18x18x4xf32> to vector<16x16x4xf32>
    %15 = vector.shape_cast %14 : vector<16x16x4xf32> to vector<256x4xf32>
    %16 = arith.truncf %15 : vector<256x4xf32> to vector<256x4xbf16>
    %c0_8 = arith.constant 0 : index
    %c0_9 = arith.constant 0 : index
    %c0_10 = arith.constant 0 : index
    %17 = vector.load %arg3[%c0_8, %c0_9, %c0_10] : memref<9x4x8xbf16, #tpu.memory_space<vmem>>, vector<1x4x8xbf16>
    %18 = vector.shape_cast %17 : vector<1x4x8xbf16> to vector<4x8xbf16>
    %cst_11 = arith.constant dense<0.000000e+00> : vector<256x8xf32>
    %19 = tpu.matmul %16, %18, %cst_11 {dimension_numbers = #tpu.dot_dimension_numbers<[1], [0], [0], [1], [0, 0, 1, 1], [], []>} : vector<256x4xbf16>, vector<4x8xbf16>, vector<256x8xf32> -> vector<256x8xf32>
    %20 = arith.addf %2, %19 : vector<256x8xf32>
    %21 = vector.extract_strided_slice %13 {offsets = [0, 1, 0], sizes = [16, 16, 4], strides = [1, 1, 1]} : vector<18x18x4xf32> to vector<16x16x4xf32>
    %22 = vector.shape_cast %21 : vector<16x16x4xf32> to vector<256x4xf32>
    %23 = arith.truncf %22 : vector<256x4xf32> to vector<256x4xbf16>
    %c1 = arith.constant 1 : index
    %c0_12 = arith.constant 0 : index
    %c0_13 = arith.constant 0 : index
    %24 = vector.load %arg3[%c1, %c0_12, %c0_13] : memref<9x4x8xbf16, #tpu.memory_space<vmem>>, vector<1x4x8xbf16>
    %25 = vector.shape_cast %24 : vector<1x4x8xbf16> to vector<4x8xbf16>
    %cst_14 = arith.constant dense<0.000000e+00> : vector<256x8xf32>
    %26 = tpu.matmul %23, %25, %cst_14 {dimension_numbers = #tpu.dot_dimension_numbers<[1], [0], [0], [1], [0, 0, 1, 1], [], []>} : vector<256x4xbf16>, vector<4x8xbf16>, vector<256x8xf32> -> vector<256x8xf32>
    %27 = arith.addf %20, %26 : vector<256x8xf32>
    %28 = vector.extract_strided_slice %13 {offsets = [0, 2, 0], sizes = [16, 16, 4], strides = [1, 1, 1]} : vector<18x18x4xf32> to vector<16x16x4xf32>
    %29 = vector.shape_cast %28 : vector<16x16x4xf32> to vector<256x4xf32>
    %30 = arith.truncf %29 : vector<256x4xf32> to vector<256x4xbf16>
    %c2 = arith.constant 2 : index
    %c0_15 = arith.constant 0 : index
    %c0_16 = arith.constant 0 : index
    %31 = vector.load %arg3[%c2, %c0_15, %c0_16] : memref<9x4x8xbf16, #tpu.memory_space<vmem>>, vector<1x4x8xbf16>
    %32 = vector.shape_cast %31 : vector<1x4x8xbf16> to vector<4x8xbf16>
    %cst_17 = arith.constant dense<0.000000e+00> : vector<256x8xf32>
    %33 = tpu.matmul %30, %32, %cst_17 {dimension_numbers = #tpu.dot_dimension_numbers<[1], [0], [0], [1], [0, 0, 1, 1], [], []>} : vector<256x4xbf16>, vector<4x8xbf16>, vector<256x8xf32> -> vector<256x8xf32>
    %34 = arith.addf %27, %33 : vector<256x8xf32>
    %35 = vector.extract_strided_slice %13 {offsets = [1, 0, 0], sizes = [16, 16, 4], strides = [1, 1, 1]} : vector<18x18x4xf32> to vector<16x16x4xf32>
    %36 = vector.shape_cast %35 : vector<16x16x4xf32> to vector<256x4xf32>
    %37 = arith.truncf %36 : vector<256x4xf32> to vector<256x4xbf16>
    %c3 = arith.constant 3 : index
    %c0_18 = arith.constant 0 : index
    %c0_19 = arith.constant 0 : index
    %38 = vector.load %arg3[%c3, %c0_18, %c0_19] : memref<9x4x8xbf16, #tpu.memory_space<vmem>>, vector<1x4x8xbf16>
    %39 = vector.shape_cast %38 : vector<1x4x8xbf16> to vector<4x8xbf16>
    %cst_20 = arith.constant dense<0.000000e+00> : vector<256x8xf32>
    %40 = tpu.matmul %37, %39, %cst_20 {dimension_numbers = #tpu.dot_dimension_numbers<[1], [0], [0], [1], [0, 0, 1, 1], [], []>} : vector<256x4xbf16>, vector<4x8xbf16>, vector<256x8xf32> -> vector<256x8xf32>
    %41 = arith.addf %34, %40 : vector<256x8xf32>
    %42 = vector.extract_strided_slice %13 {offsets = [1, 1, 0], sizes = [16, 16, 4], strides = [1, 1, 1]} : vector<18x18x4xf32> to vector<16x16x4xf32>
    %43 = vector.shape_cast %42 : vector<16x16x4xf32> to vector<256x4xf32>
    %44 = arith.truncf %43 : vector<256x4xf32> to vector<256x4xbf16>
    %c4 = arith.constant 4 : index
    %c0_21 = arith.constant 0 : index
    %c0_22 = arith.constant 0 : index
    %45 = vector.load %arg3[%c4, %c0_21, %c0_22] : memref<9x4x8xbf16, #tpu.memory_space<vmem>>, vector<1x4x8xbf16>
    %46 = vector.shape_cast %45 : vector<1x4x8xbf16> to vector<4x8xbf16>
    %cst_23 = arith.constant dense<0.000000e+00> : vector<256x8xf32>
    %47 = tpu.matmul %44, %46, %cst_23 {dimension_numbers = #tpu.dot_dimension_numbers<[1], [0], [0], [1], [0, 0, 1, 1], [], []>} : vector<256x4xbf16>, vector<4x8xbf16>, vector<256x8xf32> -> vector<256x8xf32>
    %48 = arith.addf %41, %47 : vector<256x8xf32>
    %49 = vector.extract_strided_slice %13 {offsets = [1, 2, 0], sizes = [16, 16, 4], strides = [1, 1, 1]} : vector<18x18x4xf32> to vector<16x16x4xf32>
    %50 = vector.shape_cast %49 : vector<16x16x4xf32> to vector<256x4xf32>
    %51 = arith.truncf %50 : vector<256x4xf32> to vector<256x4xbf16>
    %c5 = arith.constant 5 : index
    %c0_24 = arith.constant 0 : index
    %c0_25 = arith.constant 0 : index
    %52 = vector.load %arg3[%c5, %c0_24, %c0_25] : memref<9x4x8xbf16, #tpu.memory_space<vmem>>, vector<1x4x8xbf16>
    %53 = vector.shape_cast %52 : vector<1x4x8xbf16> to vector<4x8xbf16>
    %cst_26 = arith.constant dense<0.000000e+00> : vector<256x8xf32>
    %54 = tpu.matmul %51, %53, %cst_26 {dimension_numbers = #tpu.dot_dimension_numbers<[1], [0], [0], [1], [0, 0, 1, 1], [], []>} : vector<256x4xbf16>, vector<4x8xbf16>, vector<256x8xf32> -> vector<256x8xf32>
    %55 = arith.addf %48, %54 : vector<256x8xf32>
    %56 = vector.extract_strided_slice %13 {offsets = [2, 0, 0], sizes = [16, 16, 4], strides = [1, 1, 1]} : vector<18x18x4xf32> to vector<16x16x4xf32>
    %57 = vector.shape_cast %56 : vector<16x16x4xf32> to vector<256x4xf32>
    %58 = arith.truncf %57 : vector<256x4xf32> to vector<256x4xbf16>
    %c6 = arith.constant 6 : index
    %c0_27 = arith.constant 0 : index
    %c0_28 = arith.constant 0 : index
    %59 = vector.load %arg3[%c6, %c0_27, %c0_28] : memref<9x4x8xbf16, #tpu.memory_space<vmem>>, vector<1x4x8xbf16>
    %60 = vector.shape_cast %59 : vector<1x4x8xbf16> to vector<4x8xbf16>
    %cst_29 = arith.constant dense<0.000000e+00> : vector<256x8xf32>
    %61 = tpu.matmul %58, %60, %cst_29 {dimension_numbers = #tpu.dot_dimension_numbers<[1], [0], [0], [1], [0, 0, 1, 1], [], []>} : vector<256x4xbf16>, vector<4x8xbf16>, vector<256x8xf32> -> vector<256x8xf32>
    %62 = arith.addf %55, %61 : vector<256x8xf32>
    %63 = vector.extract_strided_slice %13 {offsets = [2, 1, 0], sizes = [16, 16, 4], strides = [1, 1, 1]} : vector<18x18x4xf32> to vector<16x16x4xf32>
    %64 = vector.shape_cast %63 : vector<16x16x4xf32> to vector<256x4xf32>
    %65 = arith.truncf %64 : vector<256x4xf32> to vector<256x4xbf16>
    %c7 = arith.constant 7 : index
    %c0_30 = arith.constant 0 : index
    %c0_31 = arith.constant 0 : index
    %66 = vector.load %arg3[%c7, %c0_30, %c0_31] : memref<9x4x8xbf16, #tpu.memory_space<vmem>>, vector<1x4x8xbf16>
    %67 = vector.shape_cast %66 : vector<1x4x8xbf16> to vector<4x8xbf16>
    %cst_32 = arith.constant dense<0.000000e+00> : vector<256x8xf32>
    %68 = tpu.matmul %65, %67, %cst_32 {dimension_numbers = #tpu.dot_dimension_numbers<[1], [0], [0], [1], [0, 0, 1, 1], [], []>} : vector<256x4xbf16>, vector<4x8xbf16>, vector<256x8xf32> -> vector<256x8xf32>
    %69 = arith.addf %62, %68 : vector<256x8xf32>
    %70 = vector.extract_strided_slice %13 {offsets = [2, 2, 0], sizes = [16, 16, 4], strides = [1, 1, 1]} : vector<18x18x4xf32> to vector<16x16x4xf32>
    %71 = vector.shape_cast %70 : vector<16x16x4xf32> to vector<256x4xf32>
    %72 = arith.truncf %71 : vector<256x4xf32> to vector<256x4xbf16>
    %c8 = arith.constant 8 : index
    %c0_33 = arith.constant 0 : index
    %c0_34 = arith.constant 0 : index
    %73 = vector.load %arg3[%c8, %c0_33, %c0_34] : memref<9x4x8xbf16, #tpu.memory_space<vmem>>, vector<1x4x8xbf16>
    %74 = vector.shape_cast %73 : vector<1x4x8xbf16> to vector<4x8xbf16>
    %cst_35 = arith.constant dense<0.000000e+00> : vector<256x8xf32>
    %75 = tpu.matmul %72, %74, %cst_35 {dimension_numbers = #tpu.dot_dimension_numbers<[1], [0], [0], [1], [0, 0, 1, 1], [], []>} : vector<256x4xbf16>, vector<4x8xbf16>, vector<256x8xf32> -> vector<256x8xf32>
    %76 = arith.addf %69, %75 : vector<256x8xf32>
    %c0_36 = arith.constant 0 : index
    %c0_37 = arith.constant 0 : index
    %c0_38 = arith.constant 0 : index
    %c0_39 = arith.constant 0 : index
    %77 = vector.load %arg2[%c0_36, %c0_37, %c0_38, %c0_39] : memref<1x16x16x4xf32, #tpu.memory_space<vmem>>, vector<1x16x16x4xf32>
    %78 = vector.shape_cast %77 : vector<1x16x16x4xf32> to vector<16x16x4xf32>
    %cst_40 = arith.constant 0.000000e+00 : f32
    %79 = vector.broadcast %cst_40 : f32 to vector<16x16x4xf32>
    %80 = arith.cmpf oge, %78, %79 : vector<16x16x4xf32>
    %cst_41 = arith.constant 2.000000e-01 : f32
    %81 = vector.broadcast %cst_41 : f32 to vector<16x16x4xf32>
    %82 = arith.mulf %78, %81 : vector<16x16x4xf32>
    %83 = arith.select %80, %78, %82 : vector<16x16x4xi1>, vector<16x16x4xf32>
    %cst_42 = arith.constant 0.000000e+00 : f32
    %84 = vector.broadcast %cst_42 : f32 to vector<1x16x4xf32>
    %85 = tpu.concatenate %84, %83, %84 in 0 : vector<1x16x4xf32>, vector<16x16x4xf32>, vector<1x16x4xf32> -> vector<18x16x4xf32>
    %cst_43 = arith.constant 0.000000e+00 : f32
    %86 = vector.broadcast %cst_43 : f32 to vector<18x1x4xf32>
    %87 = tpu.concatenate %86, %85, %86 in 1 : vector<18x1x4xf32>, vector<18x16x4xf32>, vector<18x1x4xf32> -> vector<18x18x4xf32>
    %88 = vector.extract_strided_slice %87 {offsets = [0, 0, 0], sizes = [16, 16, 4], strides = [1, 1, 1]} : vector<18x18x4xf32> to vector<16x16x4xf32>
    %89 = vector.shape_cast %88 : vector<16x16x4xf32> to vector<256x4xf32>
    %90 = arith.truncf %89 : vector<256x4xf32> to vector<256x4xbf16>
    %c0_44 = arith.constant 0 : index
    %c0_45 = arith.constant 0 : index
    %c0_46 = arith.constant 0 : index
    %91 = vector.load %arg4[%c0_44, %c0_45, %c0_46] : memref<9x4x8xbf16, #tpu.memory_space<vmem>>, vector<1x4x8xbf16>
    %92 = vector.shape_cast %91 : vector<1x4x8xbf16> to vector<4x8xbf16>
    %cst_47 = arith.constant dense<0.000000e+00> : vector<256x8xf32>
    %93 = tpu.matmul %90, %92, %cst_47 {dimension_numbers = #tpu.dot_dimension_numbers<[1], [0], [0], [1], [0, 0, 1, 1], [], []>} : vector<256x4xbf16>, vector<4x8xbf16>, vector<256x8xf32> -> vector<256x8xf32>
    %94 = arith.addf %76, %93 : vector<256x8xf32>
    %95 = vector.extract_strided_slice %87 {offsets = [0, 1, 0], sizes = [16, 16, 4], strides = [1, 1, 1]} : vector<18x18x4xf32> to vector<16x16x4xf32>
    %96 = vector.shape_cast %95 : vector<16x16x4xf32> to vector<256x4xf32>
    %97 = arith.truncf %96 : vector<256x4xf32> to vector<256x4xbf16>
    %c1_48 = arith.constant 1 : index
    %c0_49 = arith.constant 0 : index
    %c0_50 = arith.constant 0 : index
    %98 = vector.load %arg4[%c1_48, %c0_49, %c0_50] : memref<9x4x8xbf16, #tpu.memory_space<vmem>>, vector<1x4x8xbf16>
    %99 = vector.shape_cast %98 : vector<1x4x8xbf16> to vector<4x8xbf16>
    %cst_51 = arith.constant dense<0.000000e+00> : vector<256x8xf32>
    %100 = tpu.matmul %97, %99, %cst_51 {dimension_numbers = #tpu.dot_dimension_numbers<[1], [0], [0], [1], [0, 0, 1, 1], [], []>} : vector<256x4xbf16>, vector<4x8xbf16>, vector<256x8xf32> -> vector<256x8xf32>
    %101 = arith.addf %94, %100 : vector<256x8xf32>
    %102 = vector.extract_strided_slice %87 {offsets = [0, 2, 0], sizes = [16, 16, 4], strides = [1, 1, 1]} : vector<18x18x4xf32> to vector<16x16x4xf32>
    %103 = vector.shape_cast %102 : vector<16x16x4xf32> to vector<256x4xf32>
    %104 = arith.truncf %103 : vector<256x4xf32> to vector<256x4xbf16>
    %c2_52 = arith.constant 2 : index
    %c0_53 = arith.constant 0 : index
    %c0_54 = arith.constant 0 : index
    %105 = vector.load %arg4[%c2_52, %c0_53, %c0_54] : memref<9x4x8xbf16, #tpu.memory_space<vmem>>, vector<1x4x8xbf16>
    %106 = vector.shape_cast %105 : vector<1x4x8xbf16> to vector<4x8xbf16>
    %cst_55 = arith.constant dense<0.000000e+00> : vector<256x8xf32>
    %107 = tpu.matmul %104, %106, %cst_55 {dimension_numbers = #tpu.dot_dimension_numbers<[1], [0], [0], [1], [0, 0, 1, 1], [], []>} : vector<256x4xbf16>, vector<4x8xbf16>, vector<256x8xf32> -> vector<256x8xf32>
    %108 = arith.addf %101, %107 : vector<256x8xf32>
    %109 = vector.extract_strided_slice %87 {offsets = [1, 0, 0], sizes = [16, 16, 4], strides = [1, 1, 1]} : vector<18x18x4xf32> to vector<16x16x4xf32>
    %110 = vector.shape_cast %109 : vector<16x16x4xf32> to vector<256x4xf32>
    %111 = arith.truncf %110 : vector<256x4xf32> to vector<256x4xbf16>
    %c3_56 = arith.constant 3 : index
    %c0_57 = arith.constant 0 : index
    %c0_58 = arith.constant 0 : index
    %112 = vector.load %arg4[%c3_56, %c0_57, %c0_58] : memref<9x4x8xbf16, #tpu.memory_space<vmem>>, vector<1x4x8xbf16>
    %113 = vector.shape_cast %112 : vector<1x4x8xbf16> to vector<4x8xbf16>
    %cst_59 = arith.constant dense<0.000000e+00> : vector<256x8xf32>
    %114 = tpu.matmul %111, %113, %cst_59 {dimension_numbers = #tpu.dot_dimension_numbers<[1], [0], [0], [1], [0, 0, 1, 1], [], []>} : vector<256x4xbf16>, vector<4x8xbf16>, vector<256x8xf32> -> vector<256x8xf32>
    %115 = arith.addf %108, %114 : vector<256x8xf32>
    %116 = vector.extract_strided_slice %87 {offsets = [1, 1, 0], sizes = [16, 16, 4], strides = [1, 1, 1]} : vector<18x18x4xf32> to vector<16x16x4xf32>
    %117 = vector.shape_cast %116 : vector<16x16x4xf32> to vector<256x4xf32>
    %118 = arith.truncf %117 : vector<256x4xf32> to vector<256x4xbf16>
    %c4_60 = arith.constant 4 : index
    %c0_61 = arith.constant 0 : index
    %c0_62 = arith.constant 0 : index
    %119 = vector.load %arg4[%c4_60, %c0_61, %c0_62] : memref<9x4x8xbf16, #tpu.memory_space<vmem>>, vector<1x4x8xbf16>
    %120 = vector.shape_cast %119 : vector<1x4x8xbf16> to vector<4x8xbf16>
    %cst_63 = arith.constant dense<0.000000e+00> : vector<256x8xf32>
    %121 = tpu.matmul %118, %120, %cst_63 {dimension_numbers = #tpu.dot_dimension_numbers<[1], [0], [0], [1], [0, 0, 1, 1], [], []>} : vector<256x4xbf16>, vector<4x8xbf16>, vector<256x8xf32> -> vector<256x8xf32>
    %122 = arith.addf %115, %121 : vector<256x8xf32>
    %123 = vector.extract_strided_slice %87 {offsets = [1, 2, 0], sizes = [16, 16, 4], strides = [1, 1, 1]} : vector<18x18x4xf32> to vector<16x16x4xf32>
    %124 = vector.shape_cast %123 : vector<16x16x4xf32> to vector<256x4xf32>
    %125 = arith.truncf %124 : vector<256x4xf32> to vector<256x4xbf16>
    %c5_64 = arith.constant 5 : index
    %c0_65 = arith.constant 0 : index
    %c0_66 = arith.constant 0 : index
    %126 = vector.load %arg4[%c5_64, %c0_65, %c0_66] : memref<9x4x8xbf16, #tpu.memory_space<vmem>>, vector<1x4x8xbf16>
    %127 = vector.shape_cast %126 : vector<1x4x8xbf16> to vector<4x8xbf16>
    %cst_67 = arith.constant dense<0.000000e+00> : vector<256x8xf32>
    %128 = tpu.matmul %125, %127, %cst_67 {dimension_numbers = #tpu.dot_dimension_numbers<[1], [0], [0], [1], [0, 0, 1, 1], [], []>} : vector<256x4xbf16>, vector<4x8xbf16>, vector<256x8xf32> -> vector<256x8xf32>
    %129 = arith.addf %122, %128 : vector<256x8xf32>
    %130 = vector.extract_strided_slice %87 {offsets = [2, 0, 0], sizes = [16, 16, 4], strides = [1, 1, 1]} : vector<18x18x4xf32> to vector<16x16x4xf32>
    %131 = vector.shape_cast %130 : vector<16x16x4xf32> to vector<256x4xf32>
    %132 = arith.truncf %131 : vector<256x4xf32> to vector<256x4xbf16>
    %c6_68 = arith.constant 6 : index
    %c0_69 = arith.constant 0 : index
    %c0_70 = arith.constant 0 : index
    %133 = vector.load %arg4[%c6_68, %c0_69, %c0_70] : memref<9x4x8xbf16, #tpu.memory_space<vmem>>, vector<1x4x8xbf16>
    %134 = vector.shape_cast %133 : vector<1x4x8xbf16> to vector<4x8xbf16>
    %cst_71 = arith.constant dense<0.000000e+00> : vector<256x8xf32>
    %135 = tpu.matmul %132, %134, %cst_71 {dimension_numbers = #tpu.dot_dimension_numbers<[1], [0], [0], [1], [0, 0, 1, 1], [], []>} : vector<256x4xbf16>, vector<4x8xbf16>, vector<256x8xf32> -> vector<256x8xf32>
    %136 = arith.addf %129, %135 : vector<256x8xf32>
    %137 = vector.extract_strided_slice %87 {offsets = [2, 1, 0], sizes = [16, 16, 4], strides = [1, 1, 1]} : vector<18x18x4xf32> to vector<16x16x4xf32>
    %138 = vector.shape_cast %137 : vector<16x16x4xf32> to vector<256x4xf32>
    %139 = arith.truncf %138 : vector<256x4xf32> to vector<256x4xbf16>
    %c7_72 = arith.constant 7 : index
    %c0_73 = arith.constant 0 : index
    %c0_74 = arith.constant 0 : index
    %140 = vector.load %arg4[%c7_72, %c0_73, %c0_74] : memref<9x4x8xbf16, #tpu.memory_space<vmem>>, vector<1x4x8xbf16>
    %141 = vector.shape_cast %140 : vector<1x4x8xbf16> to vector<4x8xbf16>
    %cst_75 = arith.constant dense<0.000000e+00> : vector<256x8xf32>
    %142 = tpu.matmul %139, %141, %cst_75 {dimension_numbers = #tpu.dot_dimension_numbers<[1], [0], [0], [1], [0, 0, 1, 1], [], []>} : vector<256x4xbf16>, vector<4x8xbf16>, vector<256x8xf32> -> vector<256x8xf32>
    %143 = arith.addf %136, %142 : vector<256x8xf32>
    %144 = vector.extract_strided_slice %87 {offsets = [2, 2, 0], sizes = [16, 16, 4], strides = [1, 1, 1]} : vector<18x18x4xf32> to vector<16x16x4xf32>
    %145 = vector.shape_cast %144 : vector<16x16x4xf32> to vector<256x4xf32>
    %146 = arith.truncf %145 : vector<256x4xf32> to vector<256x4xbf16>
    %c8_76 = arith.constant 8 : index
    %c0_77 = arith.constant 0 : index
    %c0_78 = arith.constant 0 : index
    %147 = vector.load %arg4[%c8_76, %c0_77, %c0_78] : memref<9x4x8xbf16, #tpu.memory_space<vmem>>, vector<1x4x8xbf16>
    %148 = vector.shape_cast %147 : vector<1x4x8xbf16> to vector<4x8xbf16>
    %cst_79 = arith.constant dense<0.000000e+00> : vector<256x8xf32>
    %149 = tpu.matmul %146, %148, %cst_79 {dimension_numbers = #tpu.dot_dimension_numbers<[1], [0], [0], [1], [0, 0, 1, 1], [], []>} : vector<256x4xbf16>, vector<4x8xbf16>, vector<256x8xf32> -> vector<256x8xf32>
    %150 = arith.addf %143, %149 : vector<256x8xf32>
    %151 = vector.shape_cast %150 : vector<256x8xf32> to vector<1x256x8xf32>
    %c0_80 = arith.constant 0 : index
    %c0_81 = arith.constant 0 : index
    %c0_82 = arith.constant 0 : index
    %152 = vector.load %arg6[%c0_80, %c0_81, %c0_82] : memref<1x256x8xf32, #tpu.memory_space<vmem>>, vector<1x256x8xf32>
    tpu.vector_store %arg6[%c0_80, %c0_81, %c0_82], %151 {strides = array<i32>} : memref<1x256x8xf32, #tpu.memory_space<vmem>>, vector<1x256x8xf32>,
    return
  }
  func.func @transform_0(%arg0: i32) -> (i32, i32, i32, i32) {
    %c0_i32 = arith.constant 0 : i32
    %c0_i32_0 = arith.constant 0 : i32
    %c0_i32_1 = arith.constant 0 : i32
    %c0_i32_2 = arith.constant 0 : i32
    return %arg0, %c0_i32, %c0_i32_0, %c0_i32_1 : i32, i32, i32, i32
  }
  func.func @transform_1(%arg0: i32) -> (i32, i32, i32, i32) {
    %c0_i32 = arith.constant 0 : i32
    %c0_i32_0 = arith.constant 0 : i32
    %c0_i32_1 = arith.constant 0 : i32
    %c0_i32_2 = arith.constant 0 : i32
    return %arg0, %c0_i32, %c0_i32_0, %c0_i32_1 : i32, i32, i32, i32
  }
  func.func @transform_2(%arg0: i32) -> (i32, i32, i32) {
    %c0_i32 = arith.constant 0 : i32
    %c0_i32_0 = arith.constant 0 : i32
    %c0_i32_1 = arith.constant 0 : i32
    %c0_i32_2 = arith.constant 0 : i32
    return %c0_i32, %c0_i32_0, %c0_i32_1 : i32, i32, i32
  }
  func.func @transform_3(%arg0: i32) -> (i32, i32, i32) {
    %c0_i32 = arith.constant 0 : i32
    %c0_i32_0 = arith.constant 0 : i32
    %c0_i32_1 = arith.constant 0 : i32
    %c0_i32_2 = arith.constant 0 : i32
    return %c0_i32, %c0_i32_0, %c0_i32_1 : i32, i32, i32
  }
  func.func @transform_4(%arg0: i32) -> (i32, i32) {
    %c0_i32 = arith.constant 0 : i32
    %c0_i32_0 = arith.constant 0 : i32
    %c0_i32_1 = arith.constant 0 : i32
    return %c0_i32, %c0_i32_0 : i32, i32
  }
  func.func @transform_5(%arg0: i32) -> (i32, i32, i32) {
    %c0_i32 = arith.constant 0 : i32
    %c0_i32_0 = arith.constant 0 : i32
    %c0_i32_1 = arith.constant 0 : i32
    return %arg0, %c0_i32, %c0_i32_0 : i32, i32, i32
  }
}

</mosaic_0001>

<llo_original>
// kernel: _lambda_.1
$region0: #{_lambda_.1}
  #allocation0 [shape = 'u32[]', space=smem, size = 0x4, offset = 0x4, fixed_abs, tag = 'smem constant byte address 0x4 - core index']
  #allocation1 [shape = 'u32[144,128]{1,0:T(1,128)}', space=vmem, size = 0x12000, scoped, tag = 'internal scratch']
  %s0 = inlined_call_operand.vmem [shape: f32[2,16,16,4], index: 0, kind: input, shape index: {}]
  %s1 = inlined_call_operand.vmem [shape: f32[2,16,16,4], index: 1, kind: input, shape index: {}]
  %s2 = inlined_call_operand.vmem [shape: bf16[9,4,8], index: 2, kind: input, shape index: {}]
  %s3 = inlined_call_operand.vmem [shape: bf16[9,4,8], index: 3, kind: input, shape index: {}]
  %s4 = inlined_call_operand.vmem [shape: f32[1,8], index: 4, kind: input, shape index: {}]
  %s5 = inlined_call_operand.vmem [shape: f32[2,256,8], index: 5, kind: output, shape index: {}]
  %s6 = sld [smem:[#allocation0]]
  $region53: #{_lambda_.1} parent=0
    _
  %s8 = ssub.s32 1, %s6
  %s9 = scalar_select 0, %s8, %s6
  loop: start=0, step=1, limit=4
  $region2: #{_lambda_.1} parent=0 // loop_pre_header
    _
  $region3: #{_lambda_.1} parent=0 // loop_header
    %s11 = sphi 0, %s15
    %p12 = scmp.ge.s32.totalorder %s11, 4
    %s21 = sphi 0, %s23
    %s24 = sphi 0, %s21
    %s25 = sphi 0, %s24
    %s41 = sphi 0, %s25
    %s47 = sphi 0, %s49
    %s50 = sphi 0, %s47
    %s51 = sphi 0, %s50
    %s67 = sphi 0, %s51
    %s71 = sphi 0, %s71
    %s73 = sphi 0, %s71
    %s74 = sphi 0, %s73
    %s88 = sphi 0, %s74
    %s92 = sphi 0, %s92
    %s94 = sphi 0, %s92
    %s95 = sphi 0, %s94
    %s109 = sphi 0, %s95
    %s113 = sphi 0, %s113
    %s115 = sphi 0, %s113
    %s116 = sphi 0, %s115
    %s130 = sphi 0, %s116
    %s136 = sphi 0, %s138
    %s139 = sphi 0, %s136
    %s140 = sphi 0, %s139
    %s156 = sphi 0, %s140
  $region4: #{_lambda_.1} parent=0 // loop_header_branch
    %14 = sbr.rel (%p12) target = $region8
  $region5: #{_lambda_.1} parent=0 // loop_body
    %s16 = ssub.s32 %s11, 1
    %s17 = ssub.s32 %s11, 2
    %s18 = sadd.s32 %s11, 1
    %s19 = ssub.s32 %s11, %s18
    %p20 = scmp.eq.s32.totalorder %s19, 0
    %s22 = sadd.s32 %s21, 1
    %s23 = scalar_select %p20, %s21, %s22
    %p26 = pneg %p20
    %p27 = scmp.eq.s32.totalorder %s11, 1
    %p28 = por %p26, %p27
    %p29 = scmp.ne.s32.totalorder %s21, %s24
    %p30 = scmp.eq.s32.totalorder %s11, 0
    %p31 = por %p29, %p30
    %p32 = scmp.ne.s32.totalorder %s21, %s24
    %p33 = scmp.eq.s32.totalorder %s16, 1
    %p34 = por %p32, %p33
    %p35 = scmp.ne.s32.totalorder %s24, %s25
    %p36 = scmp.eq.s32.totalorder %s16, 0
    %p37 = por %p35, %p36
    %p38 = scmp.ne.s32.totalorder %s24, %s25
    %p39 = scmp.eq.s32.totalorder %s17, 1
    %p40 = por %p38, %p39
    %p42 = scmp.ne.s32.totalorder %s25, %s41
    %p43 = scmp.eq.s32.totalorder %s17, 0
    %p44 = por %p42, %p43
    %s45 = ssub.s32 %s11, %s18
    %p46 = scmp.eq.s32.totalorder %s45, 0
    %s48 = sadd.s32 %s47, 1
    %s49 = scalar_select %p46, %s47, %s48
    %p52 = pneg %p46
    %p53 = scmp.eq.s32.totalorder %s11, 1
    %p54 = por %p52, %p53
    %p55 = scmp.ne.s32.totalorder %s47, %s50
    %p56 = scmp.eq.s32.totalorder %s11, 0
    %p57 = por %p55, %p56
    %p58 = scmp.ne.s32.totalorder %s47, %s50
    %p59 = scmp.eq.s32.totalorder %s16, 1
    %p60 = por %p58, %p59
    %p61 = scmp.ne.s32.totalorder %s50, %s51
    %p62 = scmp.eq.s32.totalorder %s16, 0
    %p63 = por %p61, %p62
    %p64 = scmp.ne.s32.totalorder %s50, %s51
    %p65 = scmp.eq.s32.totalorder %s17, 1
    %p66 = por %p64, %p65
    %p68 = scmp.ne.s32.totalorder %s51, %s67
    %p69 = scmp.eq.s32.totalorder %s17, 0
    %p70 = por %p68, %p69
    %s72 = sadd.s32 %s71, 1
    %p75 = scmp.eq.s32.totalorder %s11, 1
    %p76 = scmp.ne.s32.totalorder %s71, %s73
    %p77 = scmp.eq.s32.totalorder %s11, 0
    %p78 = por %p76, %p77
    %p79 = scmp.ne.s32.totalorder %s71, %s73
    %p80 = scmp.eq.s32.totalorder %s16, 1
    %p81 = por %p79, %p80
    %p82 = scmp.ne.s32.totalorder %s73, %s74
    %p83 = scmp.eq.s32.totalorder %s16, 0
    %p84 = por %p82, %p83
    %p85 = scmp.ne.s32.totalorder %s73, %s74
    %p86 = scmp.eq.s32.totalorder %s17, 1
    %p87 = por %p85, %p86
    %p89 = scmp.ne.s32.totalorder %s74, %s88
    %p90 = scmp.eq.s32.totalorder %s17, 0
    %p91 = por %p89, %p90
    %s93 = sadd.s32 %s92, 1
    %p96 = scmp.eq.s32.totalorder %s11, 1
    %p97 = scmp.ne.s32.totalorder %s92, %s94
    %p98 = scmp.eq.s32.totalorder %s11, 0
    %p99 = por %p97, %p98
    %p100 = scmp.ne.s32.totalorder %s92, %s94
    %p101 = scmp.eq.s32.totalorder %s16, 1
    %p102 = por %p100, %p101
    %p103 = scmp.ne.s32.totalorder %s94, %s95
    %p104 = scmp.eq.s32.totalorder %s16, 0
    %p105 = por %p103, %p104
    %p106 = scmp.ne.s32.totalorder %s94, %s95
    %p107 = scmp.eq.s32.totalorder %s17, 1
    %p108 = por %p106, %p107
    %p110 = scmp.ne.s32.totalorder %s95, %s109
    %p111 = scmp.eq.s32.totalorder %s17, 0
    %p112 = por %p110, %p111
    %s114 = sadd.s32 %s113, 1
    %p117 = scmp.eq.s32.totalorder %s11, 1
    %p118 = scmp.ne.s32.totalorder %s113, %s115
    %p119 = scmp.eq.s32.totalorder %s11, 0
    %p120 = por %p118, %p119
    %p121 = scmp.ne.s32.totalorder %s113, %s115
    %p122 = scmp.eq.s32.totalorder %s16, 1
    %p123 = por %p121, %p122
    %p124 = scmp.ne.s32.totalorder %s115, %s116
    %p125 = scmp.eq.s32.totalorder %s16, 0
    %p126 = por %p124, %p125
    %p127 = scmp.ne.s32.totalorder %s115, %s116
    %p128 = scmp.eq.s32.totalorder %s17, 1
    %p129 = por %p127, %p128
    %p131 = scmp.ne.s32.totalorder %s116, %s130
    %p132 = scmp.eq.s32.totalorder %s17, 0
    %p133 = por %p131, %p132
    %s134 = ssub.s32 %s11, %s18
    %p135 = scmp.eq.s32.totalorder %s134, 0
    %s137 = sadd.s32 %s136, 1
    %s138 = scalar_select %p135, %s136, %s137
    %p141 = pneg %p135
    %p142 = scmp.eq.s32.totalorder %s11, 1
    %p143 = por %p141, %p142
    %p144 = scmp.ne.s32.totalorder %s136, %s139
    %p145 = scmp.eq.s32.totalorder %s11, 0
    %p146 = por %p144, %p145
    %p147 = scmp.ne.s32.totalorder %s136, %s139
    %p148 = scmp.eq.s32.totalorder %s16, 1
    %p149 = por %p147, %p148
    %p150 = scmp.ne.s32.totalorder %s139, %s140
    %p151 = scmp.eq.s32.totalorder %s16, 0
    %p152 = por %p150, %p151
    %p153 = scmp.ne.s32.totalorder %s139, %s140
    %p154 = scmp.eq.s32.totalorder %s17, 1
    %p155 = por %p153, %p154
    %p157 = scmp.ne.s32.totalorder %s140, %s156
    %p158 = scmp.eq.s32.totalorder %s17, 0
    %p159 = por %p157, %p158
    %p160 = scmp.le.s32.totalorder 1, %s11
    %p161 = scmp.lt.s32.totalorder %s11, 3
    %p162 = pnand %p160, %p161
    %p163 = pneg %p162
    // Predicated region
    $region9: #{_lambda_.1} parent=5 // pred_check
      _
    $region10: #{_lambda_.1} parent=5 // pred_check_branch
      %165 = sbr.rel (%p162) target = $region12
    $region11: #{_lambda_.1} parent=5 // pred_region
      %s166 = ssub.s32 %s11, 1
      // Predicated region
      $region13: #{_lambda_.1} parent=11 // pred_check
        %p167 = pneg %p84
      $region14: #{_lambda_.1} parent=11 // pred_check_branch
        %169 = sbr.rel (%p167) target = $region16
      $region15: #{_lambda_.1} parent=11 // pred_region
        _
      $region16: #{_lambda_.1} parent=11 // pred_fallthru
        _
      // Predicated region
      $region17: #{_lambda_.1} parent=11 // pred_check
        %p170 = pneg %p105
      $region18: #{_lambda_.1} parent=11 // pred_check_branch
        %172 = sbr.rel (%p170) target = $region20
      $region19: #{_lambda_.1} parent=11 // pred_region
        _
      $region20: #{_lambda_.1} parent=11 // pred_fallthru
        _
      // Predicated region
      $region21: #{_lambda_.1} parent=11 // pred_check
        %p173 = pneg %p126
      $region22: #{_lambda_.1} parent=11 // pred_check_branch
        %175 = sbr.rel (%p173) target = $region24
      $region23: #{_lambda_.1} parent=11 // pred_region
        _
      $region24: #{_lambda_.1} parent=11 // pred_fallthru
        _
    $region12: #{_lambda_.1} parent=5 // pred_fallthru
      _
    %p176 = scmp.lt.s32.totalorder %s11, 2
    // Predicated region
    $region25: #{_lambda_.1} parent=5 // pred_check
      %p177 = pneg %p176
    $region26: #{_lambda_.1} parent=5 // pred_check_branch
      %179 = sbr.rel (%p177) target = $region28
    $region27: #{_lambda_.1} parent=5 // pred_region
      // Predicated region
      $region29: #{_lambda_.1} parent=27 // pred_check
        %p180 = pneg %p31
      $region30: #{_lambda_.1} parent=27 // pred_check_branch
        %182 = sbr.rel (%p180) target = $region32
      $region31: #{_lambda_.1} parent=27 // pred_region
        %p183 = scmp.lt.s32.totalorder %s11, 1
        %s184 = scalar_select %p183, %s11, 1
        %s185 = smul.addr %s184, 32
        %s186 = smul.addr %s185, 8
        %s187 = scalar_lea.vmem %s0, %s186
      $region32: #{_lambda_.1} parent=27 // pred_fallthru
        _
      // Predicated region
      $region33: #{_lambda_.1} parent=27 // pred_check
        %p188 = pneg %p57
      $region34: #{_lambda_.1} parent=27 // pred_check_branch
        %190 = sbr.rel (%p188) target = $region36
      $region35: #{_lambda_.1} parent=27 // pred_region
        %p191 = scmp.lt.s32.totalorder %s11, 1
        %s192 = scalar_select %p191, %s11, 1
        %s193 = smul.addr %s192, 32
        %s194 = smul.addr %s193, 8
        %s195 = scalar_lea.vmem %s1, %s194
      $region36: #{_lambda_.1} parent=27 // pred_fallthru
        _
    $region28: #{_lambda_.1} parent=5 // pred_fallthru
      _
    %p196 = scmp.le.s32.totalorder 1, %s11
    %p197 = scmp.lt.s32.totalorder %s11, 3
    %p198 = pnand %p196, %p197
    %p199 = pneg %p198
    // Predicated region
    $region37: #{_lambda_.1} parent=5 // pred_check
      _
    $region38: #{_lambda_.1} parent=5 // pred_check_branch
      %201 = sbr.rel (%p198) target = $region40
    $region39: #{_lambda_.1} parent=5 // pred_region
      %s202 = ssub.s32 %s11, 1
      %p203 = scmp.lt.s32.totalorder %s16, 1
      %s204 = scalar_select %p203, %s16, 1
      %s205 = smul.addr %s204, 32
      %s206 = smul.addr %s205, 8
      %s207 = scalar_lea.vmem %s0, %s206
      %p208 = pneg %p37
      %p209 = pneg %p34
      %p210 = scmp.lt.s32.totalorder %s16, 1
      %s211 = scalar_select %p210, %s16, 1
      %s212 = smul.addr %s211, 32
      %s213 = smul.addr %s212, 8
      %s214 = scalar_lea.vmem %s1, %s213
      %p215 = pneg %p63
      %p216 = pneg %p60
      %p217 = pneg %p84
      %p218 = pneg %p81
      %p219 = pneg %p105
      %p220 = pneg %p102
      %p221 = pneg %p126
      %p222 = pneg %p123
      %p223 = pneg %p152
      %p224 = pneg %p149
      %p225 = scmp.lt.s32.totalorder %s16, 1
      %s226 = scalar_select %p225, %s16, 1
      %s227 = smul.addr %s226, 32
      %s228 = smul.addr %s227, 8
      %s229 = scalar_lea.vmem %s5, %s228
      %p230 = scmp.lt.s32.totalorder %s16, 1
      %s231 = scalar_select %p230, %s16, 1
      %s232 = smul.addr %s231, 32
      %s233 = smul.addr %s232, 8
      %s234 = scalar_lea.vmem %s0, %s233
      %p235 = scmp.lt.s32.totalorder %s16, 1
      %s236 = scalar_select %p235, %s16, 1
      %s237 = smul.addr %s236, 32
      %s238 = smul.addr %s237, 8
      %s239 = scalar_lea.vmem %s1, %s238
      %p240 = scmp.lt.s32.totalorder %s16, 1
      %s241 = scalar_select %p240, %s16, 1
      %s242 = smul.addr %s241, 32
      %s243 = smul.addr %s242, 8
      %s244 = scalar_lea.vmem %s5, %s243
      %v246 = vld [vmem:[%s4] sm:$0x1]
      %v248 = vlaneseq
      %v249 = vshrl.u32 %v248, 7
      %v250 = vsub.s32 0, %v249
      %v251 = vrot.slane %v246, %v250
      %v253 = vld [vmem:[%s234] sm:$0xff]
      %v254 = vld [vmem:[%s234 + $0x8] sm:$0xff]
      %v255 = vld [vmem:[%s234 + $0x10] sm:$0xff]
      %v256 = vld [vmem:[%s234 + $0x18] sm:$0xff]
      %v257 = vld [vmem:[%s234 + $0x20] sm:$0xff]
      %v258 = vld [vmem:[%s234 + $0x28] sm:$0xff]
      %v259 = vld [vmem:[%s234 + $0x30] sm:$0xff]
      %v260 = vld [vmem:[%s234 + $0x38] sm:$0xff]
      %v261 = vld [vmem:[%s234 + $0x40] sm:$0xff]
      %v262 = vld [vmem:[%s234 + $0x48] sm:$0xff]
      %v263 = vld [vmem:[%s234 + $0x50] sm:$0xff]
      %v264 = vld [vmem:[%s234 + $0x58] sm:$0xff]
      %v265 = vld [vmem:[%s234 + $0x60] sm:$0xff]
      %v266 = vld [vmem:[%s234 + $0x68] sm:$0xff]
      %v267 = vld [vmem:[%s234 + $0x70] sm:$0xff]
      %v268 = vld [vmem:[%s234 + $0x78] sm:$0xff]
      %v269 = vld [vmem:[%s234 + $0x80] sm:$0xff]
      %v270 = vld [vmem:[%s234 + $0x88] sm:$0xff]
      %v271 = vld [vmem:[%s234 + $0x90] sm:$0xff]
      %v272 = vld [vmem:[%s234 + $0x98] sm:$0xff]
      %v273 = vld [vmem:[%s234 + $0xa0] sm:$0xff]
      %v274 = vld [vmem:[%s234 + $0xa8] sm:$0xff]
      %v275 = vld [vmem:[%s234 + $0xb0] sm:$0xff]
      %v276 = vld [vmem:[%s234 + $0xb8] sm:$0xff]
      %v277 = vld [vmem:[%s234 + $0xc0] sm:$0xff]
      %v278 = vld [vmem:[%s234 + $0xc8] sm:$0xff]
      %v279 = vld [vmem:[%s234 + $0xd0] sm:$0xff]
      %v280 = vld [vmem:[%s234 + $0xd8] sm:$0xff]
      %v281 = vld [vmem:[%s234 + $0xe0] sm:$0xff]
      %v282 = vld [vmem:[%s234 + $0xe8] sm:$0xff]
      %v283 = vld [vmem:[%s234 + $0xf0] sm:$0xff]
      %v284 = vld [vmem:[%s234 + $0xf8] sm:$0xff]
      %vm285 = vcmp.ge.f32.partialorder %v253, 0.0
      %vm286 = vcmp.ge.f32.partialorder %v254, 0.0
      %vm287 = vcmp.ge.f32.partialorder %v255, 0.0
      %vm288 = vcmp.ge.f32.partialorder %v256, 0.0
      %vm289 = vcmp.ge.f32.partialorder %v257, 0.0
      %vm290 = vcmp.ge.f32.partialorder %v258, 0.0
      %vm291 = vcmp.ge.f32.partialorder %v259, 0.0
      %vm292 = vcmp.ge.f32.partialorder %v260, 0.0
      %vm293 = vcmp.ge.f32.partialorder %v261, 0.0
      %vm294 = vcmp.ge.f32.partialorder %v262, 0.0
      %vm295 = vcmp.ge.f32.partialorder %v263, 0.0
      %vm296 = vcmp.ge.f32.partialorder %v264, 0.0
      %vm297 = vcmp.ge.f32.partialorder %v265, 0.0
      %vm298 = vcmp.ge.f32.partialorder %v266, 0.0
      %vm299 = vcmp.ge.f32.partialorder %v267, 0.0
      %vm300 = vcmp.ge.f32.partialorder %v268, 0.0
      %vm301 = vcmp.ge.f32.partialorder %v269, 0.0
      %vm302 = vcmp.ge.f32.partialorder %v270, 0.0
      %vm303 = vcmp.ge.f32.partialorder %v271, 0.0
      %vm304 = vcmp.ge.f32.partialorder %v272, 0.0
      %vm305 = vcmp.ge.f32.partialorder %v273, 0.0
      %vm306 = vcmp.ge.f32.partialorder %v274, 0.0
      %vm307 = vcmp.ge.f32.partialorder %v275, 0.0
      %vm308 = vcmp.ge.f32.partialorder %v276, 0.0
      %vm309 = vcmp.ge.f32.partialorder %v277, 0.0
      %vm310 = vcmp.ge.f32.partialorder %v278, 0.0
      %vm311 = vcmp.ge.f32.partialorder %v279, 0.0
      %vm312 = vcmp.ge.f32.partialorder %v280, 0.0
      %vm313 = vcmp.ge.f32.partialorder %v281, 0.0
      %vm314 = vcmp.ge.f32.partialorder %v282, 0.0
      %vm315 = vcmp.ge.f32.partialorder %v283, 0.0
      %vm316 = vcmp.ge.f32.partialorder %v284, 0.0
      %v317 = vmul.f32 %v253, 0.2
      %v318 = vmul.f32 %v254, 0.2
      %v319 = vmul.f32 %v255, 0.2
      %v320 = vmul.f32 %v256, 0.2
      %v321 = vmul.f32 %v257, 0.2
      %v322 = vmul.f32 %v258, 0.2
      %v323 = vmul.f32 %v259, 0.2
      %v324 = vmul.f32 %v260, 0.2
      %v325 = vmul.f32 %v261, 0.2
      %v326 = vmul.f32 %v262, 0.2
      %v327 = vmul.f32 %v263, 0.2
      %v328 = vmul.f32 %v264, 0.2
      %v329 = vmul.f32 %v265, 0.2
      %v330 = vmul.f32 %v266, 0.2
      %v331 = vmul.f32 %v267, 0.2
      %v332 = vmul.f32 %v268, 0.2
      %v333 = vmul.f32 %v269, 0.2
      %v334 = vmul.f32 %v270, 0.2
      %v335 = vmul.f32 %v271, 0.2
      %v336 = vmul.f32 %v272, 0.2
      %v337 = vmul.f32 %v273, 0.2
      %v338 = vmul.f32 %v274, 0.2
      %v339 = vmul.f32 %v275, 0.2
      %v340 = vmul.f32 %v276, 0.2
      %v341 = vmul.f32 %v277, 0.2
      %v342 = vmul.f32 %v278, 0.2
      %v343 = vmul.f32 %v279, 0.2
      %v344 = vmul.f32 %v280, 0.2
      %v345 = vmul.f32 %v281, 0.2
      %v346 = vmul.f32 %v282, 0.2
      %v347 = vmul.f32 %v283, 0.2
      %v348 = vmul.f32 %v284, 0.2
      %v349 = vsel %vm285, %v253, %v317
      %v350 = vsel %vm286, %v254, %v318
      %v351 = vsel %vm287, %v255, %v319
      %v352 = vsel %vm288, %v256, %v320
      %v353 = vsel %vm289, %v257, %v321
      %v354 = vsel %vm290, %v258, %v322
      %v355 = vsel %vm291, %v259, %v323
      %v356 = vsel %vm292, %v260, %v324
      %v357 = vsel %vm293, %v261, %v325
      %v358 = vsel %vm294, %v262, %v326
      %v359 = vsel %vm295, %v263, %v327
      %v360 = vsel %vm296, %v264, %v328
      %v361 = vsel %vm297, %v265, %v329
      %v362 = vsel %vm298, %v266, %v330
      %v363 = vsel %vm299, %v267, %v331
      %v364 = vsel %vm300, %v268, %v332
      %v365 = vsel %vm301, %v269, %v333
      %v366 = vsel %vm302, %v270, %v334
      %v367 = vsel %vm303, %v271, %v335
      %v368 = vsel %vm304, %v272, %v336
      %v369 = vsel %vm305, %v273, %v337
      %v370 = vsel %vm306, %v274, %v338
      %v371 = vsel %vm307, %v275, %v339
      %v372 = vsel %vm308, %v276, %v340
      %v373 = vsel %vm309, %v277, %v341
      %v374 = vsel %vm310, %v278, %v342
      %v375 = vsel %vm311, %v279, %v343
      %v376 = vsel %vm312, %v280, %v344
      %v377 = vsel %vm313, %v281, %v345
      %v378 = vsel %vm314, %v282, %v346
      %v379 = vsel %vm315, %v283, %v347
      %v380 = vsel %vm316, %v284, %v348
      %vm414 = vcmask 1040384
      %v415 = vrot.slane 0.0, 7
      %v416 = vsel %vm414, %v415, %v415
      %v417 = vrot.slane %v349, 7
      %v418 = vrot.slane %v350, 7
      %v419 = vsel %vm414, %v417, %v418
      %v420 = vrot.slane %v351, 7
      %v421 = vrot.slane %v352, 7
      %v422 = vsel %vm414, %v420, %v421
      %v423 = vrot.slane %v353, 7
      %v424 = vrot.slane %v354, 7
      %v425 = vsel %vm414, %v423, %v424
      %v426 = vrot.slane %v355, 7
      %v427 = vrot.slane %v356, 7
      %v428 = vsel %vm414, %v426, %v427
      %v429 = vrot.slane %v357, 7
      %v430 = vrot.slane %v358, 7
      %v431 = vsel %vm414, %v429, %v430
      %v432 = vrot.slane %v359, 7
      %v433 = vrot.slane %v360, 7
      %v434 = vsel %vm414, %v432, %v433
      %v435 = vrot.slane %v361, 7
      %v436 = vrot.slane %v362, 7
      %v437 = vsel %vm414, %v435, %v436
      %v438 = vrot.slane %v363, 7
      %v439 = vrot.slane %v364, 7
      %v440 = vsel %vm414, %v438, %v439
      %v441 = vrot.slane %v365, 7
      %v442 = vrot.slane %v366, 7
      %v443 = vsel %vm414, %v441, %v442
      %v444 = vrot.slane %v367, 7
      %v445 = vrot.slane %v368, 7
      %v446 = vsel %vm414, %v444, %v445
      %v447 = vrot.slane %v369, 7
      %v448 = vrot.slane %v370, 7
      %v449 = vsel %vm414, %v447, %v448
      %v450 = vrot.slane %v371, 7
      %v451 = vrot.slane %v372, 7
      %v452 = vsel %vm414, %v450, %v451
      %v453 = vrot.slane %v373, 7
      %v454 = vrot.slane %v374, 7
      %v455 = vsel %vm414, %v453, %v454
      %v456 = vrot.slane %v375, 7
      %v457 = vrot.slane %v376, 7
      %v458 = vsel %vm414, %v456, %v457
      %v459 = vrot.slane %v377, 7
      %v460 = vrot.slane %v378, 7
      %v461 = vsel %vm414, %v459, %v460
      %v462 = vrot.slane %v379, 7
      %v463 = vrot.slane %v380, 7
      %v464 = vsel %vm414, %v462, %v463
      %v515 = vsel %vm414, 0.0, %v415
      %v516 = vsel %vm414, 0.0, %v417
      %v517 = vsel %vm414, 0.0, %v420
      %v518 = vsel %vm414, 0.0, %v423
      %v519 = vsel %vm414, 0.0, %v426
      %v520 = vsel %vm414, 0.0, %v429
      %v521 = vsel %vm414, 0.0, %v432
      %v522 = vsel %vm414, 0.0, %v435
      %v523 = vsel %vm414, 0.0, %v438
      %v524 = vsel %vm414, 0.0, %v441
      %v525 = vsel %vm414, 0.0, %v444
      %v526 = vsel %vm414, 0.0, %v447
      %v527 = vsel %vm414, 0.0, %v450
      %v528 = vsel %vm414, 0.0, %v453
      %v529 = vsel %vm414, 0.0, %v456
      %v530 = vsel %vm414, 0.0, %v459
      %v531 = vsel %vm414, 0.0, %v462
      %v532 = vsel %vm414, %v415, 0.0
      %v533 = vsel %vm414, %v418, 0.0
      %v534 = vsel %vm414, %v421, 0.0
      %v535 = vsel %vm414, %v424, 0.0
      %v536 = vsel %vm414, %v427, 0.0
      %v537 = vsel %vm414, %v430, 0.0
      %v538 = vsel %vm414, %v433, 0.0
      %v539 = vsel %vm414, %v436, 0.0
      %v540 = vsel %vm414, %v439, 0.0
      %v541 = vsel %vm414, %v442, 0.0
      %v542 = vsel %vm414, %v445, 0.0
      %v543 = vsel %vm414, %v448, 0.0
      %v544 = vsel %vm414, %v451, 0.0
      %v545 = vsel %vm414, %v454, 0.0
      %v546 = vsel %vm414, %v457, 0.0
      %v547 = vsel %vm414, %v460, 0.0
      %v548 = vsel %vm414, %v463, 0.0
      %v549 = vpack.c.bf16 %v416, %v515
      %v550 = vpack.c.bf16 %v419, %v516
      %v551 = vpack.c.bf16 %v422, %v517
      %v552 = vpack.c.bf16 %v425, %v518
      %v553 = vpack.c.bf16 %v428, %v519
      %v554 = vpack.c.bf16 %v431, %v520
      %v555 = vpack.c.bf16 %v434, %v521
      %v556 = vpack.c.bf16 %v437, %v522
      %v557 = vpack.c.bf16 %v440, %v523
      %v558 = vpack.c.bf16 %v443, %v524
      %v559 = vpack.c.bf16 %v446, %v525
      %v560 = vpack.c.bf16 %v449, %v526
      %v561 = vpack.c.bf16 %v452, %v527
      %v562 = vpack.c.bf16 %v455, %v528
      %v563 = vpack.c.bf16 %v458, %v529
      %v564 = vpack.c.bf16 %v461, %v530
      %v565 = vld [vmem:[%s2] sm:$0x3]
      %vm566 = vcmask 31744
      %v568 = vsel %vm566, %v549, 0
      %v571 = vsel %vm566, %v550, 0
      %v574 = vsel %vm566, %v551, 0
      %v577 = vsel %vm566, %v552, 0
      %v580 = vsel %vm566, %v553, 0
      %v583 = vsel %vm566, %v554, 0
      %v586 = vsel %vm566, %v555, 0
      %v589 = vsel %vm566, %v556, 0
      %v592 = vsel %vm566, %v557, 0
      %v595 = vsel %vm566, %v558, 0
      %v598 = vsel %vm566, %v559, 0
      %v601 = vsel %vm566, %v560, 0
      %v604 = vsel %vm566, %v561, 0
      %v607 = vsel %vm566, %v562, 0
      %v610 = vsel %vm566, %v563, 0
      %v613 = vsel %vm566, %v564, 0
      %vm615 = vcmask 1041408
      %v617 = vsel %vm615, %v565, 0
      %619 = vmatprep.subr.bf16.mxu0 0
      %620 = vmatpush1.bf16.msra.mxu0 %v617
      %621 = vmatprep.subr.bf16.mxu0 0
      %622 = vmatpush1.bf16.msra.mxu0 0
      %623 = vmatprep.subr.bf16.mxu0 0
      %624 = vmatpush1.bf16.msra.mxu0 0
      %625 = vmatprep.subr.bf16.mxu0 0
      %626 = vmatpush1.bf16.msra.mxu0 0
      %627 = vmatprep.subr.bf16.mxu0 0
      %628 = vmatpush1.bf16.msra.mxu0 0
      %629 = vmatprep.subr.bf16.mxu0 0
      %630 = vmatpush1.bf16.msra.mxu0 0
      %631 = vmatprep.subr.bf16.mxu0 0
      %632 = vmatpush1.bf16.msra.mxu0 0
      %633 = vmatprep.subr.bf16.mxu0 0
      %634 = vmatpush1.bf16.msra.mxu0 0
      %635 = vmatprep.subr.bf16.mxu0 0
      %636 = vmatpush1.bf16.msra.mxu0 0
      %637 = vmatprep.subr.bf16.mxu0 0
      %638 = vmatpush1.bf16.msra.mxu0 0
      %639 = vmatprep.subr.bf16.mxu0 0
      %640 = vmatpush1.bf16.msra.mxu0 0
      %641 = vmatprep.subr.bf16.mxu0 0
      %642 = vmatpush1.bf16.msra.mxu0 0
      %643 = vmatprep.subr.bf16.mxu0 0
      %644 = vmatpush1.bf16.msra.mxu0 0
      %645 = vmatprep.subr.bf16.mxu0 0
      %646 = vmatpush1.bf16.msra.mxu0 0
      %647 = vmatprep.subr.bf16.mxu0 0
      %648 = vmatpush1.bf16.msra.mxu0 0
      %649 = vmatprep.subr.bf16.mxu0 0
      %650 = vmatpush1.bf16.msra.mxu0 0
      %651 = vmatprep.mubr.bf16.mxu0 0
      %652 = vmatmul.mubr.bf16.gmra.mrb[0].mxu0 %v568
      %v653 = vpop.f32.mrb[0].mxu0
      %v654 = vadd.f32 0.0, %v653
      %v655 = vpop.f32.mrb[0].mxu0
      %v656 = vpop.f32.mrb[0].mxu0
      %v657 = vadd.f32 0.0, %v656
      %v658 = vpop.f32.mrb[0].mxu0
      %659 = vmatprep.mubr.bf16.mxu0 0
      %660 = vmatmul.mubr.bf16.gmra.mrb[0].mxu0 %v571
      %v661 = vpop.f32.mrb[0].mxu0
      %v662 = vadd.f32 0.0, %v661
      %v663 = vpop.f32.mrb[0].mxu0
      %v664 = vpop.f32.mrb[0].mxu0
      %v665 = vadd.f32 0.0, %v664
      %v666 = vpop.f32.mrb[0].mxu0
      %667 = vmatprep.mubr.bf16.mxu0 0
      %668 = vmatmul.mubr.bf16.gmra.mrb[0].mxu0 %v574
      %v669 = vpop.f32.mrb[0].mxu0
      %v670 = vadd.f32 0.0, %v669
      %v671 = vpop.f32.mrb[0].mxu0
      %v672 = vpop.f32.mrb[0].mxu0
      %v673 = vadd.f32 0.0, %v672
      %v674 = vpop.f32.mrb[0].mxu0
      %675 = vmatprep.mubr.bf16.mxu0 0
      %676 = vmatmul.mubr.bf16.gmra.mrb[0].mxu0 %v577
      %v677 = vpop.f32.mrb[0].mxu0
      %v678 = vadd.f32 0.0, %v677
      %v679 = vpop.f32.mrb[0].mxu0
      %v680 = vpop.f32.mrb[0].mxu0
      %v681 = vadd.f32 0.0, %v680
      %v682 = vpop.f32.mrb[0].mxu0
      %683 = vmatprep.mubr.bf16.mxu0 0
      %684 = vmatmul.mubr.bf16.gmra.mrb[0].mxu0 %v580
      %v685 = vpop.f32.mrb[0].mxu0
      %v686 = vadd.f32 0.0, %v685
      %v687 = vpop.f32.mrb[0].mxu0
      %v688 = vpop.f32.mrb[0].mxu0
      %v689 = vadd.f32 0.0, %v688
      %v690 = vpop.f32.mrb[0].mxu0
      %691 = vmatprep.mubr.bf16.mxu0 0
      %692 = vmatmul.mubr.bf16.gmra.mrb[0].mxu0 %v583
      %v693 = vpop.f32.mrb[0].mxu0
      %v694 = vadd.f32 0.0, %v693
      %v695 = vpop.f32.mrb[0].mxu0
      %v696 = vpop.f32.mrb[0].mxu0
      %v697 = vadd.f32 0.0, %v696
      %v698 = vpop.f32.mrb[0].mxu0
      %699 = vmatprep.mubr.bf16.mxu0 0
      %700 = vmatmul.mubr.bf16.gmra.mrb[0].mxu0 %v586
      %v701 = vpop.f32.mrb[0].mxu0
      %v702 = vadd.f32 0.0, %v701
      %v703 = vpop.f32.mrb[0].mxu0
      %v704 = vpop.f32.mrb[0].mxu0
      %v705 = vadd.f32 0.0, %v704
      %v706 = vpop.f32.mrb[0].mxu0
      %707 = vmatprep.mubr.bf16.mxu0 0
      %708 = vmatmul.mubr.bf16.gmra.mrb[0].mxu0 %v589
      %v709 = vpop.f32.mrb[0].mxu0
      %v710 = vadd.f32 0.0, %v709
      %v711 = vpop.f32.mrb[0].mxu0
      %v712 = vpop.f32.mrb[0].mxu0
      %v713 = vadd.f32 0.0, %v712
      %v714 = vpop.f32.mrb[0].mxu0
      %715 = vmatprep.mubr.bf16.mxu0 0
      %716 = vmatmul.mubr.bf16.gmra.mrb[0].mxu0 %v592
      %v717 = vpop.f32.mrb[0].mxu0
      %v718 = vadd.f32 0.0, %v717
      %v719 = vpop.f32.mrb[0].mxu0
      %v720 = vpop.f32.mrb[0].mxu0
      %v721 = vadd.f32 0.0, %v720
      %v722 = vpop.f32.mrb[0].mxu0
      %723 = vmatprep.mubr.bf16.mxu0 0
      %724 = vmatmul.mubr.bf16.gmra.mrb[0].mxu0 %v595
      %v725 = vpop.f32.mrb[0].mxu0
      %v726 = vadd.f32 0.0, %v725
      %v727 = vpop.f32.mrb[0].mxu0
      %v728 = vpop.f32.mrb[0].mxu0
      %v729 = vadd.f32 0.0, %v728
      %v730 = vpop.f32.mrb[0].mxu0
      %731 = vmatprep.mubr.bf16.mxu0 0
      %732 = vmatmul.mubr.bf16.gmra.mrb[0].mxu0 %v598
      %v733 = vpop.f32.mrb[0].mxu0
      %v734 = vadd.f32 0.0, %v733
      %v735 = vpop.f32.mrb[0].mxu0
      %v736 = vpop.f32.mrb[0].mxu0
      %v737 = vadd.f32 0.0, %v736
      %v738 = vpop.f32.mrb[0].mxu0
      %739 = vmatprep.mubr.bf16.mxu0 0
      %740 = vmatmul.mubr.bf16.gmra.mrb[0].mxu0 %v601
      %v741 = vpop.f32.mrb[0].mxu0
      %v742 = vadd.f32 0.0, %v741
      %v743 = vpop.f32.mrb[0].mxu0
      %v744 = vpop.f32.mrb[0].mxu0
      %v745 = vadd.f32 0.0, %v744
      %v746 = vpop.f32.mrb[0].mxu0
      %747 = vmatprep.mubr.bf16.mxu0 0
      %748 = vmatmul.mubr.bf16.gmra.mrb[0].mxu0 %v604
      %v749 = vpop.f32.mrb[0].mxu0
      %v750 = vadd.f32 0.0, %v749
      %v751 = vpop.f32.mrb[0].mxu0
      %v752 = vpop.f32.mrb[0].mxu0
      %v753 = vadd.f32 0.0, %v752
      %v754 = vpop.f32.mrb[0].mxu0
      %755 = vmatprep.mubr.bf16.mxu0 0
      %756 = vmatmul.mubr.bf16.gmra.mrb[0].mxu0 %v607
      %v757 = vpop.f32.mrb[0].mxu0
      %v758 = vadd.f32 0.0, %v757
      %v759 = vpop.f32.mrb[0].mxu0
      %v760 = vpop.f32.mrb[0].mxu0
      %v761 = vadd.f32 0.0, %v760
      %v762 = vpop.f32.mrb[0].mxu0
      %763 = vmatprep.mubr.bf16.mxu0 0
      %764 = vmatmul.mubr.bf16.gmra.mrb[0].mxu0 %v610
      %v765 = vpop.f32.mrb[0].mxu0
      %v766 = vadd.f32 0.0, %v765
      %v767 = vpop.f32.mrb[0].mxu0
      %v768 = vpop.f32.mrb[0].mxu0
      %v769 = vadd.f32 0.0, %v768
      %v770 = vpop.f32.mrb[0].mxu0
      %771 = vmatprep.mubr.bf16.mxu0 0
      %772 = vmatmul.mubr.bf16.gmra.mrb[0].mxu0 %v613
      %v773 = vpop.f32.mrb[0].mxu0
      %v774 = vadd.f32 0.0, %v773
      %v775 = vpop.f32.mrb[0].mxu0
      %v776 = vpop.f32.mrb[0].mxu0
      %v777 = vadd.f32 0.0, %v776
      %v778 = vpop.f32.mrb[0].mxu0
      %779 = vdwg.mxu0
      %v780 = vadd.f32 %v251, %v654
      %v781 = vadd.f32 %v251, %v657
      %v782 = vadd.f32 %v251, %v662
      %v783 = vadd.f32 %v251, %v665
      %v784 = vadd.f32 %v251, %v670
      %v785 = vadd.f32 %v251, %v673
      %v786 = vadd.f32 %v251, %v678
      %v787 = vadd.f32 %v251, %v681
      %v788 = vadd.f32 %v251, %v686
      %v789 = vadd.f32 %v251, %v689
      %v790 = vadd.f32 %v251, %v694
      %v791 = vadd.f32 %v251, %v697
      %v792 = vadd.f32 %v251, %v702
      %v793 = vadd.f32 %v251, %v705
      %v794 = vadd.f32 %v251, %v710
      %v795 = vadd.f32 %v251, %v713
      %v796 = vadd.f32 %v251, %v718
      %v797 = vadd.f32 %v251, %v721
      %v798 = vadd.f32 %v251, %v726
      %v799 = vadd.f32 %v251, %v729
      %v800 = vadd.f32 %v251, %v734
      %v801 = vadd.f32 %v251, %v737
      %v802 = vadd.f32 %v251, %v742
      %v803 = vadd.f32 %v251, %v745
      %v804 = vadd.f32 %v251, %v750
      %v805 = vadd.f32 %v251, %v753
      %v806 = vadd.f32 %v251, %v758
      %v807 = vadd.f32 %v251, %v761
      %v808 = vadd.f32 %v251, %v766
      %v809 = vadd.f32 %v251, %v769
      %v810 = vadd.f32 %v251, %v774
      %v811 = vadd.f32 %v251, %v777
      %vm844 = vcmask 1046528
      %v845 = vrot.slane %v515, 1
      %v846 = vrot.slane %v416, 1
      %v847 = vsel %vm844, %v845, %v846
      %v848 = vrot.slane %v532, 1
      %v849 = vsel %vm844, %v846, %v848
      %v850 = vrot.slane %v516, 1
      %v851 = vrot.slane %v419, 1
      %v852 = vsel %vm844, %v850, %v851
      %v853 = vrot.slane %v533, 1
      %v854 = vsel %vm844, %v851, %v853
      %v855 = vrot.slane %v517, 1
      %v856 = vrot.slane %v422, 1
      %v857 = vsel %vm844, %v855, %v856
      %v858 = vrot.slane %v534, 1
      %v859 = vsel %vm844, %v856, %v858
      %v860 = vrot.slane %v518, 1
      %v861 = vrot.slane %v425, 1
      %v862 = vsel %vm844, %v860, %v861
      %v863 = vrot.slane %v535, 1
      %v864 = vsel %vm844, %v861, %v863
      %v865 = vrot.slane %v519, 1
      %v866 = vrot.slane %v428, 1
      %v867 = vsel %vm844, %v865, %v866
      %v868 = vrot.slane %v536, 1
      %v869 = vsel %vm844, %v866, %v868
      %v870 = vrot.slane %v520, 1
      %v871 = vrot.slane %v431, 1
      %v872 = vsel %vm844, %v870, %v871
      %v873 = vrot.slane %v537, 1
      %v874 = vsel %vm844, %v871, %v873
      %v875 = vrot.slane %v521, 1
      %v876 = vrot.slane %v434, 1
      %v877 = vsel %vm844, %v875, %v876
      %v878 = vrot.slane %v538, 1
      %v879 = vsel %vm844, %v876, %v878
      %v880 = vrot.slane %v522, 1
      %v881 = vrot.slane %v437, 1
      %v882 = vsel %vm844, %v880, %v881
      %v883 = vrot.slane %v539, 1
      %v884 = vsel %vm844, %v881, %v883
      %v885 = vrot.slane %v523, 1
      %v886 = vrot.slane %v440, 1
      %v887 = vsel %vm844, %v885, %v886
      %v888 = vrot.slane %v540, 1
      %v889 = vsel %vm844, %v886, %v888
      %v890 = vrot.slane %v524, 1
      %v891 = vrot.slane %v443, 1
      %v892 = vsel %vm844, %v890, %v891
      %v893 = vrot.slane %v541, 1
      %v894 = vsel %vm844, %v891, %v893
      %v895 = vrot.slane %v525, 1
      %v896 = vrot.slane %v446, 1
      %v897 = vsel %vm844, %v895, %v896
      %v898 = vrot.slane %v542, 1
      %v899 = vsel %vm844, %v896, %v898
      %v900 = vrot.slane %v526, 1
      %v901 = vrot.slane %v449, 1
      %v902 = vsel %vm844, %v900, %v901
      %v903 = vrot.slane %v543, 1
      %v904 = vsel %vm844, %v901, %v903
      %v905 = vrot.slane %v527, 1
      %v906 = vrot.slane %v452, 1
      %v907 = vsel %vm844, %v905, %v906
      %v908 = vrot.slane %v544, 1
      %v909 = vsel %vm844, %v906, %v908
      %v910 = vrot.slane %v528, 1
      %v911 = vrot.slane %v455, 1
      %v912 = vsel %vm844, %v910, %v911
      %v913 = vrot.slane %v545, 1
      %v914 = vsel %vm844, %v911, %v913
      %v915 = vrot.slane %v529, 1
      %v916 = vrot.slane %v458, 1
      %v917 = vsel %vm844, %v915, %v916
      %v918 = vrot.slane %v546, 1
      %v919 = vsel %vm844, %v916, %v918
      %v920 = vrot.slane %v530, 1
      %v921 = vrot.slane %v461, 1
      %v922 = vsel %vm844, %v920, %v921
      %v923 = vrot.slane %v547, 1
      %v924 = vsel %vm844, %v921, %v923
      %v957 = vpack.c.bf16 %v849, %v847
      %v958 = vpack.c.bf16 %v854, %v852
      %v959 = vpack.c.bf16 %v859, %v857
      %v960 = vpack.c.bf16 %v864, %v862
      %v961 = vpack.c.bf16 %v869, %v867
      %v962 = vpack.c.bf16 %v874, %v872
      %v963 = vpack.c.bf16 %v879, %v877
      %v964 = vpack.c.bf16 %v884, %v882
      %v965 = vpack.c.bf16 %v889, %v887
      %v966 = vpack.c.bf16 %v894, %v892
      %v967 = vpack.c.bf16 %v899, %v897
      %v968 = vpack.c.bf16 %v904, %v902
      %v969 = vpack.c.bf16 %v909, %v907
      %v970 = vpack.c.bf16 %v914, %v912
      %v971 = vpack.c.bf16 %v919, %v917
      %v972 = vpack.c.bf16 %v924, %v922
      %s973 = scalar_lea.vmem %s2, 2
      %v974 = vld [vmem:[%s973] sm:$0x3]
      %v976 = vsel %vm566, %v957, 0
      %v979 = vsel %vm566, %v958, 0
      %v982 = vsel %vm566, %v959, 0
      %v985 = vsel %vm566, %v960, 0
      %v988 = vsel %vm566, %v961, 0
      %v991 = vsel %vm566, %v962, 0
      %v994 = vsel %vm566, %v963, 0
      %v997 = vsel %vm566, %v964, 0
      %v1000 = vsel %vm566, %v965, 0
      %v1003 = vsel %vm566, %v966, 0
      %v1006 = vsel %vm566, %v967, 0
      %v1009 = vsel %vm566, %v968, 0
      %v1012 = vsel %vm566, %v969, 0
      %v1015 = vsel %vm566, %v970, 0
      %v1018 = vsel %vm566, %v971, 0
      %v1021 = vsel %vm566, %v972, 0
      %v1024 = vsel %vm615, %v974, 0
      %1026 = vmatprep.subr.bf16.mxu0 0
      %1027 = vmatpush1.bf16.msra.mxu0 %v1024
      %1028 = vmatprep.subr.bf16.mxu0 0
      %1029 = vmatpush1.bf16.msra.mxu0 0
      %1030 = vmatprep.subr.bf16.mxu0 0
      %1031 = vmatpush1.bf16.msra.mxu0 0
      %1032 = vmatprep.subr.bf16.mxu0 0
      %1033 = vmatpush1.bf16.msra.mxu0 0
      %1034 = vmatprep.subr.bf16.mxu0 0
      %1035 = vmatpush1.bf16.msra.mxu0 0
      %1036 = vmatprep.subr.bf16.mxu0 0
      %1037 = vmatpush1.bf16.msra.mxu0 0
      %1038 = vmatprep.subr.bf16.mxu0 0
      %1039 = vmatpush1.bf16.msra.mxu0 0
      %1040 = vmatprep.subr.bf16.mxu0 0
      %1041 = vmatpush1.bf16.msra.mxu0 0
      %1042 = vmatprep.subr.bf16.mxu0 0
      %1043 = vmatpush1.bf16.msra.mxu0 0
      %1044 = vmatprep.subr.bf16.mxu0 0
      %1045 = vmatpush1.bf16.msra.mxu0 0
      %1046 = vmatprep.subr.bf16.mxu0 0
      %1047 = vmatpush1.bf16.msra.mxu0 0
      %1048 = vmatprep.subr.bf16.mxu0 0
      %1049 = vmatpush1.bf16.msra.mxu0 0
      %1050 = vmatprep.subr.bf16.mxu0 0
      %1051 = vmatpush1.bf16.msra.mxu0 0
      %1052 = vmatprep.subr.bf16.mxu0 0
      %1053 = vmatpush1.bf16.msra.mxu0 0
      %1054 = vmatprep.subr.bf16.mxu0 0
      %1055 = vmatpush1.bf16.msra.mxu0 0
      %1056 = vmatprep.subr.bf16.mxu0 0
      %1057 = vmatpush1.bf16.msra.mxu0 0
      %1058 = vmatprep.mubr.bf16.mxu0 0
      %1059 = vmatmul.mubr.bf16.gmra.mrb[0].mxu0 %v976
      %v1060 = vpop.f32.mrb[0].mxu0
      %v1061 = vadd.f32 0.0, %v1060
      %v1062 = vpop.f32.mrb[0].mxu0
      %v1063 = vpop.f32.mrb[0].mxu0
      %v1064 = vadd.f32 0.0, %v1063
      %v1065 = vpop.f32.mrb[0].mxu0
      %1066 = vmatprep.mubr.bf16.mxu0 0
      %1067 = vmatmul.mubr.bf16.gmra.mrb[0].mxu0 %v979
      %v1068 = vpop.f32.mrb[0].mxu0
      %v1069 = vadd.f32 0.0, %v1068
      %v1070 = vpop.f32.mrb[0].mxu0
      %v1071 = vpop.f32.mrb[0].mxu0
      %v1072 = vadd.f32 0.0, %v1071
      %v1073 = vpop.f32.mrb[0].mxu0
      %1074 = vmatprep.mubr.bf16.mxu0 0
      %1075 = vmatmul.mubr.bf16.gmra.mrb[0].mxu0 %v982
      %v1076 = vpop.f32.mrb[0].mxu0
      %v1077 = vadd.f32 0.0, %v1076
      %v1078 = vpop.f32.mrb[0].mxu0
      %v1079 = vpop.f32.mrb[0].mxu0
      %v1080 = vadd.f32 0.0, %v1079
      %v1081 = vpop.f32.mrb[0].mxu0
      %1082 = vmatprep.mubr.bf16.mxu0 0
      %1083 = vmatmul.mubr.bf16.gmra.mrb[0].mxu0 %v985
      %v1084 = vpop.f32.mrb[0].mxu0
      %v1085 = vadd.f32 0.0, %v1084
      %v1086 = vpop.f32.mrb[0].mxu0
      %v1087 = vpop.f32.mrb[0].mxu0
      %v1088 = vadd.f32 0.0, %v1087
      %v1089 = vpop.f32.mrb[0].mxu0
      %1090 = vmatprep.mubr.bf16.mxu0 0
      %1091 = vmatmul.mubr.bf16.gmra.mrb[0].mxu0 %v988
      %v1092 = vpop.f32.mrb[0].mxu0
      %v1093 = vadd.f32 0.0, %v1092
      %v1094 = vpop.f32.mrb[0].mxu0
      %v1095 = vpop.f32.mrb[0].mxu0
      %v1096 = vadd.f32 0.0, %v1095
      %v1097 = vpop.f32.mrb[0].mxu0
      %1098 = vmatprep.mubr.bf16.mxu0 0
      %1099 = vmatmul.mubr.bf16.gmra.mrb[0].mxu0 %v991
      %v1100 = vpop.f32.mrb[0].mxu0
      %v1101 = vadd.f32 0.0, %v1100
      %v1102 = vpop.f32.mrb[0].mxu0
      %v1103 = vpop.f32.mrb[0].mxu0
      %v1104 = vadd.f32 0.0, %v1103
      %v1105 = vpop.f32.mrb[0].mxu0
      %1106 = vmatprep.mubr.bf16.mxu0 0
      %1107 = vmatmul.mubr.bf16.gmra.mrb[0].mxu0 %v994
      %v1108 = vpop.f32.mrb[0].mxu0
      %v1109 = vadd.f32 0.0, %v1108
      %v1110 = vpop.f32.mrb[0].mxu0
      %v1111 = vpop.f32.mrb[0].mxu0
      %v1112 = vadd.f32 0.0, %v1111
      %v1113 = vpop.f32.mrb[0].mxu0
      %1114 = vmatprep.mubr.bf16.mxu0 0
      %1115 = vmatmul.mubr.bf16.gmra.mrb[0].mxu0 %v997
      %v1116 = vpop.f32.mrb[0].mxu0
      %v1117 = vadd.f32 0.0, %v1116
      %v1118 = vpop.f32.mrb[0].mxu0
      %v1119 = vpop.f32.mrb[0].mxu0
      %v1120 = vadd.f32 0.0, %v1119
      %v1121 = vpop.f32.mrb[0].mxu0
      %1122 = vmatprep.mubr.bf16.mxu0 0
      %1123 = vmatmul.mubr.bf16.gmra.mrb[0].mxu0 %v1000
      %v1124 = vpop.f32.mrb[0].mxu0
      %v1125 = vadd.f32 0.0, %v1124
      %v1126 = vpop.f32.mrb[0].mxu0
      %v1127 = vpop.f32.mrb[0].mxu0
      %v1128 = vadd.f32 0.0, %v1127
      %v1129 = vpop.f32.mrb[0].mxu0
      %1130 = vmatprep.mubr.bf16.mxu0 0
      %1131 = vmatmul.mubr.bf16.gmra.mrb[0].mxu0 %v1003
      %v1132 = vpop.f32.mrb[0].mxu0
      %v1133 = vadd.f32 0.0, %v1132
      %v1134 = vpop.f32.mrb[0].mxu0
      %v1135 = vpop.f32.mrb[0].mxu0
      %v1136 = vadd.f32 0.0, %v1135
      %v1137 = vpop.f32.mrb[0].mxu0
      %1138 = vmatprep.mubr.bf16.mxu0 0
      %1139 = vmatmul.mubr.bf16.gmra.mrb[0].mxu0 %v1006
      %v1140 = vpop.f32.mrb[0].mxu0
      %v1141 = vadd.f32 0.0, %v1140
      %v1142 = vpop.f32.mrb[0].mxu0
      %v1143 = vpop.f32.mrb[0].mxu0
      %v1144 = vadd.f32 0.0, %v1143
      %v1145 = vpop.f32.mrb[0].mxu0
      %1146 = vmatprep.mubr.bf16.mxu0 0
      %1147 = vmatmul.mubr.bf16.gmra.mrb[0].mxu0 %v1009
      %v1148 = vpop.f32.mrb[0].mxu0
      %v1149 = vadd.f32 0.0, %v1148
      %v1150 = vpop.f32.mrb[0].mxu0
      %v1151 = vpop.f32.mrb[0].mxu0
      %v1152 = vadd.f32 0.0, %v1151
      %v1153 = vpop.f32.mrb[0].mxu0
      %1154 = vmatprep.mubr.bf16.mxu0 0
      %1155 = vmatmul.mubr.bf16.gmra.mrb[0].mxu0 %v1012
      %v1156 = vpop.f32.mrb[0].mxu0
      %v1157 = vadd.f32 0.0, %v1156
      %v1158 = vpop.f32.mrb[0].mxu0
      %v1159 = vpop.f32.mrb[0].mxu0
      %v1160 = vadd.f32 0.0, %v1159
      %v1161 = vpop.f32.mrb[0].mxu0
      %1162 = vmatprep.mubr.bf16.mxu0 0
      %1163 = vmatmul.mubr.bf16.gmra.mrb[0].mxu0 %v1015
      %v1164 = vpop.f32.mrb[0].mxu0
      %v1165 = vadd.f32 0.0, %v1164
      %v1166 = vpop.f32.mrb[0].mxu0
      %v1167 = vpop.f32.mrb[0].mxu0
      %v1168 = vadd.f32 0.0, %v1167
      %v1169 = vpop.f32.mrb[0].mxu0
      %1170 = vmatprep.mubr.bf16.mxu0 0
      %1171 = vmatmul.mubr.bf16.gmra.mrb[0].mxu0 %v1018
      %v1172 = vpop.f32.mrb[0].mxu0
      %v1173 = vadd.f32 0.0, %v1172
      %v1174 = vpop.f32.mrb[0].mxu0
      %v1175 = vpop.f32.mrb[0].mxu0
      %v1176 = vadd.f32 0.0, %v1175
      %v1177 = vpop.f32.mrb[0].mxu0
      %1178 = vmatprep.mubr.bf16.mxu0 0
      %1179 = vmatmul.mubr.bf16.gmra.mrb[0].mxu0 %v1021
      %v1180 = vpop.f32.mrb[0].mxu0
      %v1181 = vadd.f32 0.0, %v1180
      %v1182 = vpop.f32.mrb[0].mxu0
      %v1183 = vpop.f32.mrb[0].mxu0
      %v1184 = vadd.f32 0.0, %v1183
      %v1185 = vpop.f32.mrb[0].mxu0
      %1186 = vdwg.mxu0
      %v1187 = vadd.f32 %v780, %v1061
      %v1188 = vadd.f32 %v781, %v1064
      %v1189 = vadd.f32 %v782, %v1069
      %v1190 = vadd.f32 %v783, %v1072
      %v1191 = vadd.f32 %v784, %v1077
      %v1192 = vadd.f32 %v785, %v1080
      %v1193 = vadd.f32 %v786, %v1085
      %v1194 = vadd.f32 %v787, %v1088
      %v1195 = vadd.f32 %v788, %v1093
      %v1196 = vadd.f32 %v789, %v1096
      %v1197 = vadd.f32 %v790, %v1101
      %v1198 = vadd.f32 %v791, %v1104
      %v1199 = vadd.f32 %v792, %v1109
      %v1200 = vadd.f32 %v793, %v1112
      %v1201 = vadd.f32 %v794, %v1117
      %v1202 = vadd.f32 %v795, %v1120
      %v1203 = vadd.f32 %v796, %v1125
      %v1204 = vadd.f32 %v797, %v1128
      %v1205 = vadd.f32 %v798, %v1133
      %v1206 = vadd.f32 %v799, %v1136
      %v1207 = vadd.f32 %v800, %v1141
      %v1208 = vadd.f32 %v801, %v1144
      %v1209 = vadd.f32 %v802, %v1149
      %v1210 = vadd.f32 %v803, %v1152
      %v1211 = vadd.f32 %v804, %v1157
      %v1212 = vadd.f32 %v805, %v1160
      %v1213 = vadd.f32 %v806, %v1165
      %v1214 = vadd.f32 %v807, %v1168
      %v1215 = vadd.f32 %v808, %v1173
      %v1216 = vadd.f32 %v809, %v1176
      %v1217 = vadd.f32 %v810, %v1181
      %v1218 = vadd.f32 %v811, %v1184
      %vm1219 = vcmask 1045504
      %v1220 = vrot.slane %v515, 2
      %v1221 = vrot.slane %v416, 2
      %v1222 = vsel %vm1219, %v1220, %v1221
      %v1223 = vrot.slane %v532, 2
      %v1224 = vsel %vm1219, %v1221, %v1223
      %v1225 = vrot.slane %v516, 2
      %v1226 = vrot.slane %v419, 2
      %v1227 = vsel %vm1219, %v1225, %v1226
      %v1228 = vrot.slane %v533, 2
      %v1229 = vsel %vm1219, %v1226, %v1228
      %v1230 = vrot.slane %v517, 2
      %v1231 = vrot.slane %v422, 2
      %v1232 = vsel %vm1219, %v1230, %v1231
      %v1233 = vrot.slane %v534, 2
      %v1234 = vsel %vm1219, %v1231, %v1233
      %v1235 = vrot.slane %v518, 2
      %v1236 = vrot.slane %v425, 2
      %v1237 = vsel %vm1219, %v1235, %v1236
      %v1238 = vrot.slane %v535, 2
      %v1239 = vsel %vm1219, %v1236, %v1238
      %v1240 = vrot.slane %v519, 2
      %v1241 = vrot.slane %v428, 2
      %v1242 = vsel %vm1219, %v1240, %v1241
      %v1243 = vrot.slane %v536, 2
      %v1244 = vsel %vm1219, %v1241, %v1243
      %v1245 = vrot.slane %v520, 2
      %v1246 = vrot.slane %v431, 2
      %v1247 = vsel %vm1219, %v1245, %v1246
      %v1248 = vrot.slane %v537, 2
      %v1249 = vsel %vm1219, %v1246, %v1248
      %v1250 = vrot.slane %v521, 2
      %v1251 = vrot.slane %v434, 2
      %v1252 = vsel %vm1219, %v1250, %v1251
      %v1253 = vrot.slane %v538, 2
      %v1254 = vsel %vm1219, %v1251, %v1253
      %v1255 = vrot.slane %v522, 2
      %v1256 = vrot.slane %v437, 2
      %v1257 = vsel %vm1219, %v1255, %v1256
      %v1258 = vrot.slane %v539, 2
      %v1259 = vsel %vm1219, %v1256, %v1258
      %v1260 = vrot.slane %v523, 2
      %v1261 = vrot.slane %v440, 2
      %v1262 = vsel %vm1219, %v1260, %v1261
      %v1263 = vrot.slane %v540, 2
      %v1264 = vsel %vm1219, %v1261, %v1263
      %v1265 = vrot.slane %v524, 2
      %v1266 = vrot.slane %v443, 2
      %v1267 = vsel %vm1219, %v1265, %v1266
      %v1268 = vrot.slane %v541, 2
      %v1269 = vsel %vm1219, %v1266, %v1268
      %v1270 = vrot.slane %v525, 2
      %v1271 = vrot.slane %v446, 2
      %v1272 = vsel %vm1219, %v1270, %v1271
      %v1273 = vrot.slane %v542, 2
      %v1274 = vsel %vm1219, %v1271, %v1273
      %v1275 = vrot.slane %v526, 2
      %v1276 = vrot.slane %v449, 2
      %v1277 = vsel %vm1219, %v1275, %v1276
      %v1278 = vrot.slane %v543, 2
      %v1279 = vsel %vm1219, %v1276, %v1278
      %v1280 = vrot.slane %v527, 2
      %v1281 = vrot.slane %v452, 2
      %v1282 = vsel %vm1219, %v1280, %v1281
      %v1283 = vrot.slane %v544, 2
      %v1284 = vsel %vm1219, %v1281, %v1283
      %v1285 = vrot.slane %v528, 2
      %v1286 = vrot.slane %v455, 2
      %v1287 = vsel %vm1219, %v1285, %v1286
      %v1288 = vrot.slane %v545, 2
      %v1289 = vsel %vm1219, %v1286, %v1288
      %v1290 = vrot.slane %v529, 2
      %v1291 = vrot.slane %v458, 2
      %v1292 = vsel %vm1219, %v1290, %v1291
      %v1293 = vrot.slane %v546, 2
      %v1294 = vsel %vm1219, %v1291, %v1293
      %v1295 = vrot.slane %v530, 2
      %v1296 = vrot.slane %v461, 2
      %v1297 = vsel %vm1219, %v1295, %v1296
      %v1298 = vrot.slane %v547, 2
      %v1299 = vsel %vm1219, %v1296, %v1298
      %v1332 = vpack.c.bf16 %v1224, %v1222
      %v1333 = vpack.c.bf16 %v1229, %v1227
      %v1334 = vpack.c.bf16 %v1234, %v1232
      %v1335 = vpack.c.bf16 %v1239, %v1237
      %v1336 = vpack.c.bf16 %v1244, %v1242
      %v1337 = vpack.c.bf16 %v1249, %v1247
      %v1338 = vpack.c.bf16 %v1254, %v1252
      %v1339 = vpack.c.bf16 %v1259, %v1257
      %v1340 = vpack.c.bf16 %v1264, %v1262
      %v1341 = vpack.c.bf16 %v1269, %v1267
      %v1342 = vpack.c.bf16 %v1274, %v1272
      %v1343 = vpack.c.bf16 %v1279, %v1277
      %v1344 = vpack.c.bf16 %v1284, %v1282
      %v1345 = vpack.c.bf16 %v1289, %v1287
      %v1346 = vpack.c.bf16 %v1294, %v1292
      %v1347 = vpack.c.bf16 %v1299, %v1297
      %s1348 = scalar_lea.vmem %s2, 4
      %v1349 = vld [vmem:[%s1348] sm:$0x3]
      %v1351 = vsel %vm566, %v1332, 0
      %v1354 = vsel %vm566, %v1333, 0
      %v1357 = vsel %vm566, %v1334, 0
      %v1360 = vsel %vm566, %v1335, 0
      %v1363 = vsel %vm566, %v1336, 0
      %v1366 = vsel %vm566, %v1337, 0
      %v1369 = vsel %vm566, %v1338, 0
      %v1372 = vsel %vm566, %v1339, 0
      %v1375 = vsel %vm566, %v1340, 0
      %v1378 = vsel %vm566, %v1341, 0
      %v1381 = vsel %vm566, %v1342, 0
      %v1384 = vsel %vm566, %v1343, 0
      %v1387 = vsel %vm566, %v1344, 0
      %v1390 = vsel %vm566, %v1345, 0
      %v1393 = vsel %vm566, %v1346, 0
      %v1396 = vsel %vm566, %v1347, 0
      %v1399 = vsel %vm615, %v1349, 0
      %1401 = vmatprep.subr.bf16.mxu0 0
      %1402 = vmatpush1.bf16.msra.mxu0 %v1399
      %1403 = vmatprep.subr.bf16.mxu0 0
      %1404 = vmatpush1.bf16.msra.mxu0 0
      %1405 = vmatprep.subr.bf16.mxu0 0
      %1406 = vmatpush1.bf16.msra.mxu0 0
      %1407 = vmatprep.subr.bf16.mxu0 0
      %1408 = vmatpush1.bf16.msra.mxu0 0
      %1409 = vmatprep.subr.bf16.mxu0 0
      %1410 = vmatpush1.bf16.msra.mxu0 0
      %1411 = vmatprep.subr.bf16.mxu0 0
      %1412 = vmatpush1.bf16.msra.mxu0 0
      %1413 = vmatprep.subr.bf16.mxu0 0
      %1414 = vmatpush1.bf16.msra.mxu0 0
      %1415 = vmatprep.subr.bf16.mxu0 0
      %1416 = vmatpush1.bf16.msra.mxu0 0
      %1417 = vmatprep.subr.bf16.mxu0 0
      %1418 = vmatpush1.bf16.msra.mxu0 0
      %1419 = vmatprep.subr.bf16.mxu0 0
      %1420 = vmatpush1.bf16.msra.mxu0 0
      %1421 = vmatprep.subr.bf16.mxu0 0
      %1422 = vmatpush1.bf16.msra.mxu0 0
      %1423 = vmatprep.subr.bf16.mxu0 0
      %1424 = vmatpush1.bf16.msra.mxu0 0
      %1425 = vmatprep.subr.bf16.mxu0 0
      %1426 = vmatpush1.bf16.msra.mxu0 0
      %1427 = vmatprep.subr.bf16.mxu0 0
      %1428 = vmatpush1.bf16.msra.mxu0 0
      %1429 = vmatprep.subr.bf16.mxu0 0
      %1430 = vmatpush1.bf16.msra.mxu0 0
      %1431 = vmatprep.subr.bf16.mxu0 0
      %1432 = vmatpush1.bf16.msra.mxu0 0
      %1433 = vmatprep.mubr.bf16.mxu0 0
      %1434 = vmatmul.mubr.bf16.gmra.mrb[0].mxu0 %v1351
      %v1435 = vpop.f32.mrb[0].mxu0
      %v1436 = vadd.f32 0.0, %v1435
      %v1437 = vpop.f32.mrb[0].mxu0
      %v1438 = vpop.f32.mrb[0].mxu0
      %v1439 = vadd.f32 0.0, %v1438
      %v1440 = vpop.f32.mrb[0].mxu0
      %1441 = vmatprep.mubr.bf16.mxu0 0
      %1442 = vmatmul.mubr.bf16.gmra.mrb[0].mxu0 %v1354
      %v1443 = vpop.f32.mrb[0].mxu0
      %v1444 = vadd.f32 0.0, %v1443
      %v1445 = vpop.f32.mrb[0].mxu0
      %v1446 = vpop.f32.mrb[0].mxu0
      %v1447 = vadd.f32 0.0, %v1446
      %v1448 = vpop.f32.mrb[0].mxu0
      %1449 = vmatprep.mubr.bf16.mxu0 0
      %1450 = vmatmul.mubr.bf16.gmra.mrb[0].mxu0 %v1357
      %v1451 = vpop.f32.mrb[0].mxu0
      %v1452 = vadd.f32 0.0, %v1451
      %v1453 = vpop.f32.mrb[0].mxu0
      %v1454 = vpop.f32.mrb[0].mxu0
      %v1455 = vadd.f32 0.0, %v1454
      %v1456 = vpop.f32.mrb[0].mxu0
      %1457 = vmatprep.mubr.bf16.mxu0 0
      %1458 = vmatmul.mubr.bf16.gmra.mrb[0].mxu0 %v1360
      %v1459 = vpop.f32.mrb[0].mxu0
      %v1460 = vadd.f32 0.0, %v1459
      %v1461 = vpop.f32.mrb[0].mxu0
      %v1462 = vpop.f32.mrb[0].mxu0
      %v1463 = vadd.f32 0.0, %v1462
      %v1464 = vpop.f32.mrb[0].mxu0
      %1465 = vmatprep.mubr.bf16.mxu0 0
      %1466 = vmatmul.mubr.bf16.gmra.mrb[0].mxu0 %v1363
      %v1467 = vpop.f32.mrb[0].mxu0
      %v1468 = vadd.f32 0.0, %v1467
      %v1469 = vpop.f32.mrb[0].mxu0
      %v1470 = vpop.f32.mrb[0].mxu0
      %v1471 = vadd.f32 0.0, %v1470
      %v1472 = vpop.f32.mrb[0].mxu0
      %1473 = vmatprep.mubr.bf16.mxu0 0
      %1474 = vmatmul.mubr.bf16.gmra.mrb[0].mxu0 %v1366
      %v1475 = vpop.f32.mrb[0].mxu0
      %v1476 = vadd.f32 0.0, %v1475
      %v1477 = vpop.f32.mrb[0].mxu0
      %v1478 = vpop.f32.mrb[0].mxu0
      %v1479 = vadd.f32 0.0, %v1478
      %v1480 = vpop.f32.mrb[0].mxu0
      %1481 = vmatprep.mubr.bf16.mxu0 0
      %1482 = vmatmul.mubr.bf16.gmra.mrb[0].mxu0 %v1369
      %v1483 = vpop.f32.mrb[0].mxu0
      %v1484 = vadd.f32 0.0, %v1483
      %v1485 = vpop.f32.mrb[0].mxu0
      %v1486 = vpop.f32.mrb[0].mxu0
      %v1487 = vadd.f32 0.0, %v1486
      %v1488 = vpop.f32.mrb[0].mxu0
      %1489 = vmatprep.mubr.bf16.mxu0 0
      %1490 = vmatmul.mubr.bf16.gmra.mrb[0].mxu0 %v1372
      %v1491 = vpop.f32.mrb[0].mxu0
      %v1492 = vadd.f32 0.0, %v1491
      %v1493 = vpop.f32.mrb[0].mxu0
      %v1494 = vpop.f32.mrb[0].mxu0
      %v1495 = vadd.f32 0.0, %v1494
      %v1496 = vpop.f32.mrb[0].mxu0
      %1497 = vmatprep.mubr.bf16.mxu0 0
      %1498 = vmatmul.mubr.bf16.gmra.mrb[0].mxu0 %v1375
      %v1499 = vpop.f32.mrb[0].mxu0
      %v1500 = vadd.f32 0.0, %v1499
      %v1501 = vpop.f32.mrb[0].mxu0
      %v1502 = vpop.f32.mrb[0].mxu0
      %v1503 = vadd.f32 0.0, %v1502
      %v1504 = vpop.f32.mrb[0].mxu0
      %1505 = vmatprep.mubr.bf16.mxu0 0
      %1506 = vmatmul.mubr.bf16.gmra.mrb[0].mxu0 %v1378
      %v1507 = vpop.f32.mrb[0].mxu0
      %v1508 = vadd.f32 0.0, %v1507
      %v1509 = vpop.f32.mrb[0].mxu0
      %v1510 = vpop.f32.mrb[0].mxu0
      %v1511 = vadd.f32 0.0, %v1510
      %v1512 = vpop.f32.mrb[0].mxu0
      %1513 = vmatprep.mubr.bf16.mxu0 0
      %1514 = vmatmul.mubr.bf16.gmra.mrb[0].mxu0 %v1381
      %v1515 = vpop.f32.mrb[0].mxu0
      %v1516 = vadd.f32 0.0, %v1515
      %v1517 = vpop.f32.mrb[0].mxu0
      %v1518 = vpop.f32.mrb[0].mxu0
      %v1519 = vadd.f32 0.0, %v1518
      %v1520 = vpop.f32.mrb[0].mxu0
      %1521 = vmatprep.mubr.bf16.mxu0 0
      %1522 = vmatmul.mubr.bf16.gmra.mrb[0].mxu0 %v1384
      %v1523 = vpop.f32.mrb[0].mxu0
      %v1524 = vadd.f32 0.0, %v1523
      %v1525 = vpop.f32.mrb[0].mxu0
      %v1526 = vpop.f32.mrb[0].mxu0
      %v1527 = vadd.f32 0.0, %v1526
      %v1528 = vpop.f32.mrb[0].mxu0
      %1529 = vmatprep.mubr.bf16.mxu0 0
      %1530 = vmatmul.mubr.bf16.gmra.mrb[0].mxu0 %v1387
      %v1531 = vpop.f32.mrb[0].mxu0
      %v1532 = vadd.f32 0.0, %v1531
      %v1533 = vpop.f32.mrb[0].mxu0
      %v1534 = vpop.f32.mrb[0].mxu0
      %v1535 = vadd.f32 0.0, %v1534
      %v1536 = vpop.f32.mrb[0].mxu0
      %1537 = vmatprep.mubr.bf16.mxu0 0
      %1538 = vmatmul.mubr.bf16.gmra.mrb[0].mxu0 %v1390
      %v1539 = vpop.f32.mrb[0].mxu0
      %v1540 = vadd.f32 0.0, %v1539
      %v1541 = vpop.f32.mrb[0].mxu0
      %v1542 = vpop.f32.mrb[0].mxu0
      %v1543 = vadd.f32 0.0, %v1542
      %v1544 = vpop.f32.mrb[0].mxu0
      %1545 = vmatprep.mubr.bf16.mxu0 0
      %1546 = vmatmul.mubr.bf16.gmra.mrb[0].mxu0 %v1393
      %v1547 = vpop.f32.mrb[0].mxu0
      %v1548 = vadd.f32 0.0, %v1547
      %v1549 = vpop.f32.mrb[0].mxu0
      %v1550 = vpop.f32.mrb[0].mxu0
      %v1551 = vadd.f32 0.0, %v1550
      %v1552 = vpop.f32.mrb[0].mxu0
      %1553 = vmatprep.mubr.bf16.mxu0 0
      %1554 = vmatmul.mubr.bf16.gmra.mrb[0].mxu0 %v1396
      %v1555 = vpop.f32.mrb[0].mxu0
      %v1556 = vadd.f32 0.0, %v1555
      %v1557 = vpop.f32.mrb[0].mxu0
      %v1558 = vpop.f32.mrb[0].mxu0
      %v1559 = vadd.f32 0.0, %v1558
      %v1560 = vpop.f32.mrb[0].mxu0
      %1561 = vdwg.mxu0
      %v1562 = vadd.f32 %v1187, %v1436
      %v1563 = vadd.f32 %v1188, %v1439
      %v1564 = vadd.f32 %v1189, %v1444
      %v1565 = vadd.f32 %v1190, %v1447
      %v1566 = vadd.f32 %v1191, %v1452
      %v1567 = vadd.f32 %v1192, %v1455
      %v1568 = vadd.f32 %v1193, %v1460
      %v1569 = vadd.f32 %v1194, %v1463
      %v1570 = vadd.f32 %v1195, %v1468
      %v1571 = vadd.f32 %v1196, %v1471
      %v1572 = vadd.f32 %v1197, %v1476
      %v1573 = vadd.f32 %v1198, %v1479
      %v1574 = vadd.f32 %v1199, %v1484
      %v1575 = vadd.f32 %v1200, %v1487
      %v1576 = vadd.f32 %v1201, %v1492
      %v1577 = vadd.f32 %v1202, %v1495
      %v1578 = vadd.f32 %v1203, %v1500
      %v1579 = vadd.f32 %v1204, %v1503
      %v1580 = vadd.f32 %v1205, %v1508
      %v1581 = vadd.f32 %v1206, %v1511
      %v1582 = vadd.f32 %v1207, %v1516
      %v1583 = vadd.f32 %v1208, %v1519
      %v1584 = vadd.f32 %v1209, %v1524
      %v1585 = vadd.f32 %v1210, %v1527
      %v1586 = vadd.f32 %v1211, %v1532
      %v1587 = vadd.f32 %v1212, %v1535
      %v1588 = vadd.f32 %v1213, %v1540
      %v1589 = vadd.f32 %v1214, %v1543
      %v1590 = vadd.f32 %v1215, %v1548
      %v1591 = vadd.f32 %v1216, %v1551
      %v1592 = vadd.f32 %v1217, %v1556
      %v1593 = vadd.f32 %v1218, %v1559
      %v1594 = vpack.c.bf16 %v464, %v531
      %s1595 = scalar_lea.vmem %s2, 6
      %v1596 = vld [vmem:[%s1595] sm:$0x3]
      %v1598 = vsel %vm566, %v1594, 0
      %v1601 = vsel %vm615, %v1596, 0
      %1603 = vmatprep.subr.bf16.mxu0 0
      %1604 = vmatpush1.bf16.msra.mxu0 %v1601
      %1605 = vmatprep.subr.bf16.mxu0 0
      %1606 = vmatpush1.bf16.msra.mxu0 0
      %1607 = vmatprep.subr.bf16.mxu0 0
      %1608 = vmatpush1.bf16.msra.mxu0 0
      %1609 = vmatprep.subr.bf16.mxu0 0
      %1610 = vmatpush1.bf16.msra.mxu0 0
      %1611 = vmatprep.subr.bf16.mxu0 0
      %1612 = vmatpush1.bf16.msra.mxu0 0
      %1613 = vmatprep.subr.bf16.mxu0 0
      %1614 = vmatpush1.bf16.msra.mxu0 0
      %1615 = vmatprep.subr.bf16.mxu0 0
      %1616 = vmatpush1.bf16.msra.mxu0 0
      %1617 = vmatprep.subr.bf16.mxu0 0
      %1618 = vmatpush1.bf16.msra.mxu0 0
      %1619 = vmatprep.subr.bf16.mxu0 0
      %1620 = vmatpush1.bf16.msra.mxu0 0
      %1621 = vmatprep.subr.bf16.mxu0 0
      %1622 = vmatpush1.bf16.msra.mxu0 0
      %1623 = vmatprep.subr.bf16.mxu0 0
      %1624 = vmatpush1.bf16.msra.mxu0 0
      %1625 = vmatprep.subr.bf16.mxu0 0
      %1626 = vmatpush1.bf16.msra.mxu0 0
      %1627 = vmatprep.subr.bf16.mxu0 0
      %1628 = vmatpush1.bf16.msra.mxu0 0
      %1629 = vmatprep.subr.bf16.mxu0 0
      %1630 = vmatpush1.bf16.msra.mxu0 0
      %1631 = vmatprep.subr.bf16.mxu0 0
      %1632 = vmatpush1.bf16.msra.mxu0 0
      %1633 = vmatprep.subr.bf16.mxu0 0
      %1634 = vmatpush1.bf16.msra.mxu0 0
      %1635 = vmatprep.mubr.bf16.mxu0 0
      %1636 = vmatmul.mubr.bf16.gmra.mrb[0].mxu0 %v571
      %v1637 = vpop.f32.mrb[0].mxu0
      %v1638 = vadd.f32 0.0, %v1637
      %v1639 = vpop.f32.mrb[0].mxu0
      %v1640 = vpop.f32.mrb[0].mxu0
      %v1641 = vadd.f32 0.0, %v1640
      %v1642 = vpop.f32.mrb[0].mxu0
      %1643 = vmatprep.mubr.bf16.mxu0 0
      %1644 = vmatmul.mubr.bf16.gmra.mrb[0].mxu0 %v574
      %v1645 = vpop.f32.mrb[0].mxu0
      %v1646 = vadd.f32 0.0, %v1645
      %v1647 = vpop.f32.mrb[0].mxu0
      %v1648 = vpop.f32.mrb[0].mxu0
      %v1649 = vadd.f32 0.0, %v1648
      %v1650 = vpop.f32.mrb[0].mxu0
      %1651 = vmatprep.mubr.bf16.mxu0 0
      %1652 = vmatmul.mubr.bf16.gmra.mrb[0].mxu0 %v577
      %v1653 = vpop.f32.mrb[0].mxu0
      %v1654 = vadd.f32 0.0, %v1653
      %v1655 = vpop.f32.mrb[0].mxu0
      %v1656 = vpop.f32.mrb[0].mxu0
      %v1657 = vadd.f32 0.0, %v1656
      %v1658 = vpop.f32.mrb[0].mxu0
      %1659 = vmatprep.mubr.bf16.mxu0 0
      %1660 = vmatmul.mubr.bf16.gmra.mrb[0].mxu0 %v580
      %v1661 = vpop.f32.mrb[0].mxu0
      %v1662 = vadd.f32 0.0, %v1661
      %v1663 = vpop.f32.mrb[0].mxu0
      %v1664 = vpop.f32.mrb[0].mxu0
      %v1665 = vadd.f32 0.0, %v1664
      %v1666 = vpop.f32.mrb[0].mxu0
      %1667 = vmatprep.mubr.bf16.mxu0 0
      %1668 = vmatmul.mubr.bf16.gmra.mrb[0].mxu0 %v583
      %v1669 = vpop.f32.mrb[0].mxu0
      %v1670 = vadd.f32 0.0, %v1669
      %v1671 = vpop.f32.mrb[0].mxu0
      %v1672 = vpop.f32.mrb[0].mxu0
      %v1673 = vadd.f32 0.0, %v1672
      %v1674 = vpop.f32.mrb[0].mxu0
      %1675 = vmatprep.mubr.bf16.mxu0 0
      %1676 = vmatmul.mubr.bf16.gmra.mrb[0].mxu0 %v586
      %v1677 = vpop.f32.mrb[0].mxu0
      %v1678 = vadd.f32 0.0, %v1677
      %v1679 = vpop.f32.mrb[0].mxu0
      %v1680 = vpop.f32.mrb[0].mxu0
      %v1681 = vadd.f32 0.0, %v1680
      %v1682 = vpop.f32.mrb[0].mxu0
      %1683 = vmatprep.mubr.bf16.mxu0 0
      %1684 = vmatmul.mubr.bf16.gmra.mrb[0].mxu0 %v589
      %v1685 = vpop.f32.mrb[0].mxu0
      %v1686 = vadd.f32 0.0, %v1685
      %v1687 = vpop.f32.mrb[0].mxu0
      %v1688 = vpop.f32.mrb[0].mxu0
      %v1689 = vadd.f32 0.0, %v1688
      %v1690 = vpop.f32.mrb[0].mxu0
      %1691 = vmatprep.mubr.bf16.mxu0 0
      %1692 = vmatmul.mubr.bf16.gmra.mrb[0].mxu0 %v592
      %v1693 = vpop.f32.mrb[0].mxu0
      %v1694 = vadd.f32 0.0, %v1693
      %v1695 = vpop.f32.mrb[0].mxu0
      %v1696 = vpop.f32.mrb[0].mxu0
      %v1697 = vadd.f32 0.0, %v1696
      %v1698 = vpop.f32.mrb[0].mxu0
      %1699 = vmatprep.mubr.bf16.mxu0 0
      %1700 = vmatmul.mubr.bf16.gmra.mrb[0].mxu0 %v595
      %v1701 = vpop.f32.mrb[0].mxu0
      %v1702 = vadd.f32 0.0, %v1701
      %v1703 = vpop.f32.mrb[0].mxu0
      %v1704 = vpop.f32.mrb[0].mxu0
      %v1705 = vadd.f32 0.0, %v1704
      %v1706 = vpop.f32.mrb[0].mxu0
      %1707 = vmatprep.mubr.bf16.mxu0 0
      %1708 = vmatmul.mubr.bf16.gmra.mrb[0].mxu0 %v598
      %v1709 = vpop.f32.mrb[0].mxu0
      %v1710 = vadd.f32 0.0, %v1709
      %v1711 = vpop.f32.mrb[0].mxu0
      %v1712 = vpop.f32.mrb[0].mxu0
      %v1713 = vadd.f32 0.0, %v1712
      %v1714 = vpop.f32.mrb[0].mxu0
      %1715 = vmatprep.mubr.bf16.mxu0 0
      %1716 = vmatmul.mubr.bf16.gmra.mrb[0].mxu0 %v601
      %v1717 = vpop.f32.mrb[0].mxu0
      %v1718 = vadd.f32 0.0, %v1717
      %v1719 = vpop.f32.mrb[0].mxu0
      %v1720 = vpop.f32.mrb[0].mxu0
      %v1721 = vadd.f32 0.0, %v1720
      %v1722 = vpop.f32.mrb[0].mxu0
      %1723 = vmatprep.mubr.bf16.mxu0 0
      %1724 = vmatmul.mubr.bf16.gmra.mrb[0].mxu0 %v604
      %v1725 = vpop.f32.mrb[0].mxu0
      %v1726 = vadd.f32 0.0, %v1725
      %v1727 = vpop.f32.mrb[0].mxu0
      %v1728 = vpop.f32.mrb[0].mxu0
      %v1729 = vadd.f32 0.0, %v1728
      %v1730 = vpop.f32.mrb[0].mxu0
      %1731 = vmatprep.mubr.bf16.mxu0 0
      %1732 = vmatmul.mubr.bf16.gmra.mrb[0].mxu0 %v607
      %v1733 = vpop.f32.mrb[0].mxu0
      %v1734 = vadd.f32 0.0, %v1733
      %v1735 = vpop.f32.mrb[0].mxu0
      %v1736 = vpop.f32.mrb[0].mxu0
      %v1737 = vadd.f32 0.0, %v1736
      %v1738 = vpop.f32.mrb[0].mxu0
      %1739 = vmatprep.mubr.bf16.mxu0 0
      %1740 = vmatmul.mubr.bf16.gmra.mrb[0].mxu0 %v610
      %v1741 = vpop.f32.mrb[0].mxu0
      %v1742 = vadd.f32 0.0, %v1741
      %v1743 = vpop.f32.mrb[0].mxu0
      %v1744 = vpop.f32.mrb[0].mxu0
      %v1745 = vadd.f32 0.0, %v1744
      %v1746 = vpop.f32.mrb[0].mxu0
      %1747 = vmatprep.mubr.bf16.mxu0 0
      %1748 = vmatmul.mubr.bf16.gmra.mrb[0].mxu0 %v613
      %v1749 = vpop.f32.mrb[0].mxu0
      %v1750 = vadd.f32 0.0, %v1749
      %v1751 = vpop.f32.mrb[0].mxu0
      %v1752 = vpop.f32.mrb[0].mxu0
      %v1753 = vadd.f32 0.0, %v1752
      %v1754 = vpop.f32.mrb[0].mxu0
      %1755 = vmatprep.mubr.bf16.mxu0 0
      %1756 = vmatmul.mubr.bf16.gmra.mrb[0].mxu0 %v1598
      %v1757 = vpop.f32.mrb[0].mxu0
      %v1758 = vadd.f32 0.0, %v1757
      %v1759 = vpop.f32.mrb[0].mxu0
      %v1760 = vpop.f32.mrb[0].mxu0
      %v1761 = vadd.f32 0.0, %v1760
      %v1762 = vpop.f32.mrb[0].mxu0
      %1763 = vdwg.mxu0
      %v1764 = vadd.f32 %v1562, %v1638
      %v1765 = vadd.f32 %v1563, %v1641
      %v1766 = vadd.f32 %v1564, %v1646
      %v1767 = vadd.f32 %v1565, %v1649
      %v1768 = vadd.f32 %v1566, %v1654
      %v1769 = vadd.f32 %v1567, %v1657
      %v1770 = vadd.f32 %v1568, %v1662
      %v1771 = vadd.f32 %v1569, %v1665
      %v1772 = vadd.f32 %v1570, %v1670
      %v1773 = vadd.f32 %v1571, %v1673
      %v1774 = vadd.f32 %v1572, %v1678
      %v1775 = vadd.f32 %v1573, %v1681
      %v1776 = vadd.f32 %v1574, %v1686
      %v1777 = vadd.f32 %v1575, %v1689
      %v1778 = vadd.f32 %v1576, %v1694
      %v1779 = vadd.f32 %v1577, %v1697
      %v1780 = vadd.f32 %v1578, %v1702
      %v1781 = vadd.f32 %v1579, %v1705
      %v1782 = vadd.f32 %v1580, %v1710
      %v1783 = vadd.f32 %v1581, %v1713
      %v1784 = vadd.f32 %v1582, %v1718
      %v1785 = vadd.f32 %v1583, %v1721
      %v1786 = vadd.f32 %v1584, %v1726
      %v1787 = vadd.f32 %v1585, %v1729
      %v1788 = vadd.f32 %v1586, %v1734
      %v1789 = vadd.f32 %v1587, %v1737
      %v1790 = vadd.f32 %v1588, %v1742
      %v1791 = vadd.f32 %v1589, %v1745
      %v1792 = vadd.f32 %v1590, %v1750
      %v1793 = vadd.f32 %v1591, %v1753
      %v1794 = vadd.f32 %v1592, %v1758
      %v1795 = vadd.f32 %v1593, %v1761
      %v1798 = vrot.slane %v531, 1
      %v1799 = vrot.slane %v464, 1
      %v1800 = vsel %vm844, %v1798, %v1799
      %v1801 = vrot.slane %v548, 1
      %v1802 = vsel %vm844, %v1799, %v1801
      %v1805 = vpack.c.bf16 %v1802, %v1800
      %s1806 = scalar_lea.vmem %s2, 8
      %v1807 = vld [vmem:[%s1806] sm:$0x3]
      %v1809 = vsel %vm566, %v1805, 0
      %v1812 = vsel %vm615, %v1807, 0
      %1814 = vmatprep.subr.bf16.mxu0 0
      %1815 = vmatpush1.bf16.msra.mxu0 %v1812
      %1816 = vmatprep.subr.bf16.mxu0 0
      %1817 = vmatpush1.bf16.msra.mxu0 0
      %1818 = vmatprep.subr.bf16.mxu0 0
      %1819 = vmatpush1.bf16.msra.mxu0 0
      %1820 = vmatprep.subr.bf16.mxu0 0
      %1821 = vmatpush1.bf16.msra.mxu0 0
      %1822 = vmatprep.subr.bf16.mxu0 0
      %1823 = vmatpush1.bf16.msra.mxu0 0
      %1824 = vmatprep.subr.bf16.mxu0 0
      %1825 = vmatpush1.bf16.msra.mxu0 0
      %1826 = vmatprep.subr.bf16.mxu0 0
      %1827 = vmatpush1.bf16.msra.mxu0 0
      %1828 = vmatprep.subr.bf16.mxu0 0
      %1829 = vmatpush1.bf16.msra.mxu0 0
      %1830 = vmatprep.subr.bf16.mxu0 0
      %1831 = vmatpush1.bf16.msra.mxu0 0
      %1832 = vmatprep.subr.bf16.mxu0 0
      %1833 = vmatpush1.bf16.msra.mxu0 0
      %1834 = vmatprep.subr.bf16.mxu0 0
      %1835 = vmatpush1.bf16.msra.mxu0 0
      %1836 = vmatprep.subr.bf16.mxu0 0
      %1837 = vmatpush1.bf16.msra.mxu0 0
      %1838 = vmatprep.subr.bf16.mxu0 0
      %1839 = vmatpush1.bf16.msra.mxu0 0
      %1840 = vmatprep.subr.bf16.mxu0 0
      %1841 = vmatpush1.bf16.msra.mxu0 0
      %1842 = vmatprep.subr.bf16.mxu0 0
      %1843 = vmatpush1.bf16.msra.mxu0 0
      %1844 = vmatprep.subr.bf16.mxu0 0
      %1845 = vmatpush1.bf16.msra.mxu0 0
      %1846 = vmatprep.mubr.bf16.mxu0 0
      %1847 = vmatmul.mubr.bf16.gmra.mrb[0].mxu0 %v979
      %v1848 = vpop.f32.mrb[0].mxu0
      %v1849 = vadd.f32 0.0, %v1848
      %v1850 = vpop.f32.mrb[0].mxu0
      %v1851 = vpop.f32.mrb[0].mxu0
      %v1852 = vadd.f32 0.0, %v1851
      %v1853 = vpop.f32.mrb[0].mxu0
      %1854 = vmatprep.mubr.bf16.mxu0 0
      %1855 = vmatmul.mubr.bf16.gmra.mrb[0].mxu0 %v982
      %v1856 = vpop.f32.mrb[0].mxu0
      %v1857 = vadd.f32 0.0, %v1856
      %v1858 = vpop.f32.mrb[0].mxu0
      %v1859 = vpop.f32.mrb[0].mxu0
      %v1860 = vadd.f32 0.0, %v1859
      %v1861 = vpop.f32.mrb[0].mxu0
      %1862 = vmatprep.mubr.bf16.mxu0 0
      %1863 = vmatmul.mubr.bf16.gmra.mrb[0].mxu0 %v985
      %v1864 = vpop.f32.mrb[0].mxu0
      %v1865 = vadd.f32 0.0, %v1864
      %v1866 = vpop.f32.mrb[0].mxu0
      %v1867 = vpop.f32.mrb[0].mxu0
      %v1868 = vadd.f32 0.0, %v1867
      %v1869 = vpop.f32.mrb[0].mxu0
      %1870 = vmatprep.mubr.bf16.mxu0 0
      %1871 = vmatmul.mubr.bf16.gmra.mrb[0].mxu0 %v988
      %v1872 = vpop.f32.mrb[0].mxu0
      %v1873 = vadd.f32 0.0, %v1872
      %v1874 = vpop.f32.mrb[0].mxu0
      %v1875 = vpop.f32.mrb[0].mxu0
      %v1876 = vadd.f32 0.0, %v1875
      %v1877 = vpop.f32.mrb[0].mxu0
      %1878 = vmatprep.mubr.bf16.mxu0 0
      %1879 = vmatmul.mubr.bf16.gmra.mrb[0].mxu0 %v991
      %v1880 = vpop.f32.mrb[0].mxu0
      %v1881 = vadd.f32 0.0, %v1880
      %v1882 = vpop.f32.mrb[0].mxu0
      %v1883 = vpop.f32.mrb[0].mxu0
      %v1884 = vadd.f32 0.0, %v1883
      %v1885 = vpop.f32.mrb[0].mxu0
      %1886 = vmatprep.mubr.bf16.mxu0 0
      %1887 = vmatmul.mubr.bf16.gmra.mrb[0].mxu0 %v994
      %v1888 = vpop.f32.mrb[0].mxu0
      %v1889 = vadd.f32 0.0, %v1888
      %v1890 = vpop.f32.mrb[0].mxu0
      %v1891 = vpop.f32.mrb[0].mxu0
      %v1892 = vadd.f32 0.0, %v1891
      %v1893 = vpop.f32.mrb[0].mxu0
      %1894 = vmatprep.mubr.bf16.mxu0 0
      %1895 = vmatmul.mubr.bf16.gmra.mrb[0].mxu0 %v997
      %v1896 = vpop.f32.mrb[0].mxu0
      %v1897 = vadd.f32 0.0, %v1896
      %v1898 = vpop.f32.mrb[0].mxu0
      %v1899 = vpop.f32.mrb[0].mxu0
      %v1900 = vadd.f32 0.0, %v1899
      %v1901 = vpop.f32.mrb[0].mxu0
      %1902 = vmatprep.mubr.bf16.mxu0 0
      %1903 = vmatmul.mubr.bf16.gmra.mrb[0].mxu0 %v1000
      %v1904 = vpop.f32.mrb[0].mxu0
      %v1905 = vadd.f32 0.0, %v1904
      %v1906 = vpop.f32.mrb[0].mxu0
      %v1907 = vpop.f32.mrb[0].mxu0
      %v1908 = vadd.f32 0.0, %v1907
      %v1909 = vpop.f32.mrb[0].mxu0
      %1910 = vmatprep.mubr.bf16.mxu0 0
      %1911 = vmatmul.mubr.bf16.gmra.mrb[0].mxu0 %v1003
      %v1912 = vpop.f32.mrb[0].mxu0
      %v1913 = vadd.f32 0.0, %v1912
      %v1914 = vpop.f32.mrb[0].mxu0
      %v1915 = vpop.f32.mrb[0].mxu0
      %v1916 = vadd.f32 0.0, %v1915
      %v1917 = vpop.f32.mrb[0].mxu0
      %1918 = vmatprep.mubr.bf16.mxu0 0
      %1919 = vmatmul.mubr.bf16.gmra.mrb[0].mxu0 %v1006
      %v1920 = vpop.f32.mrb[0].mxu0
      %v1921 = vadd.f32 0.0, %v1920
      %v1922 = vpop.f32.mrb[0].mxu0
      %v1923 = vpop.f32.mrb[0].mxu0
      %v1924 = vadd.f32 0.0, %v1923
      %v1925 = vpop.f32.mrb[0].mxu0
      %1926 = vmatprep.mubr.bf16.mxu0 0
      %1927 = vmatmul.mubr.bf16.gmra.mrb[0].mxu0 %v1009
      %v1928 = vpop.f32.mrb[0].mxu0
      %v1929 = vadd.f32 0.0, %v1928
      %v1930 = vpop.f32.mrb[0].mxu0
      %v1931 = vpop.f32.mrb[0].mxu0
      %v1932 = vadd.f32 0.0, %v1931
      %v1933 = vpop.f32.mrb[0].mxu0
      %1934 = vmatprep.mubr.bf16.mxu0 0
      %1935 = vmatmul.mubr.bf16.gmra.mrb[0].mxu0 %v1012
      %v1936 = vpop.f32.mrb[0].mxu0
      %v1937 = vadd.f32 0.0, %v1936
      %v1938 = vpop.f32.mrb[0].mxu0
      %v1939 = vpop.f32.mrb[0].mxu0
      %v1940 = vadd.f32 0.0, %v1939
      %v1941 = vpop.f32.mrb[0].mxu0
      %1942 = vmatprep.mubr.bf16.mxu0 0
      %1943 = vmatmul.mubr.bf16.gmra.mrb[0].mxu0 %v1015
      %v1944 = vpop.f32.mrb[0].mxu0
      %v1945 = vadd.f32 0.0, %v1944
      %v1946 = vpop.f32.mrb[0].mxu0
      %v1947 = vpop.f32.mrb[0].mxu0
      %v1948 = vadd.f32 0.0, %v1947
      %v1949 = vpop.f32.mrb[0].mxu0
      %1950 = vmatprep.mubr.bf16.mxu0 0
      %1951 = vmatmul.mubr.bf16.gmra.mrb[0].mxu0 %v1018
      %v1952 = vpop.f32.mrb[0].mxu0
      %v1953 = vadd.f32 0.0, %v1952
      %v1954 = vpop.f32.mrb[0].mxu0
      %v1955 = vpop.f32.mrb[0].mxu0
      %v1956 = vadd.f32 0.0, %v1955
      %v1957 = vpop.f32.mrb[0].mxu0
      %1958 = vmatprep.mubr.bf16.mxu0 0
      %1959 = vmatmul.mubr.bf16.gmra.mrb[0].mxu0 %v1021
      %v1960 = vpop.f32.mrb[0].mxu0
      %v1961 = vadd.f32 0.0, %v1960
      %v1962 = vpop.f32.mrb[0].mxu0
      %v1963 = vpop.f32.mrb[0].mxu0
      %v1964 = vadd.f32 0.0, %v1963
      %v1965 = vpop.f32.mrb[0].mxu0
      %1966 = vmatprep.mubr.bf16.mxu0 0
      %1967 = vmatmul.mubr.bf16.gmra.mrb[0].mxu0 %v1809
      %v1968 = vpop.f32.mrb[0].mxu0
      %v1969 = vadd.f32 0.0, %v1968
      %v1970 = vpop.f32.mrb[0].mxu0
      %v1971 = vpop.f32.mrb[0].mxu0
      %v1972 = vadd.f32 0.0, %v1971
      %v1973 = vpop.f32.mrb[0].mxu0
      %1974 = vdwg.mxu0
      %v1975 = vadd.f32 %v1764, %v1849
      %v1976 = vadd.f32 %v1765, %v1852
      %v1977 = vadd.f32 %v1766, %v1857
      %v1978 = vadd.f32 %v1767, %v1860
      %v1979 = vadd.f32 %v1768, %v1865
      %v1980 = vadd.f32 %v1769, %v1868
      %v1981 = vadd.f32 %v1770, %v1873
      %v1982 = vadd.f32 %v1771, %v1876
      %v1983 = vadd.f32 %v1772, %v1881
      %v1984 = vadd.f32 %v1773, %v1884
      %v1985 = vadd.f32 %v1774, %v1889
      %v1986 = vadd.f32 %v1775, %v1892
      %v1987 = vadd.f32 %v1776, %v1897
      %v1988 = vadd.f32 %v1777, %v1900
      %v1989 = vadd.f32 %v1778, %v1905
      %v1990 = vadd.f32 %v1779, %v1908
      %v1991 = vadd.f32 %v1780, %v1913
      %v1992 = vadd.f32 %v1781, %v1916
      %v1993 = vadd.f32 %v1782, %v1921
      %v1994 = vadd.f32 %v1783, %v1924
      %v1995 = vadd.f32 %v1784, %v1929
      %v1996 = vadd.f32 %v1785, %v1932
      %v1997 = vadd.f32 %v1786, %v1937
      %v1998 = vadd.f32 %v1787, %v1940
      %v1999 = vadd.f32 %v1788, %v1945
      %v2000 = vadd.f32 %v1789, %v1948
      %v2001 = vadd.f32 %v1790, %v1953
      %v2002 = vadd.f32 %v1791, %v1956
      %v2003 = vadd.f32 %v1792, %v1961
      %v2004 = vadd.f32 %v1793, %v1964
      %v2005 = vadd.f32 %v1794, %v1969
      %v2006 = vadd.f32 %v1795, %v1972
      %v2007 = vrot.slane %v531, 2
      %v2008 = vrot.slane %v464, 2
      %v2009 = vsel %vm1219, %v2007, %v2008
      %v2010 = vrot.slane %v548, 2
      %v2011 = vsel %vm1219, %v2008, %v2010
      %v2014 = vpack.c.bf16 %v2011, %v2009
      %s2015 = scalar_lea.vmem %s2, 10
      %v2016 = vld [vmem:[%s2015] sm:$0x3]
      %v2018 = vsel %vm566, %v2014, 0
      %v2021 = vsel %vm615, %v2016, 0
      %2023 = vmatprep.subr.bf16.mxu0 0
      %2024 = vmatpush1.bf16.msra.mxu0 %v2021
      %2025 = vmatprep.subr.bf16.mxu0 0
      %2026 = vmatpush1.bf16.msra.mxu0 0
      %2027 = vmatprep.subr.bf16.mxu0 0
      %2028 = vmatpush1.bf16.msra.mxu0 0
      %2029 = vmatprep.subr.bf16.mxu0 0
      %2030 = vmatpush1.bf16.msra.mxu0 0
      %2031 = vmatprep.subr.bf16.mxu0 0
      %2032 = vmatpush1.bf16.msra.mxu0 0
      %2033 = vmatprep.subr.bf16.mxu0 0
      %2034 = vmatpush1.bf16.msra.mxu0 0
      %2035 = vmatprep.subr.bf16.mxu0 0
      %2036 = vmatpush1.bf16.msra.mxu0 0
      %2037 = vmatprep.subr.bf16.mxu0 0
      %2038 = vmatpush1.bf16.msra.mxu0 0
      %2039 = vmatprep.subr.bf16.mxu0 0
      %2040 = vmatpush1.bf16.msra.mxu0 0
      %2041 = vmatprep.subr.bf16.mxu0 0
      %2042 = vmatpush1.bf16.msra.mxu0 0
      %2043 = vmatprep.subr.bf16.mxu0 0
      %2044 = vmatpush1.bf16.msra.mxu0 0
      %2045 = vmatprep.subr.bf16.mxu0 0
      %2046 = vmatpush1.bf16.msra.mxu0 0
      %2047 = vmatprep.subr.bf16.mxu0 0
      %2048 = vmatpush1.bf16.msra.mxu0 0
      %2049 = vmatprep.subr.bf16.mxu0 0
      %2050 = vmatpush1.bf16.msra.mxu0 0
      %2051 = vmatprep.subr.bf16.mxu0 0
      %2052 = vmatpush1.bf16.msra.mxu0 0
      %2053 = vmatprep.subr.bf16.mxu0 0
      %2054 = vmatpush1.bf16.msra.mxu0 0
      %2055 = vmatprep.mubr.bf16.mxu0 0
      %2056 = vmatmul.mubr.bf16.gmra.mrb[0].mxu0 %v1354
      %v2057 = vpop.f32.mrb[0].mxu0
      %v2058 = vadd.f32 0.0, %v2057
      %v2059 = vpop.f32.mrb[0].mxu0
      %v2060 = vpop.f32.mrb[0].mxu0
      %v2061 = vadd.f32 0.0, %v2060
      %v2062 = vpop.f32.mrb[0].mxu0
      %2063 = vmatprep.mubr.bf16.mxu0 0
      %2064 = vmatmul.mubr.bf16.gmra.mrb[0].mxu0 %v1357
      %v2065 = vpop.f32.mrb[0].mxu0
      %v2066 = vadd.f32 0.0, %v2065
      %v2067 = vpop.f32.mrb[0].mxu0
      %v2068 = vpop.f32.mrb[0].mxu0
      %v2069 = vadd.f32 0.0, %v2068
      %v2070 = vpop.f32.mrb[0].mxu0
      %2071 = vmatprep.mubr.bf16.mxu0 0
      %2072 = vmatmul.mubr.bf16.gmra.mrb[0].mxu0 %v1360
      %v2073 = vpop.f32.mrb[0].mxu0
      %v2074 = vadd.f32 0.0, %v2073
      %v2075 = vpop.f32.mrb[0].mxu0
      %v2076 = vpop.f32.mrb[0].mxu0
      %v2077 = vadd.f32 0.0, %v2076
      %v2078 = vpop.f32.mrb[0].mxu0
      %2079 = vmatprep.mubr.bf16.mxu0 0
      %2080 = vmatmul.mubr.bf16.gmra.mrb[0].mxu0 %v1363
      %v2081 = vpop.f32.mrb[0].mxu0
      %v2082 = vadd.f32 0.0, %v2081
      %v2083 = vpop.f32.mrb[0].mxu0
      %v2084 = vpop.f32.mrb[0].mxu0
      %v2085 = vadd.f32 0.0, %v2084
      %v2086 = vpop.f32.mrb[0].mxu0
      %2087 = vmatprep.mubr.bf16.mxu0 0
      %2088 = vmatmul.mubr.bf16.gmra.mrb[0].mxu0 %v1366
      %v2089 = vpop.f32.mrb[0].mxu0
      %v2090 = vadd.f32 0.0, %v2089
      %v2091 = vpop.f32.mrb[0].mxu0
      %v2092 = vpop.f32.mrb[0].mxu0
      %v2093 = vadd.f32 0.0, %v2092
      %v2094 = vpop.f32.mrb[0].mxu0
      %2095 = vmatprep.mubr.bf16.mxu0 0
      %2096 = vmatmul.mubr.bf16.gmra.mrb[0].mxu0 %v1369
      %v2097 = vpop.f32.mrb[0].mxu0
      %v2098 = vadd.f32 0.0, %v2097
      %v2099 = vpop.f32.mrb[0].mxu0
      %v2100 = vpop.f32.mrb[0].mxu0
      %v2101 = vadd.f32 0.0, %v2100
      %v2102 = vpop.f32.mrb[0].mxu0
      %2103 = vmatprep.mubr.bf16.mxu0 0
      %2104 = vmatmul.mubr.bf16.gmra.mrb[0].mxu0 %v1372
      %v2105 = vpop.f32.mrb[0].mxu0
      %v2106 = vadd.f32 0.0, %v2105
      %v2107 = vpop.f32.mrb[0].mxu0
      %v2108 = vpop.f32.mrb[0].mxu0
      %v2109 = vadd.f32 0.0, %v2108
      %v2110 = vpop.f32.mrb[0].mxu0
      %2111 = vmatprep.mubr.bf16.mxu0 0
      %2112 = vmatmul.mubr.bf16.gmra.mrb[0].mxu0 %v1375
      %v2113 = vpop.f32.mrb[0].mxu0
      %v2114 = vadd.f32 0.0, %v2113
      %v2115 = vpop.f32.mrb[0].mxu0
      %v2116 = vpop.f32.mrb[0].mxu0
      %v2117 = vadd.f32 0.0, %v2116
      %v2118 = vpop.f32.mrb[0].mxu0
      %2119 = vmatprep.mubr.bf16.mxu0 0
      %2120 = vmatmul.mubr.bf16.gmra.mrb[0].mxu0 %v1378
      %v2121 = vpop.f32.mrb[0].mxu0
      %v2122 = vadd.f32 0.0, %v2121
      %v2123 = vpop.f32.mrb[0].mxu0
      %v2124 = vpop.f32.mrb[0].mxu0
      %v2125 = vadd.f32 0.0, %v2124
      %v2126 = vpop.f32.mrb[0].mxu0
      %2127 = vmatprep.mubr.bf16.mxu0 0
      %2128 = vmatmul.mubr.bf16.gmra.mrb[0].mxu0 %v1381
      %v2129 = vpop.f32.mrb[0].mxu0
      %v2130 = vadd.f32 0.0, %v2129
      %v2131 = vpop.f32.mrb[0].mxu0
      %v2132 = vpop.f32.mrb[0].mxu0
      %v2133 = vadd.f32 0.0, %v2132
      %v2134 = vpop.f32.mrb[0].mxu0
      %2135 = vmatprep.mubr.bf16.mxu0 0
      %2136 = vmatmul.mubr.bf16.gmra.mrb[0].mxu0 %v1384
      %v2137 = vpop.f32.mrb[0].mxu0
      %v2138 = vadd.f32 0.0, %v2137
      %v2139 = vpop.f32.mrb[0].mxu0
      %v2140 = vpop.f32.mrb[0].mxu0
      %v2141 = vadd.f32 0.0, %v2140
      %v2142 = vpop.f32.mrb[0].mxu0
      %2143 = vmatprep.mubr.bf16.mxu0 0
      %2144 = vmatmul.mubr.bf16.gmra.mrb[0].mxu0 %v1387
      %v2145 = vpop.f32.mrb[0].mxu0
      %v2146 = vadd.f32 0.0, %v2145
      %v2147 = vpop.f32.mrb[0].mxu0
      %v2148 = vpop.f32.mrb[0].mxu0
      %v2149 = vadd.f32 0.0, %v2148
      %v2150 = vpop.f32.mrb[0].mxu0
      %2151 = vmatprep.mubr.bf16.mxu0 0
      %2152 = vmatmul.mubr.bf16.gmra.mrb[0].mxu0 %v1390
      %v2153 = vpop.f32.mrb[0].mxu0
      %v2154 = vadd.f32 0.0, %v2153
      %v2155 = vpop.f32.mrb[0].mxu0
      %v2156 = vpop.f32.mrb[0].mxu0
      %v2157 = vadd.f32 0.0, %v2156
      %v2158 = vpop.f32.mrb[0].mxu0
      %2159 = vmatprep.mubr.bf16.mxu0 0
      %2160 = vmatmul.mubr.bf16.gmra.mrb[0].mxu0 %v1393
      %v2161 = vpop.f32.mrb[0].mxu0
      %v2162 = vadd.f32 0.0, %v2161
      %v2163 = vpop.f32.mrb[0].mxu0
      %v2164 = vpop.f32.mrb[0].mxu0
      %v2165 = vadd.f32 0.0, %v2164
      %v2166 = vpop.f32.mrb[0].mxu0
      %2167 = vmatprep.mubr.bf16.mxu0 0
      %2168 = vmatmul.mubr.bf16.gmra.mrb[0].mxu0 %v1396
      %v2169 = vpop.f32.mrb[0].mxu0
      %v2170 = vadd.f32 0.0, %v2169
      %v2171 = vpop.f32.mrb[0].mxu0
      %v2172 = vpop.f32.mrb[0].mxu0
      %v2173 = vadd.f32 0.0, %v2172
      %v2174 = vpop.f32.mrb[0].mxu0
      %2175 = vmatprep.mubr.bf16.mxu0 0
      %2176 = vmatmul.mubr.bf16.gmra.mrb[0].mxu0 %v2018
      %v2177 = vpop.f32.mrb[0].mxu0
      %v2178 = vadd.f32 0.0, %v2177
      %v2179 = vpop.f32.mrb[0].mxu0
      %v2180 = vpop.f32.mrb[0].mxu0
      %v2181 = vadd.f32 0.0, %v2180
      %v2182 = vpop.f32.mrb[0].mxu0
      %2183 = vdwg.mxu0
      %v2184 = vadd.f32 %v1975, %v2058
      %v2185 = vadd.f32 %v1976, %v2061
      %v2186 = vadd.f32 %v1977, %v2066
      %v2187 = vadd.f32 %v1978, %v2069
      %v2188 = vadd.f32 %v1979, %v2074
      %v2189 = vadd.f32 %v1980, %v2077
      %v2190 = vadd.f32 %v1981, %v2082
      %v2191 = vadd.f32 %v1982, %v2085
      %v2192 = vadd.f32 %v1983, %v2090
      %v2193 = vadd.f32 %v1984, %v2093
      %v2194 = vadd.f32 %v1985, %v2098
      %v2195 = vadd.f32 %v1986, %v2101
      %v2196 = vadd.f32 %v1987, %v2106
      %v2197 = vadd.f32 %v1988, %v2109
      %v2198 = vadd.f32 %v1989, %v2114
      %v2199 = vadd.f32 %v1990, %v2117
      %v2200 = vadd.f32 %v1991, %v2122
      %v2201 = vadd.f32 %v1992, %v2125
      %v2202 = vadd.f32 %v1993, %v2130
      %v2203 = vadd.f32 %v1994, %v2133
      %v2204 = vadd.f32 %v1995, %v2138
      %v2205 = vadd.f32 %v1996, %v2141
      %v2206 = vadd.f32 %v1997, %v2146
      %v2207 = vadd.f32 %v1998, %v2149
      %v2208 = vadd.f32 %v1999, %v2154
      %v2209 = vadd.f32 %v2000, %v2157
      %v2210 = vadd.f32 %v2001, %v2162
      %v2211 = vadd.f32 %v2002, %v2165
      %v2212 = vadd.f32 %v2003, %v2170
      %v2213 = vadd.f32 %v2004, %v2173
      %v2214 = vadd.f32 %v2005, %v2178
      %v2215 = vadd.f32 %v2006, %v2181
      %s2216 = scalar_lea.vmem %s2, 12
      %v2217 = vld [vmem:[%s2216] sm:$0x3]
      %v2219 = vsel %vm615, %v2217, 0
      %2221 = vmatprep.subr.bf16.mxu0 0
      %2222 = vmatpush1.bf16.msra.mxu0 %v2219
      %2223 = vmatprep.subr.bf16.mxu0 0
      %2224 = vmatpush1.bf16.msra.mxu0 0
      %2225 = vmatprep.subr.bf16.mxu0 0
      %2226 = vmatpush1.bf16.msra.mxu0 0
      %2227 = vmatprep.subr.bf16.mxu0 0
      %2228 = vmatpush1.bf16.msra.mxu0 0
      %2229 = vmatprep.subr.bf16.mxu0 0
      %2230 = vmatpush1.bf16.msra.mxu0 0
      %2231 = vmatprep.subr.bf16.mxu0 0
      %2232 = vmatpush1.bf16.msra.mxu0 0
      %2233 = vmatprep.subr.bf16.mxu0 0
      %2234 = vmatpush1.bf16.msra.mxu0 0
      %2235 = vmatprep.subr.bf16.mxu0 0
      %2236 = vmatpush1.bf16.msra.mxu0 0
      %2237 = vmatprep.subr.bf16.mxu0 0
      %2238 = vmatpush1.bf16.msra.mxu0 0
      %2239 = vmatprep.subr.bf16.mxu0 0
      %2240 = vmatpush1.bf16.msra.mxu0 0
      %2241 = vmatprep.subr.bf16.mxu0 0
      %2242 = vmatpush1.bf16.msra.mxu0 0
      %2243 = vmatprep.subr.bf16.mxu0 0
      %2244 = vmatpush1.bf16.msra.mxu0 0
      %2245 = vmatprep.subr.bf16.mxu0 0
      %2246 = vmatpush1.bf16.msra.mxu0 0
      %2247 = vmatprep.subr.bf16.mxu0 0
      %2248 = vmatpush1.bf16.msra.mxu0 0
      %2249 = vmatprep.subr.bf16.mxu0 0
      %2250 = vmatpush1.bf16.msra.mxu0 0
      %2251 = vmatprep.subr.bf16.mxu0 0
      %2252 = vmatpush1.bf16.msra.mxu0 0
      %2253 = vmatprep.mubr.bf16.mxu0 0
      %2254 = vmatmul.mubr.bf16.gmra.mrb[0].mxu0 %v574
      %v2255 = vpop.f32.mrb[0].mxu0
      %v2256 = vadd.f32 0.0, %v2255
      %v2257 = vpop.f32.mrb[0].mxu0
      %v2258 = vpop.f32.mrb[0].mxu0
      %v2259 = vadd.f32 0.0, %v2258
      %v2260 = vpop.f32.mrb[0].mxu0
      %2261 = vmatprep.mubr.bf16.mxu0 0
      %2262 = vmatmul.mubr.bf16.gmra.mrb[0].mxu0 %v577
      %v2263 = vpop.f32.mrb[0].mxu0
      %v2264 = vadd.f32 0.0, %v2263
      %v2265 = vpop.f32.mrb[0].mxu0
      %v2266 = vpop.f32.mrb[0].mxu0
      %v2267 = vadd.f32 0.0, %v2266
      %v2268 = vpop.f32.mrb[0].mxu0
      %2269 = vmatprep.mubr.bf16.mxu0 0
      %2270 = vmatmul.mubr.bf16.gmra.mrb[0].mxu0 %v580
      %v2271 = vpop.f32.mrb[0].mxu0
      %v2272 = vadd.f32 0.0, %v2271
      %v2273 = vpop.f32.mrb[0].mxu0
      %v2274 = vpop.f32.mrb[0].mxu0
      %v2275 = vadd.f32 0.0, %v2274
      %v2276 = vpop.f32.mrb[0].mxu0
      %2277 = vmatprep.mubr.bf16.mxu0 0
      %2278 = vmatmul.mubr.bf16.gmra.mrb[0].mxu0 %v583
      %v2279 = vpop.f32.mrb[0].mxu0
      %v2280 = vadd.f32 0.0, %v2279
      %v2281 = vpop.f32.mrb[0].mxu0
      %v2282 = vpop.f32.mrb[0].mxu0
      %v2283 = vadd.f32 0.0, %v2282
      %v2284 = vpop.f32.mrb[0].mxu0
      %2285 = vmatprep.mubr.bf16.mxu0 0
      %2286 = vmatmul.mubr.bf16.gmra.mrb[0].mxu0 %v586
      %v2287 = vpop.f32.mrb[0].mxu0
      %v2288 = vadd.f32 0.0, %v2287
      %v2289 = vpop.f32.mrb[0].mxu0
      %v2290 = vpop.f32.mrb[0].mxu0
      %v2291 = vadd.f32 0.0, %v2290
      %v2292 = vpop.f32.mrb[0].mxu0
      %2293 = vmatprep.mubr.bf16.mxu0 0
      %2294 = vmatmul.mubr.bf16.gmra.mrb[0].mxu0 %v589
      %v2295 = vpop.f32.mrb[0].mxu0
      %v2296 = vadd.f32 0.0, %v2295
      %v2297 = vpop.f32.mrb[0].mxu0
      %v2298 = vpop.f32.mrb[0].mxu0
      %v2299 = vadd.f32 0.0, %v2298
      %v2300 = vpop.f32.mrb[0].mxu0
      %2301 = vmatprep.mubr.bf16.mxu0 0
      %2302 = vmatmul.mubr.bf16.gmra.mrb[0].mxu0 %v592
      %v2303 = vpop.f32.mrb[0].mxu0
      %v2304 = vadd.f32 0.0, %v2303
      %v2305 = vpop.f32.mrb[0].mxu0
      %v2306 = vpop.f32.mrb[0].mxu0
      %v2307 = vadd.f32 0.0, %v2306
      %v2308 = vpop.f32.mrb[0].mxu0
      %2309 = vmatprep.mubr.bf16.mxu0 0
      %2310 = vmatmul.mubr.bf16.gmra.mrb[0].mxu0 %v595
      %v2311 = vpop.f32.mrb[0].mxu0
      %v2312 = vadd.f32 0.0, %v2311
      %v2313 = vpop.f32.mrb[0].mxu0
      %v2314 = vpop.f32.mrb[0].mxu0
      %v2315 = vadd.f32 0.0, %v2314
      %v2316 = vpop.f32.mrb[0].mxu0
      %2317 = vmatprep.mubr.bf16.mxu0 0
      %2318 = vmatmul.mubr.bf16.gmra.mrb[0].mxu0 %v598
      %v2319 = vpop.f32.mrb[0].mxu0
      %v2320 = vadd.f32 0.0, %v2319
      %v2321 = vpop.f32.mrb[0].mxu0
      %v2322 = vpop.f32.mrb[0].mxu0
      %v2323 = vadd.f32 0.0, %v2322
      %v2324 = vpop.f32.mrb[0].mxu0
      %2325 = vmatprep.mubr.bf16.mxu0 0
      %2326 = vmatmul.mubr.bf16.gmra.mrb[0].mxu0 %v601
      %v2327 = vpop.f32.mrb[0].mxu0
      %v2328 = vadd.f32 0.0, %v2327
      %v2329 = vpop.f32.mrb[0].mxu0
      %v2330 = vpop.f32.mrb[0].mxu0
      %v2331 = vadd.f32 0.0, %v2330
      %v2332 = vpop.f32.mrb[0].mxu0
      %2333 = vmatprep.mubr.bf16.mxu0 0
      %2334 = vmatmul.mubr.bf16.gmra.mrb[0].mxu0 %v604
      %v2335 = vpop.f32.mrb[0].mxu0
      %v2336 = vadd.f32 0.0, %v2335
      %v2337 = vpop.f32.mrb[0].mxu0
      %v2338 = vpop.f32.mrb[0].mxu0
      %v2339 = vadd.f32 0.0, %v2338
      %v2340 = vpop.f32.mrb[0].mxu0
      %2341 = vmatprep.mubr.bf16.mxu0 0
      %2342 = vmatmul.mubr.bf16.gmra.mrb[0].mxu0 %v607
      %v2343 = vpop.f32.mrb[0].mxu0
      %v2344 = vadd.f32 0.0, %v2343
      %v2345 = vpop.f32.mrb[0].mxu0
      %v2346 = vpop.f32.mrb[0].mxu0
      %v2347 = vadd.f32 0.0, %v2346
      %v2348 = vpop.f32.mrb[0].mxu0
      %2349 = vmatprep.mubr.bf16.mxu0 0
      %2350 = vmatmul.mubr.bf16.gmra.mrb[0].mxu0 %v610
      %v2351 = vpop.f32.mrb[0].mxu0
      %v2352 = vadd.f32 0.0, %v2351
      %v2353 = vpop.f32.mrb[0].mxu0
      %v2354 = vpop.f32.mrb[0].mxu0
      %v2355 = vadd.f32 0.0, %v2354
      %v2356 = vpop.f32.mrb[0].mxu0
      %2357 = vmatprep.mubr.bf16.mxu0 0
      %2358 = vmatmul.mubr.bf16.gmra.mrb[0].mxu0 %v613
      %v2359 = vpop.f32.mrb[0].mxu0
      %v2360 = vadd.f32 0.0, %v2359
      %v2361 = vpop.f32.mrb[0].mxu0
      %v2362 = vpop.f32.mrb[0].mxu0
      %v2363 = vadd.f32 0.0, %v2362
      %v2364 = vpop.f32.mrb[0].mxu0
      %2365 = vmatprep.mubr.bf16.mxu0 0
      %2366 = vmatmul.mubr.bf16.gmra.mrb[0].mxu0 %v1598
      %v2367 = vpop.f32.mrb[0].mxu0
      %v2368 = vadd.f32 0.0, %v2367
      %v2369 = vpop.f32.mrb[0].mxu0
      %v2370 = vpop.f32.mrb[0].mxu0
      %v2371 = vadd.f32 0.0, %v2370
      %v2372 = vpop.f32.mrb[0].mxu0
      %2373 = vmatprep.mubr.bf16.mxu0 0
      %2374 = vmatmul.mubr.bf16.gmra.mrb[0].mxu0 %v568
      %v2375 = vpop.f32.mrb[0].mxu0
      %v2376 = vadd.f32 0.0, %v2375
      %v2377 = vpop.f32.mrb[0].mxu0
      %v2378 = vpop.f32.mrb[0].mxu0
      %v2379 = vadd.f32 0.0, %v2378
      %v2380 = vpop.f32.mrb[0].mxu0
      %2381 = vdwg.mxu0
      %v2382 = vadd.f32 %v2184, %v2256
      %v2383 = vadd.f32 %v2185, %v2259
      %v2384 = vadd.f32 %v2186, %v2264
      %v2385 = vadd.f32 %v2187, %v2267
      %v2386 = vadd.f32 %v2188, %v2272
      %v2387 = vadd.f32 %v2189, %v2275
      %v2388 = vadd.f32 %v2190, %v2280
      %v2389 = vadd.f32 %v2191, %v2283
      %v2390 = vadd.f32 %v2192, %v2288
      %v2391 = vadd.f32 %v2193, %v2291
      %v2392 = vadd.f32 %v2194, %v2296
      %v2393 = vadd.f32 %v2195, %v2299
      %v2394 = vadd.f32 %v2196, %v2304
      %v2395 = vadd.f32 %v2197, %v2307
      %v2396 = vadd.f32 %v2198, %v2312
      %v2397 = vadd.f32 %v2199, %v2315
      %v2398 = vadd.f32 %v2200, %v2320
      %v2399 = vadd.f32 %v2201, %v2323
      %v2400 = vadd.f32 %v2202, %v2328
      %v2401 = vadd.f32 %v2203, %v2331
      %v2402 = vadd.f32 %v2204, %v2336
      %v2403 = vadd.f32 %v2205, %v2339
      %v2404 = vadd.f32 %v2206, %v2344
      %v2405 = vadd.f32 %v2207, %v2347
      %v2406 = vadd.f32 %v2208, %v2352
      %v2407 = vadd.f32 %v2209, %v2355
      %v2408 = vadd.f32 %v2210, %v2360
      %v2409 = vadd.f32 %v2211, %v2363
      %v2410 = vadd.f32 %v2212, %v2368
      %v2411 = vadd.f32 %v2213, %v2371
      %v2412 = vadd.f32 %v2214, %v2376
      %v2413 = vadd.f32 %v2215, %v2379
      %s2414 = scalar_lea.vmem %s2, 14
      %v2415 = vld [vmem:[%s2414] sm:$0x3]
      %v2417 = vsel %vm615, %v2415, 0
      %2419 = vmatprep.subr.bf16.mxu0 0
      %2420 = vmatpush1.bf16.msra.mxu0 %v2417
      %2421 = vmatprep.subr.bf16.mxu0 0
      %2422 = vmatpush1.bf16.msra.mxu0 0
      %2423 = vmatprep.subr.bf16.mxu0 0
      %2424 = vmatpush1.bf16.msra.mxu0 0
      %2425 = vmatprep.subr.bf16.mxu0 0
      %2426 = vmatpush1.bf16.msra.mxu0 0
      %2427 = vmatprep.subr.bf16.mxu0 0
      %2428 = vmatpush1.bf16.msra.mxu0 0
      %2429 = vmatprep.subr.bf16.mxu0 0
      %2430 = vmatpush1.bf16.msra.mxu0 0
      %2431 = vmatprep.subr.bf16.mxu0 0
      %2432 = vmatpush1.bf16.msra.mxu0 0
      %2433 = vmatprep.subr.bf16.mxu0 0
      %2434 = vmatpush1.bf16.msra.mxu0 0
      %2435 = vmatprep.subr.bf16.mxu0 0
      %2436 = vmatpush1.bf16.msra.mxu0 0
      %2437 = vmatprep.subr.bf16.mxu0 0
      %2438 = vmatpush1.bf16.msra.mxu0 0
      %2439 = vmatprep.subr.bf16.mxu0 0
      %2440 = vmatpush1.bf16.msra.mxu0 0
      %2441 = vmatprep.subr.bf16.mxu0 0
      %2442 = vmatpush1.bf16.msra.mxu0 0
      %2443 = vmatprep.subr.bf16.mxu0 0
      %2444 = vmatpush1.bf16.msra.mxu0 0
      %2445 = vmatprep.subr.bf16.mxu0 0
      %2446 = vmatpush1.bf16.msra.mxu0 0
      %2447 = vmatprep.subr.bf16.mxu0 0
      %2448 = vmatpush1.bf16.msra.mxu0 0
      %2449 = vmatprep.subr.bf16.mxu0 0
      %2450 = vmatpush1.bf16.msra.mxu0 0
      %2451 = vmatprep.mubr.bf16.mxu0 0
      %2452 = vmatmul.mubr.bf16.gmra.mrb[0].mxu0 %v982
      %v2453 = vpop.f32.mrb[0].mxu0
      %v2454 = vadd.f32 0.0, %v2453
      %v2455 = vpop.f32.mrb[0].mxu0
      %v2456 = vpop.f32.mrb[0].mxu0
      %v2457 = vadd.f32 0.0, %v2456
      %v2458 = vpop.f32.mrb[0].mxu0
      %2459 = vmatprep.mubr.bf16.mxu0 0
      %2460 = vmatmul.mubr.bf16.gmra.mrb[0].mxu0 %v985
      %v2461 = vpop.f32.mrb[0].mxu0
      %v2462 = vadd.f32 0.0, %v2461
      %v2463 = vpop.f32.mrb[0].mxu0
      %v2464 = vpop.f32.mrb[0].mxu0
      %v2465 = vadd.f32 0.0, %v2464
      %v2466 = vpop.f32.mrb[0].mxu0
      %2467 = vmatprep.mubr.bf16.mxu0 0
      %2468 = vmatmul.mubr.bf16.gmra.mrb[0].mxu0 %v988
      %v2469 = vpop.f32.mrb[0].mxu0
      %v2470 = vadd.f32 0.0, %v2469
      %v2471 = vpop.f32.mrb[0].mxu0
      %v2472 = vpop.f32.mrb[0].mxu0
      %v2473 = vadd.f32 0.0, %v2472
      %v2474 = vpop.f32.mrb[0].mxu0
      %2475 = vmatprep.mubr.bf16.mxu0 0
      %2476 = vmatmul.mubr.bf16.gmra.mrb[0].mxu0 %v991
      %v2477 = vpop.f32.mrb[0].mxu0
      %v2478 = vadd.f32 0.0, %v2477
      %v2479 = vpop.f32.mrb[0].mxu0
      %v2480 = vpop.f32.mrb[0].mxu0
      %v2481 = vadd.f32 0.0, %v2480
      %v2482 = vpop.f32.mrb[0].mxu0
      %2483 = vmatprep.mubr.bf16.mxu0 0
      %2484 = vmatmul.mubr.bf16.gmra.mrb[0].mxu0 %v994
      %v2485 = vpop.f32.mrb[0].mxu0
      %v2486 = vadd.f32 0.0, %v2485
      %v2487 = vpop.f32.mrb[0].mxu0
      %v2488 = vpop.f32.mrb[0].mxu0
      %v2489 = vadd.f32 0.0, %v2488
      %v2490 = vpop.f32.mrb[0].mxu0
      %2491 = vmatprep.mubr.bf16.mxu0 0
      %2492 = vmatmul.mubr.bf16.gmra.mrb[0].mxu0 %v997
      %v2493 = vpop.f32.mrb[0].mxu0
      %v2494 = vadd.f32 0.0, %v2493
      %v2495 = vpop.f32.mrb[0].mxu0
      %v2496 = vpop.f32.mrb[0].mxu0
      %v2497 = vadd.f32 0.0, %v2496
      %v2498 = vpop.f32.mrb[0].mxu0
      %2499 = vmatprep.mubr.bf16.mxu0 0
      %2500 = vmatmul.mubr.bf16.gmra.mrb[0].mxu0 %v1000
      %v2501 = vpop.f32.mrb[0].mxu0
      %v2502 = vadd.f32 0.0, %v2501
      %v2503 = vpop.f32.mrb[0].mxu0
      %v2504 = vpop.f32.mrb[0].mxu0
      %v2505 = vadd.f32 0.0, %v2504
      %v2506 = vpop.f32.mrb[0].mxu0
      %2507 = vmatprep.mubr.bf16.mxu0 0
      %2508 = vmatmul.mubr.bf16.gmra.mrb[0].mxu0 %v1003
      %v2509 = vpop.f32.mrb[0].mxu0
      %v2510 = vadd.f32 0.0, %v2509
      %v2511 = vpop.f32.mrb[0].mxu0
      %v2512 = vpop.f32.mrb[0].mxu0
      %v2513 = vadd.f32 0.0, %v2512
      %v2514 = vpop.f32.mrb[0].mxu0
      %2515 = vmatprep.mubr.bf16.mxu0 0
      %2516 = vmatmul.mubr.bf16.gmra.mrb[0].mxu0 %v1006
      %v2517 = vpop.f32.mrb[0].mxu0
      %v2518 = vadd.f32 0.0, %v2517
      %v2519 = vpop.f32.mrb[0].mxu0
      %v2520 = vpop.f32.mrb[0].mxu0
      %v2521 = vadd.f32 0.0, %v2520
      %v2522 = vpop.f32.mrb[0].mxu0
      %2523 = vmatprep.mubr.bf16.mxu0 0
      %2524 = vmatmul.mubr.bf16.gmra.mrb[0].mxu0 %v1009
      %v2525 = vpop.f32.mrb[0].mxu0
      %v2526 = vadd.f32 0.0, %v2525
      %v2527 = vpop.f32.mrb[0].mxu0
      %v2528 = vpop.f32.mrb[0].mxu0
      %v2529 = vadd.f32 0.0, %v2528
      %v2530 = vpop.f32.mrb[0].mxu0
      %2531 = vmatprep.mubr.bf16.mxu0 0
      %2532 = vmatmul.mubr.bf16.gmra.mrb[0].mxu0 %v1012
      %v2533 = vpop.f32.mrb[0].mxu0
      %v2534 = vadd.f32 0.0, %v2533
      %v2535 = vpop.f32.mrb[0].mxu0
      %v2536 = vpop.f32.mrb[0].mxu0
      %v2537 = vadd.f32 0.0, %v2536
      %v2538 = vpop.f32.mrb[0].mxu0
      %2539 = vmatprep.mubr.bf16.mxu0 0
      %2540 = vmatmul.mubr.bf16.gmra.mrb[0].mxu0 %v1015
      %v2541 = vpop.f32.mrb[0].mxu0
      %v2542 = vadd.f32 0.0, %v2541
      %v2543 = vpop.f32.mrb[0].mxu0
      %v2544 = vpop.f32.mrb[0].mxu0
      %v2545 = vadd.f32 0.0, %v2544
      %v2546 = vpop.f32.mrb[0].mxu0
      %2547 = vmatprep.mubr.bf16.mxu0 0
      %2548 = vmatmul.mubr.bf16.gmra.mrb[0].mxu0 %v1018
      %v2549 = vpop.f32.mrb[0].mxu0
      %v2550 = vadd.f32 0.0, %v2549
      %v2551 = vpop.f32.mrb[0].mxu0
      %v2552 = vpop.f32.mrb[0].mxu0
      %v2553 = vadd.f32 0.0, %v2552
      %v2554 = vpop.f32.mrb[0].mxu0
      %2555 = vmatprep.mubr.bf16.mxu0 0
      %2556 = vmatmul.mubr.bf16.gmra.mrb[0].mxu0 %v1021
      %v2557 = vpop.f32.mrb[0].mxu0
      %v2558 = vadd.f32 0.0, %v2557
      %v2559 = vpop.f32.mrb[0].mxu0
      %v2560 = vpop.f32.mrb[0].mxu0
      %v2561 = vadd.f32 0.0, %v2560
      %v2562 = vpop.f32.mrb[0].mxu0
      %2563 = vmatprep.mubr.bf16.mxu0 0
      %2564 = vmatmul.mubr.bf16.gmra.mrb[0].mxu0 %v1809
      %v2565 = vpop.f32.mrb[0].mxu0
      %v2566 = vadd.f32 0.0, %v2565
      %v2567 = vpop.f32.mrb[0].mxu0
      %v2568 = vpop.f32.mrb[0].mxu0
      %v2569 = vadd.f32 0.0, %v2568
      %v2570 = vpop.f32.mrb[0].mxu0
      %2571 = vmatprep.mubr.bf16.mxu0 0
      %2572 = vmatmul.mubr.bf16.gmra.mrb[0].mxu0 %v976
      %v2573 = vpop.f32.mrb[0].mxu0
      %v2574 = vadd.f32 0.0, %v2573
      %v2575 = vpop.f32.mrb[0].mxu0
      %v2576 = vpop.f32.mrb[0].mxu0
      %v2577 = vadd.f32 0.0, %v2576
      %v2578 = vpop.f32.mrb[0].mxu0
      %2579 = vdwg.mxu0
      %v2580 = vadd.f32 %v2382, %v2454
      %v2581 = vadd.f32 %v2383, %v2457
      %v2582 = vadd.f32 %v2384, %v2462
      %v2583 = vadd.f32 %v2385, %v2465
      %v2584 = vadd.f32 %v2386, %v2470
      %v2585 = vadd.f32 %v2387, %v2473
      %v2586 = vadd.f32 %v2388, %v2478
      %v2587 = vadd.f32 %v2389, %v2481
      %v2588 = vadd.f32 %v2390, %v2486
      %v2589 = vadd.f32 %v2391, %v2489
      %v2590 = vadd.f32 %v2392, %v2494
      %v2591 = vadd.f32 %v2393, %v2497
      %v2592 = vadd.f32 %v2394, %v2502
      %v2593 = vadd.f32 %v2395, %v2505
      %v2594 = vadd.f32 %v2396, %v2510
      %v2595 = vadd.f32 %v2397, %v2513
      %v2596 = vadd.f32 %v2398, %v2518
      %v2597 = vadd.f32 %v2399, %v2521
      %v2598 = vadd.f32 %v2400, %v2526
      %v2599 = vadd.f32 %v2401, %v2529
      %v2600 = vadd.f32 %v2402, %v2534
      %v2601 = vadd.f32 %v2403, %v2537
      %v2602 = vadd.f32 %v2404, %v2542
      %v2603 = vadd.f32 %v2405, %v2545
      %v2604 = vadd.f32 %v2406, %v2550
      %v2605 = vadd.f32 %v2407, %v2553
      %v2606 = vadd.f32 %v2408, %v2558
      %v2607 = vadd.f32 %v2409, %v2561
      %v2608 = vadd.f32 %v2410, %v2566
      %v2609 = vadd.f32 %v2411, %v2569
      %v2610 = vadd.f32 %v2412, %v2574
      %v2611 = vadd.f32 %v2413, %v2577
      %s2612 = scalar_lea.vmem %s2, 16
      %v2613 = vld [vmem:[%s2612] sm:$0x3]
      %v2615 = vsel %vm615, %v2613, 0
      %2617 = vmatprep.subr.bf16.mxu0 0
      %2618 = vmatpush1.bf16.msra.mxu0 %v2615
      %2619 = vmatprep.subr.bf16.mxu0 0
      %2620 = vmatpush1.bf16.msra.mxu0 0
      %2621 = vmatprep.subr.bf16.mxu0 0
      %2622 = vmatpush1.bf16.msra.mxu0 0
      %2623 = vmatprep.subr.bf16.mxu0 0
      %2624 = vmatpush1.bf16.msra.mxu0 0
      %2625 = vmatprep.subr.bf16.mxu0 0
      %2626 = vmatpush1.bf16.msra.mxu0 0
      %2627 = vmatprep.subr.bf16.mxu0 0
      %2628 = vmatpush1.bf16.msra.mxu0 0
      %2629 = vmatprep.subr.bf16.mxu0 0
      %2630 = vmatpush1.bf16.msra.mxu0 0
      %2631 = vmatprep.subr.bf16.mxu0 0
      %2632 = vmatpush1.bf16.msra.mxu0 0
      %2633 = vmatprep.subr.bf16.mxu0 0
      %2634 = vmatpush1.bf16.msra.mxu0 0
      %2635 = vmatprep.subr.bf16.mxu0 0
      %2636 = vmatpush1.bf16.msra.mxu0 0
      %2637 = vmatprep.subr.bf16.mxu0 0
      %2638 = vmatpush1.bf16.msra.mxu0 0
      %2639 = vmatprep.subr.bf16.mxu0 0
      %2640 = vmatpush1.bf16.msra.mxu0 0
      %2641 = vmatprep.subr.bf16.mxu0 0
      %2642 = vmatpush1.bf16.msra.mxu0 0
      %2643 = vmatprep.subr.bf16.mxu0 0
      %2644 = vmatpush1.bf16.msra.mxu0 0
      %2645 = vmatprep.subr.bf16.mxu0 0
      %2646 = vmatpush1.bf16.msra.mxu0 0
      %2647 = vmatprep.subr.bf16.mxu0 0
      %2648 = vmatpush1.bf16.msra.mxu0 0
      %2649 = vmatprep.mubr.bf16.mxu0 0
      %2650 = vmatmul.mubr.bf16.gmra.mrb[0].mxu0 %v1357
      %v2651 = vpop.f32.mrb[0].mxu0
      %v2652 = vadd.f32 0.0, %v2651
      %v2653 = vpop.f32.mrb[0].mxu0
      %v2654 = vpop.f32.mrb[0].mxu0
      %v2655 = vadd.f32 0.0, %v2654
      %v2656 = vpop.f32.mrb[0].mxu0
      %2657 = vmatprep.mubr.bf16.mxu0 0
      %2658 = vmatmul.mubr.bf16.gmra.mrb[0].mxu0 %v1360
      %v2659 = vpop.f32.mrb[0].mxu0
      %v2660 = vadd.f32 0.0, %v2659
      %v2661 = vpop.f32.mrb[0].mxu0
      %v2662 = vpop.f32.mrb[0].mxu0
      %v2663 = vadd.f32 0.0, %v2662
      %v2664 = vpop.f32.mrb[0].mxu0
      %2665 = vmatprep.mubr.bf16.mxu0 0
      %2666 = vmatmul.mubr.bf16.gmra.mrb[0].mxu0 %v1363
      %v2667 = vpop.f32.mrb[0].mxu0
      %v2668 = vadd.f32 0.0, %v2667
      %v2669 = vpop.f32.mrb[0].mxu0
      %v2670 = vpop.f32.mrb[0].mxu0
      %v2671 = vadd.f32 0.0, %v2670
      %v2672 = vpop.f32.mrb[0].mxu0
      %2673 = vmatprep.mubr.bf16.mxu0 0
      %2674 = vmatmul.mubr.bf16.gmra.mrb[0].mxu0 %v1366
      %v2675 = vpop.f32.mrb[0].mxu0
      %v2676 = vadd.f32 0.0, %v2675
      %v2677 = vpop.f32.mrb[0].mxu0
      %v2678 = vpop.f32.mrb[0].mxu0
      %v2679 = vadd.f32 0.0, %v2678
      %v2680 = vpop.f32.mrb[0].mxu0
      %2681 = vmatprep.mubr.bf16.mxu0 0
      %2682 = vmatmul.mubr.bf16.gmra.mrb[0].mxu0 %v1369
      %v2683 = vpop.f32.mrb[0].mxu0
      %v2684 = vadd.f32 0.0, %v2683
      %v2685 = vpop.f32.mrb[0].mxu0
      %v2686 = vpop.f32.mrb[0].mxu0
      %v2687 = vadd.f32 0.0, %v2686
      %v2688 = vpop.f32.mrb[0].mxu0
      %2689 = vmatprep.mubr.bf16.mxu0 0
      %2690 = vmatmul.mubr.bf16.gmra.mrb[0].mxu0 %v1372
      %v2691 = vpop.f32.mrb[0].mxu0
      %v2692 = vadd.f32 0.0, %v2691
      %v2693 = vpop.f32.mrb[0].mxu0
      %v2694 = vpop.f32.mrb[0].mxu0
      %v2695 = vadd.f32 0.0, %v2694
      %v2696 = vpop.f32.mrb[0].mxu0
      %2697 = vmatprep.mubr.bf16.mxu0 0
      %2698 = vmatmul.mubr.bf16.gmra.mrb[0].mxu0 %v1375
      %v2699 = vpop.f32.mrb[0].mxu0
      %v2700 = vadd.f32 0.0, %v2699
      %v2701 = vpop.f32.mrb[0].mxu0
      %v2702 = vpop.f32.mrb[0].mxu0
      %v2703 = vadd.f32 0.0, %v2702
      %v2704 = vpop.f32.mrb[0].mxu0
      %2705 = vmatprep.mubr.bf16.mxu0 0
      %2706 = vmatmul.mubr.bf16.gmra.mrb[0].mxu0 %v1378
      %v2707 = vpop.f32.mrb[0].mxu0
      %v2708 = vadd.f32 0.0, %v2707
      %v2709 = vpop.f32.mrb[0].mxu0
      %v2710 = vpop.f32.mrb[0].mxu0
      %v2711 = vadd.f32 0.0, %v2710
      %v2712 = vpop.f32.mrb[0].mxu0
      %2713 = vmatprep.mubr.bf16.mxu0 0
      %2714 = vmatmul.mubr.bf16.gmra.mrb[0].mxu0 %v1381
      %v2715 = vpop.f32.mrb[0].mxu0
      %v2716 = vadd.f32 0.0, %v2715
      %v2717 = vpop.f32.mrb[0].mxu0
      %v2718 = vpop.f32.mrb[0].mxu0
      %v2719 = vadd.f32 0.0, %v2718
      %v2720 = vpop.f32.mrb[0].mxu0
      %2721 = vmatprep.mubr.bf16.mxu0 0
      %2722 = vmatmul.mubr.bf16.gmra.mrb[0].mxu0 %v1384
      %v2723 = vpop.f32.mrb[0].mxu0
      %v2724 = vadd.f32 0.0, %v2723
      %v2725 = vpop.f32.mrb[0].mxu0
      %v2726 = vpop.f32.mrb[0].mxu0
      %v2727 = vadd.f32 0.0, %v2726
      %v2728 = vpop.f32.mrb[0].mxu0
      %2729 = vmatprep.mubr.bf16.mxu0 0
      %2730 = vmatmul.mubr.bf16.gmra.mrb[0].mxu0 %v1387
      %v2731 = vpop.f32.mrb[0].mxu0
      %v2732 = vadd.f32 0.0, %v2731
      %v2733 = vpop.f32.mrb[0].mxu0
      %v2734 = vpop.f32.mrb[0].mxu0
      %v2735 = vadd.f32 0.0, %v2734
      %v2736 = vpop.f32.mrb[0].mxu0
      %2737 = vmatprep.mubr.bf16.mxu0 0
      %2738 = vmatmul.mubr.bf16.gmra.mrb[0].mxu0 %v1390
      %v2739 = vpop.f32.mrb[0].mxu0
      %v2740 = vadd.f32 0.0, %v2739
      %v2741 = vpop.f32.mrb[0].mxu0
      %v2742 = vpop.f32.mrb[0].mxu0
      %v2743 = vadd.f32 0.0, %v2742
      %v2744 = vpop.f32.mrb[0].mxu0
      %2745 = vmatprep.mubr.bf16.mxu0 0
      %2746 = vmatmul.mubr.bf16.gmra.mrb[0].mxu0 %v1393
      %v2747 = vpop.f32.mrb[0].mxu0
      %v2748 = vadd.f32 0.0, %v2747
      %v2749 = vpop.f32.mrb[0].mxu0
      %v2750 = vpop.f32.mrb[0].mxu0
      %v2751 = vadd.f32 0.0, %v2750
      %v2752 = vpop.f32.mrb[0].mxu0
      %2753 = vmatprep.mubr.bf16.mxu0 0
      %2754 = vmatmul.mubr.bf16.gmra.mrb[0].mxu0 %v1396
      %v2755 = vpop.f32.mrb[0].mxu0
      %v2756 = vadd.f32 0.0, %v2755
      %v2757 = vpop.f32.mrb[0].mxu0
      %v2758 = vpop.f32.mrb[0].mxu0
      %v2759 = vadd.f32 0.0, %v2758
      %v2760 = vpop.f32.mrb[0].mxu0
      %2761 = vmatprep.mubr.bf16.mxu0 0
      %2762 = vmatmul.mubr.bf16.gmra.mrb[0].mxu0 %v2018
      %v2763 = vpop.f32.mrb[0].mxu0
      %v2764 = vadd.f32 0.0, %v2763
      %v2765 = vpop.f32.mrb[0].mxu0
      %v2766 = vpop.f32.mrb[0].mxu0
      %v2767 = vadd.f32 0.0, %v2766
      %v2768 = vpop.f32.mrb[0].mxu0
      %2769 = vmatprep.mubr.bf16.mxu0 0
      %2770 = vmatmul.mubr.bf16.gmra.mrb[0].mxu0 %v1351
      %v2771 = vpop.f32.mrb[0].mxu0
      %v2772 = vadd.f32 0.0, %v2771
      %v2773 = vpop.f32.mrb[0].mxu0
      %v2774 = vpop.f32.mrb[0].mxu0
      %v2775 = vadd.f32 0.0, %v2774
      %v2776 = vpop.f32.mrb[0].mxu0
      %2777 = vdwg.mxu0
      %v2778 = vadd.f32 %v2580, %v2652
      %v2779 = vadd.f32 %v2581, %v2655
      %v2780 = vadd.f32 %v2582, %v2660
      %v2781 = vadd.f32 %v2583, %v2663
      %v2782 = vadd.f32 %v2584, %v2668
      %v2783 = vadd.f32 %v2585, %v2671
      %v2784 = vadd.f32 %v2586, %v2676
      %v2785 = vadd.f32 %v2587, %v2679
      %v2786 = vadd.f32 %v2588, %v2684
      %v2787 = vadd.f32 %v2589, %v2687
      %v2788 = vadd.f32 %v2590, %v2692
      %v2789 = vadd.f32 %v2591, %v2695
      %v2790 = vadd.f32 %v2592, %v2700
      %v2791 = vadd.f32 %v2593, %v2703
      %v2792 = vadd.f32 %v2594, %v2708
      %v2793 = vadd.f32 %v2595, %v2711
      %v2794 = vadd.f32 %v2596, %v2716
      %v2795 = vadd.f32 %v2597, %v2719
      %v2796 = vadd.f32 %v2598, %v2724
      %v2797 = vadd.f32 %v2599, %v2727
      %v2798 = vadd.f32 %v2600, %v2732
      %v2799 = vadd.f32 %v2601, %v2735
      %v2800 = vadd.f32 %v2602, %v2740
      %v2801 = vadd.f32 %v2603, %v2743
      %v2802 = vadd.f32 %v2604, %v2748
      %v2803 = vadd.f32 %v2605, %v2751
      %v2804 = vadd.f32 %v2606, %v2756
      %v2805 = vadd.f32 %v2607, %v2759
      %v2806 = vadd.f32 %v2608, %v2764
      %v2807 = vadd.f32 %v2609, %v2767
      %v2808 = vadd.f32 %v2610, %v2772
      %v2809 = vadd.f32 %v2611, %v2775
      %v2810 = vld [vmem:[%s239] sm:$0xff]
      %v2811 = vld [vmem:[%s239 + $0x8] sm:$0xff]
      %v2812 = vld [vmem:[%s239 + $0x10] sm:$0xff]
      %v2813 = vld [vmem:[%s239 + $0x18] sm:$0xff]
      %v2814 = vld [vmem:[%s239 + $0x20] sm:$0xff]
      %v2815 = vld [vmem:[%s239 + $0x28] sm:$0xff]
      %v2816 = vld [vmem:[%s239 + $0x30] sm:$0xff]
      %v2817 = vld [vmem:[%s239 + $0x38] sm:$0xff]
      %v2818 = vld [vmem:[%s239 + $0x40] sm:$0xff]
      %v2819 = vld [vmem:[%s239 + $0x48] sm:$0xff]
      %v2820 = vld [vmem:[%s239 + $0x50] sm:$0xff]
      %v2821 = vld [vmem:[%s239 + $0x58] sm:$0xff]
      %v2822 = vld [vmem:[%s239 + $0x60] sm:$0xff]
      %v2823 = vld [vmem:[%s239 + $0x68] sm:$0xff]
      %v2824 = vld [vmem:[%s239 + $0x70] sm:$0xff]
      %v2825 = vld [vmem:[%s239 + $0x78] sm:$0xff]
      %v2826 = vld [vmem:[%s239 + $0x80] sm:$0xff]
      %v2827 = vld [vmem:[%s239 + $0x88] sm:$0xff]
      %v2828 = vld [vmem:[%s239 + $0x90] sm:$0xff]
      %v2829 = vld [vmem:[%s239 + $0x98] sm:$0xff]
      %v2830 = vld [vmem:[%s239 + $0xa0] sm:$0xff]
      %v2831 = vld [vmem:[%s239 + $0xa8] sm:$0xff]
      %v2832 = vld [vmem:[%s239 + $0xb0] sm:$0xff]
      %v2833 = vld [vmem:[%s239 + $0xb8] sm:$0xff]
      %v2834 = vld [vmem:[%s239 + $0xc0] sm:$0xff]
      %v2835 = vld [vmem:[%s239 + $0xc8] sm:$0xff]
      %v2836 = vld [vmem:[%s239 + $0xd0] sm:$0xff]
      %v2837 = vld [vmem:[%s239 + $0xd8] sm:$0xff]
      %v2838 = vld [vmem:[%s239 + $0xe0] sm:$0xff]
      %v2839 = vld [vmem:[%s239 + $0xe8] sm:$0xff]
      %v2840 = vld [vmem:[%s239 + $0xf0] sm:$0xff]
      %v2841 = vld [vmem:[%s239 + $0xf8] sm:$0xff]
      %vm2842 = vcmp.ge.f32.partialorder %v2810, 0.0
      %vm2843 = vcmp.ge.f32.partialorder %v2811, 0.0
      %vm2844 = vcmp.ge.f32.partialorder %v2812, 0.0
      %vm2845 = vcmp.ge.f32.partialorder %v2813, 0.0
      %vm2846 = vcmp.ge.f32.partialorder %v2814, 0.0
      %vm2847 = vcmp.ge.f32.partialorder %v2815, 0.0
      %vm2848 = vcmp.ge.f32.partialorder %v2816, 0.0
      %vm2849 = vcmp.ge.f32.partialorder %v2817, 0.0
      %vm2850 = vcmp.ge.f32.partialorder %v2818, 0.0
      %vm2851 = vcmp.ge.f32.partialorder %v2819, 0.0
      %vm2852 = vcmp.ge.f32.partialorder %v2820, 0.0
      %vm2853 = vcmp.ge.f32.partialorder %v2821, 0.0
      %vm2854 = vcmp.ge.f32.partialorder %v2822, 0.0
      %vm2855 = vcmp.ge.f32.partialorder %v2823, 0.0
      %vm2856 = vcmp.ge.f32.partialorder %v2824, 0.0
      %vm2857 = vcmp.ge.f32.partialorder %v2825, 0.0
      %vm2858 = vcmp.ge.f32.partialorder %v2826, 0.0
      %vm2859 = vcmp.ge.f32.partialorder %v2827, 0.0
      %vm2860 = vcmp.ge.f32.partialorder %v2828, 0.0
      %vm2861 = vcmp.ge.f32.partialorder %v2829, 0.0
      %vm2862 = vcmp.ge.f32.partialorder %v2830, 0.0
      %vm2863 = vcmp.ge.f32.partialorder %v2831, 0.0
      %vm2864 = vcmp.ge.f32.partialorder %v2832, 0.0
      %vm2865 = vcmp.ge.f32.partialorder %v2833, 0.0
      %vm2866 = vcmp.ge.f32.partialorder %v2834, 0.0
      %vm2867 = vcmp.ge.f32.partialorder %v2835, 0.0
      %vm2868 = vcmp.ge.f32.partialorder %v2836, 0.0
      %vm2869 = vcmp.ge.f32.partialorder %v2837, 0.0
      %vm2870 = vcmp.ge.f32.partialorder %v2838, 0.0
      %vm2871 = vcmp.ge.f32.partialorder %v2839, 0.0
      %vm2872 = vcmp.ge.f32.partialorder %v2840, 0.0
      %vm2873 = vcmp.ge.f32.partialorder %v2841, 0.0
      %v2874 = vmul.f32 %v2810, 0.2
      %v2875 = vmul.f32 %v2811, 0.2
      %v2876 = vmul.f32 %v2812, 0.2
      %v2877 = vmul.f32 %v2813, 0.2
      %v2878 = vmul.f32 %v2814, 0.2
      %v2879 = vmul.f32 %v2815, 0.2
      %v2880 = vmul.f32 %v2816, 0.2
      %v2881 = vmul.f32 %v2817, 0.2
      %v2882 = vmul.f32 %v2818, 0.2
      %v2883 = vmul.f32 %v2819, 0.2
      %v2884 = vmul.f32 %v2820, 0.2
      %v2885 = vmul.f32 %v2821, 0.2
      %v2886 = vmul.f32 %v2822, 0.2
      %v2887 = vmul.f32 %v2823, 0.2
      %v2888 = vmul.f32 %v2824, 0.2
      %v2889 = vmul.f32 %v2825, 0.2
      %v2890 = vmul.f32 %v2826, 0.2
      %v2891 = vmul.f32 %v2827, 0.2
      %v2892 = vmul.f32 %v2828, 0.2
      %v2893 = vmul.f32 %v2829, 0.2
      %v2894 = vmul.f32 %v2830, 0.2
      %v2895 = vmul.f32 %v2831, 0.2
      %v2896 = vmul.f32 %v2832, 0.2
      %v2897 = vmul.f32 %v2833, 0.2
      %v2898 = vmul.f32 %v2834, 0.2
      %v2899 = vmul.f32 %v2835, 0.2
      %v2900 = vmul.f32 %v2836, 0.2
      %v2901 = vmul.f32 %v2837, 0.2
      %v2902 = vmul.f32 %v2838, 0.2
      %v2903 = vmul.f32 %v2839, 0.2
      %v2904 = vmul.f32 %v2840, 0.2
      %v2905 = vmul.f32 %v2841, 0.2
      %v2906 = vsel %vm2842, %v2810, %v2874
      %v2907 = vsel %vm2843, %v2811, %v2875
      %v2908 = vsel %vm2844, %v2812, %v2876
      %v2909 = vsel %vm2845, %v2813, %v2877
      %v2910 = vsel %vm2846, %v2814, %v2878
      %v2911 = vsel %vm2847, %v2815, %v2879
      %v2912 = vsel %vm2848, %v2816, %v2880
      %v2913 = vsel %vm2849, %v2817, %v2881
      %v2914 = vsel %vm2850, %v2818, %v2882
      %v2915 = vsel %vm2851, %v2819, %v2883
      %v2916 = vsel %vm2852, %v2820, %v2884
      %v2917 = vsel %vm2853, %v2821, %v2885
      %v2918 = vsel %vm2854, %v2822, %v2886
      %v2919 = vsel %vm2855, %v2823, %v2887
      %v2920 = vsel %vm2856, %v2824, %v2888
      %v2921 = vsel %vm2857, %v2825, %v2889
      %v2922 = vsel %vm2858, %v2826, %v2890
      %v2923 = vsel %vm2859, %v2827, %v2891
      %v2924 = vsel %vm2860, %v2828, %v2892
      %v2925 = vsel %vm2861, %v2829, %v2893
      %v2926 = vsel %vm2862, %v2830, %v2894
      %v2927 = vsel %vm2863, %v2831, %v2895
      %v2928 = vsel %vm2864, %v2832, %v2896
      %v2929 = vsel %vm2865, %v2833, %v2897
      %v2930 = vsel %vm2866, %v2834, %v2898
      %v2931 = vsel %vm2867, %v2835, %v2899
      %v2932 = vsel %vm2868, %v2836, %v2900
      %v2933 = vsel %vm2869, %v2837, %v2901
      %v2934 = vsel %vm2870, %v2838, %v2902
      %v2935 = vsel %vm2871, %v2839, %v2903
      %v2936 = vsel %vm2872, %v2840, %v2904
      %v2937 = vsel %vm2873, %v2841, %v2905
      %v2970 = vrot.slane %v2906, 7
      %v2971 = vrot.slane %v2907, 7
      %v2972 = vsel %vm414, %v2970, %v2971
      %v2973 = vrot.slane %v2908, 7
      %v2974 = vrot.slane %v2909, 7
      %v2975 = vsel %vm414, %v2973, %v2974
      %v2976 = vrot.slane %v2910, 7
      %v2977 = vrot.slane %v2911, 7
      %v2978 = vsel %vm414, %v2976, %v2977
      %v2979 = vrot.slane %v2912, 7
      %v2980 = vrot.slane %v2913, 7
      %v2981 = vsel %vm414, %v2979, %v2980
      %v2982 = vrot.slane %v2914, 7
      %v2983 = vrot.slane %v2915, 7
      %v2984 = vsel %vm414, %v2982, %v2983
      %v2985 = vrot.slane %v2916, 7
      %v2986 = vrot.slane %v2917, 7
      %v2987 = vsel %vm414, %v2985, %v2986
      %v2988 = vrot.slane %v2918, 7
      %v2989 = vrot.slane %v2919, 7
      %v2990 = vsel %vm414, %v2988, %v2989
      %v2991 = vrot.slane %v2920, 7
      %v2992 = vrot.slane %v2921, 7
      %v2993 = vsel %vm414, %v2991, %v2992
      %v2994 = vrot.slane %v2922, 7
      %v2995 = vrot.slane %v2923, 7
      %v2996 = vsel %vm414, %v2994, %v2995
      %v2997 = vrot.slane %v2924, 7
      %v2998 = vrot.slane %v2925, 7
      %v2999 = vsel %vm414, %v2997, %v2998
      %v3000 = vrot.slane %v2926, 7
      %v3001 = vrot.slane %v2927, 7
      %v3002 = vsel %vm414, %v3000, %v3001
      %v3003 = vrot.slane %v2928, 7
      %v3004 = vrot.slane %v2929, 7
      %v3005 = vsel %vm414, %v3003, %v3004
      %v3006 = vrot.slane %v2930, 7
      %v3007 = vrot.slane %v2931, 7
      %v3008 = vsel %vm414, %v3006, %v3007
      %v3009 = vrot.slane %v2932, 7
      %v3010 = vrot.slane %v2933, 7
      %v3011 = vsel %vm414, %v3009, %v3010
      %v3012 = vrot.slane %v2934, 7
      %v3013 = vrot.slane %v2935, 7
      %v3014 = vsel %vm414, %v3012, %v3013
      %v3015 = vrot.slane %v2936, 7
      %v3016 = vrot.slane %v2937, 7
      %v3017 = vsel %vm414, %v3015, %v3016
      %v3066 = vsel %vm414, 0.0, %v2970
      %v3067 = vsel %vm414, 0.0, %v2973
      %v3068 = vsel %vm414, 0.0, %v2976
      %v3069 = vsel %vm414, 0.0, %v2979
      %v3070 = vsel %vm414, 0.0, %v2982
      %v3071 = vsel %vm414, 0.0, %v2985
      %v3072 = vsel %vm414, 0.0, %v2988
      %v3073 = vsel %vm414, 0.0, %v2991
      %v3074 = vsel %vm414, 0.0, %v2994
      %v3075 = vsel %vm414, 0.0, %v2997
      %v3076 = vsel %vm414, 0.0, %v3000
      %v3077 = vsel %vm414, 0.0, %v3003
      %v3078 = vsel %vm414, 0.0, %v3006
      %v3079 = vsel %vm414, 0.0, %v3009
      %v3080 = vsel %vm414, 0.0, %v3012
      %v3081 = vsel %vm414, 0.0, %v3015
      %v3082 = vsel %vm414, %v2971, 0.0
      %v3083 = vsel %vm414, %v2974, 0.0
      %v3084 = vsel %vm414, %v2977, 0.0
      %v3085 = vsel %vm414, %v2980, 0.0
      %v3086 = vsel %vm414, %v2983, 0.0
      %v3087 = vsel %vm414, %v2986, 0.0
      %v3088 = vsel %vm414, %v2989, 0.0
      %v3089 = vsel %vm414, %v2992, 0.0
      %v3090 = vsel %vm414, %v2995, 0.0
      %v3091 = vsel %vm414, %v2998, 0.0
      %v3092 = vsel %vm414, %v3001, 0.0
      %v3093 = vsel %vm414, %v3004, 0.0
      %v3094 = vsel %vm414, %v3007, 0.0
      %v3095 = vsel %vm414, %v3010, 0.0
      %v3096 = vsel %vm414, %v3013, 0.0
      %v3097 = vsel %vm414, %v3016, 0.0
      %v3098 = vpack.c.bf16 %v2972, %v3066
      %v3099 = vpack.c.bf16 %v2975, %v3067
      %v3100 = vpack.c.bf16 %v2978, %v3068
      %v3101 = vpack.c.bf16 %v2981, %v3069
      %v3102 = vpack.c.bf16 %v2984, %v3070
      %v3103 = vpack.c.bf16 %v2987, %v3071
      %v3104 = vpack.c.bf16 %v2990, %v3072
      %v3105 = vpack.c.bf16 %v2993, %v3073
      %v3106 = vpack.c.bf16 %v2996, %v3074
      %v3107 = vpack.c.bf16 %v2999, %v3075
      %v3108 = vpack.c.bf16 %v3002, %v3076
      %v3109 = vpack.c.bf16 %v3005, %v3077
      %v3110 = vpack.c.bf16 %v3008, %v3078
      %v3111 = vpack.c.bf16 %v3011, %v3079
      %v3112 = vpack.c.bf16 %v3014, %v3080
      %v3113 = vld [vmem:[%s3] sm:$0x3]
      %v3115 = vsel %vm566, %v3098, 0
      %v3118 = vsel %vm566, %v3099, 0
      %v3121 = vsel %vm566, %v3100, 0
      %v3124 = vsel %vm566, %v3101, 0
      %v3127 = vsel %vm566, %v3102, 0
      %v3130 = vsel %vm566, %v3103, 0
      %v3133 = vsel %vm566, %v3104, 0
      %v3136 = vsel %vm566, %v3105, 0
      %v3139 = vsel %vm566, %v3106, 0
      %v3142 = vsel %vm566, %v3107, 0
      %v3145 = vsel %vm566, %v3108, 0
      %v3148 = vsel %vm566, %v3109, 0
      %v3151 = vsel %vm566, %v3110, 0
      %v3154 = vsel %vm566, %v3111, 0
      %v3157 = vsel %vm566, %v3112, 0
      %v3160 = vsel %vm615, %v3113, 0
      %3162 = vmatprep.subr.bf16.mxu0 0
      %3163 = vmatpush1.bf16.msra.mxu0 %v3160
      %3164 = vmatprep.subr.bf16.mxu0 0
      %3165 = vmatpush1.bf16.msra.mxu0 0
      %3166 = vmatprep.subr.bf16.mxu0 0
      %3167 = vmatpush1.bf16.msra.mxu0 0
      %3168 = vmatprep.subr.bf16.mxu0 0
      %3169 = vmatpush1.bf16.msra.mxu0 0
      %3170 = vmatprep.subr.bf16.mxu0 0
      %3171 = vmatpush1.bf16.msra.mxu0 0
      %3172 = vmatprep.subr.bf16.mxu0 0
      %3173 = vmatpush1.bf16.msra.mxu0 0
      %3174 = vmatprep.subr.bf16.mxu0 0
      %3175 = vmatpush1.bf16.msra.mxu0 0
      %3176 = vmatprep.subr.bf16.mxu0 0
      %3177 = vmatpush1.bf16.msra.mxu0 0
      %3178 = vmatprep.subr.bf16.mxu0 0
      %3179 = vmatpush1.bf16.msra.mxu0 0
      %3180 = vmatprep.subr.bf16.mxu0 0
      %3181 = vmatpush1.bf16.msra.mxu0 0
      %3182 = vmatprep.subr.bf16.mxu0 0
      %3183 = vmatpush1.bf16.msra.mxu0 0
      %3184 = vmatprep.subr.bf16.mxu0 0
      %3185 = vmatpush1.bf16.msra.mxu0 0
      %3186 = vmatprep.subr.bf16.mxu0 0
      %3187 = vmatpush1.bf16.msra.mxu0 0
      %3188 = vmatprep.subr.bf16.mxu0 0
      %3189 = vmatpush1.bf16.msra.mxu0 0
      %3190 = vmatprep.subr.bf16.mxu0 0
      %3191 = vmatpush1.bf16.msra.mxu0 0
      %3192 = vmatprep.subr.bf16.mxu0 0
      %3193 = vmatpush1.bf16.msra.mxu0 0
      %3194 = vmatprep.mubr.bf16.mxu0 0
      %3195 = vmatmul.mubr.bf16.gmra.mrb[0].mxu0 %v568
      %v3196 = vpop.f32.mrb[0].mxu0
      %v3197 = vadd.f32 0.0, %v3196
      %v3198 = vpop.f32.mrb[0].mxu0
      %v3199 = vpop.f32.mrb[0].mxu0
      %v3200 = vadd.f32 0.0, %v3199
      %v3201 = vpop.f32.mrb[0].mxu0
      %3202 = vmatprep.mubr.bf16.mxu0 0
      %3203 = vmatmul.mubr.bf16.gmra.mrb[0].mxu0 %v3115
      %v3204 = vpop.f32.mrb[0].mxu0
      %v3205 = vadd.f32 0.0, %v3204
      %v3206 = vpop.f32.mrb[0].mxu0
      %v3207 = vpop.f32.mrb[0].mxu0
      %v3208 = vadd.f32 0.0, %v3207
      %v3209 = vpop.f32.mrb[0].mxu0
      %3210 = vmatprep.mubr.bf16.mxu0 0
      %3211 = vmatmul.mubr.bf16.gmra.mrb[0].mxu0 %v3118
      %v3212 = vpop.f32.mrb[0].mxu0
      %v3213 = vadd.f32 0.0, %v3212
      %v3214 = vpop.f32.mrb[0].mxu0
      %v3215 = vpop.f32.mrb[0].mxu0
      %v3216 = vadd.f32 0.0, %v3215
      %v3217 = vpop.f32.mrb[0].mxu0
      %3218 = vmatprep.mubr.bf16.mxu0 0
      %3219 = vmatmul.mubr.bf16.gmra.mrb[0].mxu0 %v3121
      %v3220 = vpop.f32.mrb[0].mxu0
      %v3221 = vadd.f32 0.0, %v3220
      %v3222 = vpop.f32.mrb[0].mxu0
      %v3223 = vpop.f32.mrb[0].mxu0
      %v3224 = vadd.f32 0.0, %v3223
      %v3225 = vpop.f32.mrb[0].mxu0
      %3226 = vmatprep.mubr.bf16.mxu0 0
      %3227 = vmatmul.mubr.bf16.gmra.mrb[0].mxu0 %v3124
      %v3228 = vpop.f32.mrb[0].mxu0
      %v3229 = vadd.f32 0.0, %v3228
      %v3230 = vpop.f32.mrb[0].mxu0
      %v3231 = vpop.f32.mrb[0].mxu0
      %v3232 = vadd.f32 0.0, %v3231
      %v3233 = vpop.f32.mrb[0].mxu0
      %3234 = vmatprep.mubr.bf16.mxu0 0
      %3235 = vmatmul.mubr.bf16.gmra.mrb[0].mxu0 %v3127
      %v3236 = vpop.f32.mrb[0].mxu0
      %v3237 = vadd.f32 0.0, %v3236
      %v3238 = vpop.f32.mrb[0].mxu0
      %v3239 = vpop.f32.mrb[0].mxu0
      %v3240 = vadd.f32 0.0, %v3239
      %v3241 = vpop.f32.mrb[0].mxu0
      %3242 = vmatprep.mubr.bf16.mxu0 0
      %3243 = vmatmul.mubr.bf16.gmra.mrb[0].mxu0 %v3130
      %v3244 = vpop.f32.mrb[0].mxu0
      %v3245 = vadd.f32 0.0, %v3244
      %v3246 = vpop.f32.mrb[0].mxu0
      %v3247 = vpop.f32.mrb[0].mxu0
      %v3248 = vadd.f32 0.0, %v3247
      %v3249 = vpop.f32.mrb[0].mxu0
      %3250 = vmatprep.mubr.bf16.mxu0 0
      %3251 = vmatmul.mubr.bf16.gmra.mrb[0].mxu0 %v3133
      %v3252 = vpop.f32.mrb[0].mxu0
      %v3253 = vadd.f32 0.0, %v3252
      %v3254 = vpop.f32.mrb[0].mxu0
      %v3255 = vpop.f32.mrb[0].mxu0
      %v3256 = vadd.f32 0.0, %v3255
      %v3257 = vpop.f32.mrb[0].mxu0
      %3258 = vmatprep.mubr.bf16.mxu0 0
      %3259 = vmatmul.mubr.bf16.gmra.mrb[0].mxu0 %v3136
      %v3260 = vpop.f32.mrb[0].mxu0
      %v3261 = vadd.f32 0.0, %v3260
      %v3262 = vpop.f32.mrb[0].mxu0
      %v3263 = vpop.f32.mrb[0].mxu0
      %v3264 = vadd.f32 0.0, %v3263
      %v3265 = vpop.f32.mrb[0].mxu0
      %3266 = vmatprep.mubr.bf16.mxu0 0
      %3267 = vmatmul.mubr.bf16.gmra.mrb[0].mxu0 %v3139
      %v3268 = vpop.f32.mrb[0].mxu0
      %v3269 = vadd.f32 0.0, %v3268
      %v3270 = vpop.f32.mrb[0].mxu0
      %v3271 = vpop.f32.mrb[0].mxu0
      %v3272 = vadd.f32 0.0, %v3271
      %v3273 = vpop.f32.mrb[0].mxu0
      %3274 = vmatprep.mubr.bf16.mxu0 0
      %3275 = vmatmul.mubr.bf16.gmra.mrb[0].mxu0 %v3142
      %v3276 = vpop.f32.mrb[0].mxu0
      %v3277 = vadd.f32 0.0, %v3276
      %v3278 = vpop.f32.mrb[0].mxu0
      %v3279 = vpop.f32.mrb[0].mxu0
      %v3280 = vadd.f32 0.0, %v3279
      %v3281 = vpop.f32.mrb[0].mxu0
      %3282 = vmatprep.mubr.bf16.mxu0 0
      %3283 = vmatmul.mubr.bf16.gmra.mrb[0].mxu0 %v3145
      %v3284 = vpop.f32.mrb[0].mxu0
      %v3285 = vadd.f32 0.0, %v3284
      %v3286 = vpop.f32.mrb[0].mxu0
      %v3287 = vpop.f32.mrb[0].mxu0
      %v3288 = vadd.f32 0.0, %v3287
      %v3289 = vpop.f32.mrb[0].mxu0
      %3290 = vmatprep.mubr.bf16.mxu0 0
      %3291 = vmatmul.mubr.bf16.gmra.mrb[0].mxu0 %v3148
      %v3292 = vpop.f32.mrb[0].mxu0
      %v3293 = vadd.f32 0.0, %v3292
      %v3294 = vpop.f32.mrb[0].mxu0
      %v3295 = vpop.f32.mrb[0].mxu0
      %v3296 = vadd.f32 0.0, %v3295
      %v3297 = vpop.f32.mrb[0].mxu0
      %3298 = vmatprep.mubr.bf16.mxu0 0
      %3299 = vmatmul.mubr.bf16.gmra.mrb[0].mxu0 %v3151
      %v3300 = vpop.f32.mrb[0].mxu0
      %v3301 = vadd.f32 0.0, %v3300
      %v3302 = vpop.f32.mrb[0].mxu0
      %v3303 = vpop.f32.mrb[0].mxu0
      %v3304 = vadd.f32 0.0, %v3303
      %v3305 = vpop.f32.mrb[0].mxu0
      %3306 = vmatprep.mubr.bf16.mxu0 0
      %3307 = vmatmul.mubr.bf16.gmra.mrb[0].mxu0 %v3154
      %v3308 = vpop.f32.mrb[0].mxu0
      %v3309 = vadd.f32 0.0, %v3308
      %v3310 = vpop.f32.mrb[0].mxu0
      %v3311 = vpop.f32.mrb[0].mxu0
      %v3312 = vadd.f32 0.0, %v3311
      %v3313 = vpop.f32.mrb[0].mxu0
      %3314 = vmatprep.mubr.bf16.mxu0 0
      %3315 = vmatmul.mubr.bf16.gmra.mrb[0].mxu0 %v3157
      %v3316 = vpop.f32.mrb[0].mxu0
      %v3317 = vadd.f32 0.0, %v3316
      %v3318 = vpop.f32.mrb[0].mxu0
      %v3319 = vpop.f32.mrb[0].mxu0
      %v3320 = vadd.f32 0.0, %v3319
      %v3321 = vpop.f32.mrb[0].mxu0
      %3322 = vdwg.mxu0
      %v3323 = vadd.f32 %v2778, %v3197
      %v3324 = vadd.f32 %v2779, %v3200
      %v3325 = vadd.f32 %v2780, %v3205
      %v3326 = vadd.f32 %v2781, %v3208
      %v3327 = vadd.f32 %v2782, %v3213
      %v3328 = vadd.f32 %v2783, %v3216
      %v3329 = vadd.f32 %v2784, %v3221
      %v3330 = vadd.f32 %v2785, %v3224
      %v3331 = vadd.f32 %v2786, %v3229
      %v3332 = vadd.f32 %v2787, %v3232
      %v3333 = vadd.f32 %v2788, %v3237
      %v3334 = vadd.f32 %v2789, %v3240
      %v3335 = vadd.f32 %v2790, %v3245
      %v3336 = vadd.f32 %v2791, %v3248
      %v3337 = vadd.f32 %v2792, %v3253
      %v3338 = vadd.f32 %v2793, %v3256
      %v3339 = vadd.f32 %v2794, %v3261
      %v3340 = vadd.f32 %v2795, %v3264
      %v3341 = vadd.f32 %v2796, %v3269
      %v3342 = vadd.f32 %v2797, %v3272
      %v3343 = vadd.f32 %v2798, %v3277
      %v3344 = vadd.f32 %v2799, %v3280
      %v3345 = vadd.f32 %v2800, %v3285
      %v3346 = vadd.f32 %v2801, %v3288
      %v3347 = vadd.f32 %v2802, %v3293
      %v3348 = vadd.f32 %v2803, %v3296
      %v3349 = vadd.f32 %v2804, %v3301
      %v3350 = vadd.f32 %v2805, %v3304
      %v3351 = vadd.f32 %v2806, %v3309
      %v3352 = vadd.f32 %v2807, %v3312
      %v3353 = vadd.f32 %v2808, %v3317
      %v3354 = vadd.f32 %v2809, %v3320
      %v3385 = vrot.slane %v3066, 1
      %v3386 = vrot.slane %v2972, 1
      %v3387 = vsel %vm844, %v3385, %v3386
      %v3388 = vrot.slane %v3082, 1
      %v3389 = vsel %vm844, %v3386, %v3388
      %v3390 = vrot.slane %v3067, 1
      %v3391 = vrot.slane %v2975, 1
      %v3392 = vsel %vm844, %v3390, %v3391
      %v3393 = vrot.slane %v3083, 1
      %v3394 = vsel %vm844, %v3391, %v3393
      %v3395 = vrot.slane %v3068, 1
      %v3396 = vrot.slane %v2978, 1
      %v3397 = vsel %vm844, %v3395, %v3396
      %v3398 = vrot.slane %v3084, 1
      %v3399 = vsel %vm844, %v3396, %v3398
      %v3400 = vrot.slane %v3069, 1
      %v3401 = vrot.slane %v2981, 1
      %v3402 = vsel %vm844, %v3400, %v3401
      %v3403 = vrot.slane %v3085, 1
      %v3404 = vsel %vm844, %v3401, %v3403
      %v3405 = vrot.slane %v3070, 1
      %v3406 = vrot.slane %v2984, 1
      %v3407 = vsel %vm844, %v3405, %v3406
      %v3408 = vrot.slane %v3086, 1
      %v3409 = vsel %vm844, %v3406, %v3408
      %v3410 = vrot.slane %v3071, 1
      %v3411 = vrot.slane %v2987, 1
      %v3412 = vsel %vm844, %v3410, %v3411
      %v3413 = vrot.slane %v3087, 1
      %v3414 = vsel %vm844, %v3411, %v3413
      %v3415 = vrot.slane %v3072, 1
      %v3416 = vrot.slane %v2990, 1
      %v3417 = vsel %vm844, %v3415, %v3416
      %v3418 = vrot.slane %v3088, 1
      %v3419 = vsel %vm844, %v3416, %v3418
      %v3420 = vrot.slane %v3073, 1
      %v3421 = vrot.slane %v2993, 1
      %v3422 = vsel %vm844, %v3420, %v3421
      %v3423 = vrot.slane %v3089, 1
      %v3424 = vsel %vm844, %v3421, %v3423
      %v3425 = vrot.slane %v3074, 1
      %v3426 = vrot.slane %v2996, 1
      %v3427 = vsel %vm844, %v3425, %v3426
      %v3428 = vrot.slane %v3090, 1
      %v3429 = vsel %vm844, %v3426, %v3428
      %v3430 = vrot.slane %v3075, 1
      %v3431 = vrot.slane %v2999, 1
      %v3432 = vsel %vm844, %v3430, %v3431
      %v3433 = vrot.slane %v3091, 1
      %v3434 = vsel %vm844, %v3431, %v3433
      %v3435 = vrot.slane %v3076, 1
      %v3436 = vrot.slane %v3002, 1
      %v3437 = vsel %vm844, %v3435, %v3436
      %v3438 = vrot.slane %v3092, 1
      %v3439 = vsel %vm844, %v3436, %v3438
      %v3440 = vrot.slane %v3077, 1
      %v3441 = vrot.slane %v3005, 1
      %v3442 = vsel %vm844, %v3440, %v3441
      %v3443 = vrot.slane %v3093, 1
      %v3444 = vsel %vm844, %v3441, %v3443
      %v3445 = vrot.slane %v3078, 1
      %v3446 = vrot.slane %v3008, 1
      %v3447 = vsel %vm844, %v3445, %v3446
      %v3448 = vrot.slane %v3094, 1
      %v3449 = vsel %vm844, %v3446, %v3448
      %v3450 = vrot.slane %v3079, 1
      %v3451 = vrot.slane %v3011, 1
      %v3452 = vsel %vm844, %v3450, %v3451
      %v3453 = vrot.slane %v3095, 1
      %v3454 = vsel %vm844, %v3451, %v3453
      %v3455 = vrot.slane %v3080, 1
      %v3456 = vrot.slane %v3014, 1
      %v3457 = vsel %vm844, %v3455, %v3456
      %v3458 = vrot.slane %v3096, 1
      %v3459 = vsel %vm844, %v3456, %v3458
      %v3490 = vpack.c.bf16 %v3389, %v3387
      %v3491 = vpack.c.bf16 %v3394, %v3392
      %v3492 = vpack.c.bf16 %v3399, %v3397
      %v3493 = vpack.c.bf16 %v3404, %v3402
      %v3494 = vpack.c.bf16 %v3409, %v3407
      %v3495 = vpack.c.bf16 %v3414, %v3412
      %v3496 = vpack.c.bf16 %v3419, %v3417
      %v3497 = vpack.c.bf16 %v3424, %v3422
      %v3498 = vpack.c.bf16 %v3429, %v3427
      %v3499 = vpack.c.bf16 %v3434, %v3432
      %v3500 = vpack.c.bf16 %v3439, %v3437
      %v3501 = vpack.c.bf16 %v3444, %v3442
      %v3502 = vpack.c.bf16 %v3449, %v3447
      %v3503 = vpack.c.bf16 %v3454, %v3452
      %v3504 = vpack.c.bf16 %v3459, %v3457
      %s3505 = scalar_lea.vmem %s3, 2
      %v3506 = vld [vmem:[%s3505] sm:$0x3]
      %v3508 = vsel %vm566, %v3490, 0
      %v3511 = vsel %vm566, %v3491, 0
      %v3514 = vsel %vm566, %v3492, 0
      %v3517 = vsel %vm566, %v3493, 0
      %v3520 = vsel %vm566, %v3494, 0
      %v3523 = vsel %vm566, %v3495, 0
      %v3526 = vsel %vm566, %v3496, 0
      %v3529 = vsel %vm566, %v3497, 0
      %v3532 = vsel %vm566, %v3498, 0
      %v3535 = vsel %vm566, %v3499, 0
      %v3538 = vsel %vm566, %v3500, 0
      %v3541 = vsel %vm566, %v3501, 0
      %v3544 = vsel %vm566, %v3502, 0
      %v3547 = vsel %vm566, %v3503, 0
      %v3550 = vsel %vm566, %v3504, 0
      %v3553 = vsel %vm615, %v3506, 0
      %3555 = vmatprep.subr.bf16.mxu0 0
      %3556 = vmatpush1.bf16.msra.mxu0 %v3553
      %3557 = vmatprep.subr.bf16.mxu0 0
      %3558 = vmatpush1.bf16.msra.mxu0 0
      %3559 = vmatprep.subr.bf16.mxu0 0
      %3560 = vmatpush1.bf16.msra.mxu0 0
      %3561 = vmatprep.subr.bf16.mxu0 0
      %3562 = vmatpush1.bf16.msra.mxu0 0
      %3563 = vmatprep.subr.bf16.mxu0 0
      %3564 = vmatpush1.bf16.msra.mxu0 0
      %3565 = vmatprep.subr.bf16.mxu0 0
      %3566 = vmatpush1.bf16.msra.mxu0 0
      %3567 = vmatprep.subr.bf16.mxu0 0
      %3568 = vmatpush1.bf16.msra.mxu0 0
      %3569 = vmatprep.subr.bf16.mxu0 0
      %3570 = vmatpush1.bf16.msra.mxu0 0
      %3571 = vmatprep.subr.bf16.mxu0 0
      %3572 = vmatpush1.bf16.msra.mxu0 0
      %3573 = vmatprep.subr.bf16.mxu0 0
      %3574 = vmatpush1.bf16.msra.mxu0 0
      %3575 = vmatprep.subr.bf16.mxu0 0
      %3576 = vmatpush1.bf16.msra.mxu0 0
      %3577 = vmatprep.subr.bf16.mxu0 0
      %3578 = vmatpush1.bf16.msra.mxu0 0
      %3579 = vmatprep.subr.bf16.mxu0 0
      %3580 = vmatpush1.bf16.msra.mxu0 0
      %3581 = vmatprep.subr.bf16.mxu0 0
      %3582 = vmatpush1.bf16.msra.mxu0 0
      %3583 = vmatprep.subr.bf16.mxu0 0
      %3584 = vmatpush1.bf16.msra.mxu0 0
      %3585 = vmatprep.subr.bf16.mxu0 0
      %3586 = vmatpush1.bf16.msra.mxu0 0
      %3587 = vmatprep.mubr.bf16.mxu0 0
      %3588 = vmatmul.mubr.bf16.gmra.mrb[0].mxu0 %v976
      %v3589 = vpop.f32.mrb[0].mxu0
      %v3590 = vadd.f32 0.0, %v3589
      %v3591 = vpop.f32.mrb[0].mxu0
      %v3592 = vpop.f32.mrb[0].mxu0
      %v3593 = vadd.f32 0.0, %v3592
      %v3594 = vpop.f32.mrb[0].mxu0
      %3595 = vmatprep.mubr.bf16.mxu0 0
      %3596 = vmatmul.mubr.bf16.gmra.mrb[0].mxu0 %v3508
      %v3597 = vpop.f32.mrb[0].mxu0
      %v3598 = vadd.f32 0.0, %v3597
      %v3599 = vpop.f32.mrb[0].mxu0
      %v3600 = vpop.f32.mrb[0].mxu0
      %v3601 = vadd.f32 0.0, %v3600
      %v3602 = vpop.f32.mrb[0].mxu0
      %3603 = vmatprep.mubr.bf16.mxu0 0
      %3604 = vmatmul.mubr.bf16.gmra.mrb[0].mxu0 %v3511
      %v3605 = vpop.f32.mrb[0].mxu0
      %v3606 = vadd.f32 0.0, %v3605
      %v3607 = vpop.f32.mrb[0].mxu0
      %v3608 = vpop.f32.mrb[0].mxu0
      %v3609 = vadd.f32 0.0, %v3608
      %v3610 = vpop.f32.mrb[0].mxu0
      %3611 = vmatprep.mubr.bf16.mxu0 0
      %3612 = vmatmul.mubr.bf16.gmra.mrb[0].mxu0 %v3514
      %v3613 = vpop.f32.mrb[0].mxu0
      %v3614 = vadd.f32 0.0, %v3613
      %v3615 = vpop.f32.mrb[0].mxu0
      %v3616 = vpop.f32.mrb[0].mxu0
      %v3617 = vadd.f32 0.0, %v3616
      %v3618 = vpop.f32.mrb[0].mxu0
      %3619 = vmatprep.mubr.bf16.mxu0 0
      %3620 = vmatmul.mubr.bf16.gmra.mrb[0].mxu0 %v3517
      %v3621 = vpop.f32.mrb[0].mxu0
      %v3622 = vadd.f32 0.0, %v3621
      %v3623 = vpop.f32.mrb[0].mxu0
      %v3624 = vpop.f32.mrb[0].mxu0
      %v3625 = vadd.f32 0.0, %v3624
      %v3626 = vpop.f32.mrb[0].mxu0
      %3627 = vmatprep.mubr.bf16.mxu0 0
      %3628 = vmatmul.mubr.bf16.gmra.mrb[0].mxu0 %v3520
      %v3629 = vpop.f32.mrb[0].mxu0
      %v3630 = vadd.f32 0.0, %v3629
      %v3631 = vpop.f32.mrb[0].mxu0
      %v3632 = vpop.f32.mrb[0].mxu0
      %v3633 = vadd.f32 0.0, %v3632
      %v3634 = vpop.f32.mrb[0].mxu0
      %3635 = vmatprep.mubr.bf16.mxu0 0
      %3636 = vmatmul.mubr.bf16.gmra.mrb[0].mxu0 %v3523
      %v3637 = vpop.f32.mrb[0].mxu0
      %v3638 = vadd.f32 0.0, %v3637
      %v3639 = vpop.f32.mrb[0].mxu0
      %v3640 = vpop.f32.mrb[0].mxu0
      %v3641 = vadd.f32 0.0, %v3640
      %v3642 = vpop.f32.mrb[0].mxu0
      %3643 = vmatprep.mubr.bf16.mxu0 0
      %3644 = vmatmul.mubr.bf16.gmra.mrb[0].mxu0 %v3526
      %v3645 = vpop.f32.mrb[0].mxu0
      %v3646 = vadd.f32 0.0, %v3645
      %v3647 = vpop.f32.mrb[0].mxu0
      %v3648 = vpop.f32.mrb[0].mxu0
      %v3649 = vadd.f32 0.0, %v3648
      %v3650 = vpop.f32.mrb[0].mxu0
      %3651 = vmatprep.mubr.bf16.mxu0 0
      %3652 = vmatmul.mubr.bf16.gmra.mrb[0].mxu0 %v3529
      %v3653 = vpop.f32.mrb[0].mxu0
      %v3654 = vadd.f32 0.0, %v3653
      %v3655 = vpop.f32.mrb[0].mxu0
      %v3656 = vpop.f32.mrb[0].mxu0
      %v3657 = vadd.f32 0.0, %v3656
      %v3658 = vpop.f32.mrb[0].mxu0
      %3659 = vmatprep.mubr.bf16.mxu0 0
      %3660 = vmatmul.mubr.bf16.gmra.mrb[0].mxu0 %v3532
      %v3661 = vpop.f32.mrb[0].mxu0
      %v3662 = vadd.f32 0.0, %v3661
      %v3663 = vpop.f32.mrb[0].mxu0
      %v3664 = vpop.f32.mrb[0].mxu0
      %v3665 = vadd.f32 0.0, %v3664
      %v3666 = vpop.f32.mrb[0].mxu0
      %3667 = vmatprep.mubr.bf16.mxu0 0
      %3668 = vmatmul.mubr.bf16.gmra.mrb[0].mxu0 %v3535
      %v3669 = vpop.f32.mrb[0].mxu0
      %v3670 = vadd.f32 0.0, %v3669
      %v3671 = vpop.f32.mrb[0].mxu0
      %v3672 = vpop.f32.mrb[0].mxu0
      %v3673 = vadd.f32 0.0, %v3672
      %v3674 = vpop.f32.mrb[0].mxu0
      %3675 = vmatprep.mubr.bf16.mxu0 0
      %3676 = vmatmul.mubr.bf16.gmra.mrb[0].mxu0 %v3538
      %v3677 = vpop.f32.mrb[0].mxu0
      %v3678 = vadd.f32 0.0, %v3677
      %v3679 = vpop.f32.mrb[0].mxu0
      %v3680 = vpop.f32.mrb[0].mxu0
      %v3681 = vadd.f32 0.0, %v3680
      %v3682 = vpop.f32.mrb[0].mxu0
      %3683 = vmatprep.mubr.bf16.mxu0 0
      %3684 = vmatmul.mubr.bf16.gmra.mrb[0].mxu0 %v3541
      %v3685 = vpop.f32.mrb[0].mxu0
      %v3686 = vadd.f32 0.0, %v3685
      %v3687 = vpop.f32.mrb[0].mxu0
      %v3688 = vpop.f32.mrb[0].mxu0
      %v3689 = vadd.f32 0.0, %v3688
      %v3690 = vpop.f32.mrb[0].mxu0
      %3691 = vmatprep.mubr.bf16.mxu0 0
      %3692 = vmatmul.mubr.bf16.gmra.mrb[0].mxu0 %v3544
      %v3693 = vpop.f32.mrb[0].mxu0
      %v3694 = vadd.f32 0.0, %v3693
      %v3695 = vpop.f32.mrb[0].mxu0
      %v3696 = vpop.f32.mrb[0].mxu0
      %v3697 = vadd.f32 0.0, %v3696
      %v3698 = vpop.f32.mrb[0].mxu0
      %3699 = vmatprep.mubr.bf16.mxu0 0
      %3700 = vmatmul.mubr.bf16.gmra.mrb[0].mxu0 %v3547
      %v3701 = vpop.f32.mrb[0].mxu0
      %v3702 = vadd.f32 0.0, %v3701
      %v3703 = vpop.f32.mrb[0].mxu0
      %v3704 = vpop.f32.mrb[0].mxu0
      %v3705 = vadd.f32 0.0, %v3704
      %v3706 = vpop.f32.mrb[0].mxu0
      %3707 = vmatprep.mubr.bf16.mxu0 0
      %3708 = vmatmul.mubr.bf16.gmra.mrb[0].mxu0 %v3550
      %v3709 = vpop.f32.mrb[0].mxu0
      %v3710 = vadd.f32 0.0, %v3709
      %v3711 = vpop.f32.mrb[0].mxu0
      %v3712 = vpop.f32.mrb[0].mxu0
      %v3713 = vadd.f32 0.0, %v3712
      %v3714 = vpop.f32.mrb[0].mxu0
      %3715 = vdwg.mxu0
      %v3716 = vadd.f32 %v3323, %v3590
      %v3717 = vadd.f32 %v3324, %v3593
      %v3718 = vadd.f32 %v3325, %v3598
      %v3719 = vadd.f32 %v3326, %v3601
      %v3720 = vadd.f32 %v3327, %v3606
      %v3721 = vadd.f32 %v3328, %v3609
      %v3722 = vadd.f32 %v3329, %v3614
      %v3723 = vadd.f32 %v3330, %v3617
      %v3724 = vadd.f32 %v3331, %v3622
      %v3725 = vadd.f32 %v3332, %v3625
      %v3726 = vadd.f32 %v3333, %v3630
      %v3727 = vadd.f32 %v3334, %v3633
      %v3728 = vadd.f32 %v3335, %v3638
      %v3729 = vadd.f32 %v3336, %v3641
      %v3730 = vadd.f32 %v3337, %v3646
      %v3731 = vadd.f32 %v3338, %v3649
      %v3732 = vadd.f32 %v3339, %v3654
      %v3733 = vadd.f32 %v3340, %v3657
      %v3734 = vadd.f32 %v3341, %v3662
      %v3735 = vadd.f32 %v3342, %v3665
      %v3736 = vadd.f32 %v3343, %v3670
      %v3737 = vadd.f32 %v3344, %v3673
      %v3738 = vadd.f32 %v3345, %v3678
      %v3739 = vadd.f32 %v3346, %v3681
      %v3740 = vadd.f32 %v3347, %v3686
      %v3741 = vadd.f32 %v3348, %v3689
      %v3742 = vadd.f32 %v3349, %v3694
      %v3743 = vadd.f32 %v3350, %v3697
      %v3744 = vadd.f32 %v3351, %v3702
      %v3745 = vadd.f32 %v3352, %v3705
      %v3746 = vadd.f32 %v3353, %v3710
      %v3747 = vadd.f32 %v3354, %v3713
      %v3748 = vrot.slane %v3066, 2
      %v3749 = vrot.slane %v2972, 2
      %v3750 = vsel %vm1219, %v3748, %v3749
      %v3751 = vrot.slane %v3082, 2
      %v3752 = vsel %vm1219, %v3749, %v3751
      %v3753 = vrot.slane %v3067, 2
      %v3754 = vrot.slane %v2975, 2
      %v3755 = vsel %vm1219, %v3753, %v3754
      %v3756 = vrot.slane %v3083, 2
      %v3757 = vsel %vm1219, %v3754, %v3756
      %v3758 = vrot.slane %v3068, 2
      %v3759 = vrot.slane %v2978, 2
      %v3760 = vsel %vm1219, %v3758, %v3759
      %v3761 = vrot.slane %v3084, 2
      %v3762 = vsel %vm1219, %v3759, %v3761
      %v3763 = vrot.slane %v3069, 2
      %v3764 = vrot.slane %v2981, 2
      %v3765 = vsel %vm1219, %v3763, %v3764
      %v3766 = vrot.slane %v3085, 2
      %v3767 = vsel %vm1219, %v3764, %v3766
      %v3768 = vrot.slane %v3070, 2
      %v3769 = vrot.slane %v2984, 2
      %v3770 = vsel %vm1219, %v3768, %v3769
      %v3771 = vrot.slane %v3086, 2
      %v3772 = vsel %vm1219, %v3769, %v3771
      %v3773 = vrot.slane %v3071, 2
      %v3774 = vrot.slane %v2987, 2
      %v3775 = vsel %vm1219, %v3773, %v3774
      %v3776 = vrot.slane %v3087, 2
      %v3777 = vsel %vm1219, %v3774, %v3776
      %v3778 = vrot.slane %v3072, 2
      %v3779 = vrot.slane %v2990, 2
      %v3780 = vsel %vm1219, %v3778, %v3779
      %v3781 = vrot.slane %v3088, 2
      %v3782 = vsel %vm1219, %v3779, %v3781
      %v3783 = vrot.slane %v3073, 2
      %v3784 = vrot.slane %v2993, 2
      %v3785 = vsel %vm1219, %v3783, %v3784
      %v3786 = vrot.slane %v3089, 2
      %v3787 = vsel %vm1219, %v3784, %v3786
      %v3788 = vrot.slane %v3074, 2
      %v3789 = vrot.slane %v2996, 2
      %v3790 = vsel %vm1219, %v3788, %v3789
      %v3791 = vrot.slane %v3090, 2
      %v3792 = vsel %vm1219, %v3789, %v3791
      %v3793 = vrot.slane %v3075, 2
      %v3794 = vrot.slane %v2999, 2
      %v3795 = vsel %vm1219, %v3793, %v3794
      %v3796 = vrot.slane %v3091, 2
      %v3797 = vsel %vm1219, %v3794, %v3796
      %v3798 = vrot.slane %v3076, 2
      %v3799 = vrot.slane %v3002, 2
      %v3800 = vsel %vm1219, %v3798, %v3799
      %v3801 = vrot.slane %v3092, 2
      %v3802 = vsel %vm1219, %v3799, %v3801
      %v3803 = vrot.slane %v3077, 2
      %v3804 = vrot.slane %v3005, 2
      %v3805 = vsel %vm1219, %v3803, %v3804
      %v3806 = vrot.slane %v3093, 2
      %v3807 = vsel %vm1219, %v3804, %v3806
      %v3808 = vrot.slane %v3078, 2
      %v3809 = vrot.slane %v3008, 2
      %v3810 = vsel %vm1219, %v3808, %v3809
      %v3811 = vrot.slane %v3094, 2
      %v3812 = vsel %vm1219, %v3809, %v3811
      %v3813 = vrot.slane %v3079, 2
      %v3814 = vrot.slane %v3011, 2
      %v3815 = vsel %vm1219, %v3813, %v3814
      %v3816 = vrot.slane %v3095, 2
      %v3817 = vsel %vm1219, %v3814, %v3816
      %v3818 = vrot.slane %v3080, 2
      %v3819 = vrot.slane %v3014, 2
      %v3820 = vsel %vm1219, %v3818, %v3819
      %v3821 = vrot.slane %v3096, 2
      %v3822 = vsel %vm1219, %v3819, %v3821
      %v3853 = vpack.c.bf16 %v3752, %v3750
      %v3854 = vpack.c.bf16 %v3757, %v3755
      %v3855 = vpack.c.bf16 %v3762, %v3760
      %v3856 = vpack.c.bf16 %v3767, %v3765
      %v3857 = vpack.c.bf16 %v3772, %v3770
      %v3858 = vpack.c.bf16 %v3777, %v3775
      %v3859 = vpack.c.bf16 %v3782, %v3780
      %v3860 = vpack.c.bf16 %v3787, %v3785
      %v3861 = vpack.c.bf16 %v3792, %v3790
      %v3862 = vpack.c.bf16 %v3797, %v3795
      %v3863 = vpack.c.bf16 %v3802, %v3800
      %v3864 = vpack.c.bf16 %v3807, %v3805
      %v3865 = vpack.c.bf16 %v3812, %v3810
      %v3866 = vpack.c.bf16 %v3817, %v3815
      %v3867 = vpack.c.bf16 %v3822, %v3820
      %s3868 = scalar_lea.vmem %s3, 4
      %v3869 = vld [vmem:[%s3868] sm:$0x3]
      %v3871 = vsel %vm566, %v3853, 0
      %v3874 = vsel %vm566, %v3854, 0
      %v3877 = vsel %vm566, %v3855, 0
      %v3880 = vsel %vm566, %v3856, 0
      %v3883 = vsel %vm566, %v3857, 0
      %v3886 = vsel %vm566, %v3858, 0
      %v3889 = vsel %vm566, %v3859, 0
      %v3892 = vsel %vm566, %v3860, 0
      %v3895 = vsel %vm566, %v3861, 0
      %v3898 = vsel %vm566, %v3862, 0
      %v3901 = vsel %vm566, %v3863, 0
      %v3904 = vsel %vm566, %v3864, 0
      %v3907 = vsel %vm566, %v3865, 0
      %v3910 = vsel %vm566, %v3866, 0
      %v3913 = vsel %vm566, %v3867, 0
      %v3916 = vsel %vm615, %v3869, 0
      %3918 = vmatprep.subr.bf16.mxu0 0
      %3919 = vmatpush1.bf16.msra.mxu0 %v3916
      %3920 = vmatprep.subr.bf16.mxu0 0
      %3921 = vmatpush1.bf16.msra.mxu0 0
      %3922 = vmatprep.subr.bf16.mxu0 0
      %3923 = vmatpush1.bf16.msra.mxu0 0
      %3924 = vmatprep.subr.bf16.mxu0 0
      %3925 = vmatpush1.bf16.msra.mxu0 0
      %3926 = vmatprep.subr.bf16.mxu0 0
      %3927 = vmatpush1.bf16.msra.mxu0 0
      %3928 = vmatprep.subr.bf16.mxu0 0
      %3929 = vmatpush1.bf16.msra.mxu0 0
      %3930 = vmatprep.subr.bf16.mxu0 0
      %3931 = vmatpush1.bf16.msra.mxu0 0
      %3932 = vmatprep.subr.bf16.mxu0 0
      %3933 = vmatpush1.bf16.msra.mxu0 0
      %3934 = vmatprep.subr.bf16.mxu0 0
      %3935 = vmatpush1.bf16.msra.mxu0 0
      %3936 = vmatprep.subr.bf16.mxu0 0
      %3937 = vmatpush1.bf16.msra.mxu0 0
      %3938 = vmatprep.subr.bf16.mxu0 0
      %3939 = vmatpush1.bf16.msra.mxu0 0
      %3940 = vmatprep.subr.bf16.mxu0 0
      %3941 = vmatpush1.bf16.msra.mxu0 0
      %3942 = vmatprep.subr.bf16.mxu0 0
      %3943 = vmatpush1.bf16.msra.mxu0 0
      %3944 = vmatprep.subr.bf16.mxu0 0
      %3945 = vmatpush1.bf16.msra.mxu0 0
      %3946 = vmatprep.subr.bf16.mxu0 0
      %3947 = vmatpush1.bf16.msra.mxu0 0
      %3948 = vmatprep.subr.bf16.mxu0 0
      %3949 = vmatpush1.bf16.msra.mxu0 0
      %3950 = vmatprep.mubr.bf16.mxu0 0
      %3951 = vmatmul.mubr.bf16.gmra.mrb[0].mxu0 %v1351
      %v3952 = vpop.f32.mrb[0].mxu0
      %v3953 = vadd.f32 0.0, %v3952
      %v3954 = vpop.f32.mrb[0].mxu0
      %v3955 = vpop.f32.mrb[0].mxu0
      %v3956 = vadd.f32 0.0, %v3955
      %v3957 = vpop.f32.mrb[0].mxu0
      %3958 = vmatprep.mubr.bf16.mxu0 0
      %3959 = vmatmul.mubr.bf16.gmra.mrb[0].mxu0 %v3871
      %v3960 = vpop.f32.mrb[0].mxu0
      %v3961 = vadd.f32 0.0, %v3960
      %v3962 = vpop.f32.mrb[0].mxu0
      %v3963 = vpop.f32.mrb[0].mxu0
      %v3964 = vadd.f32 0.0, %v3963
      %v3965 = vpop.f32.mrb[0].mxu0
      %3966 = vmatprep.mubr.bf16.mxu0 0
      %3967 = vmatmul.mubr.bf16.gmra.mrb[0].mxu0 %v3874
      %v3968 = vpop.f32.mrb[0].mxu0
      %v3969 = vadd.f32 0.0, %v3968
      %v3970 = vpop.f32.mrb[0].mxu0
      %v3971 = vpop.f32.mrb[0].mxu0
      %v3972 = vadd.f32 0.0, %v3971
      %v3973 = vpop.f32.mrb[0].mxu0
      %3974 = vmatprep.mubr.bf16.mxu0 0
      %3975 = vmatmul.mubr.bf16.gmra.mrb[0].mxu0 %v3877
      %v3976 = vpop.f32.mrb[0].mxu0
      %v3977 = vadd.f32 0.0, %v3976
      %v3978 = vpop.f32.mrb[0].mxu0
      %v3979 = vpop.f32.mrb[0].mxu0
      %v3980 = vadd.f32 0.0, %v3979
      %v3981 = vpop.f32.mrb[0].mxu0
      %3982 = vmatprep.mubr.bf16.mxu0 0
      %3983 = vmatmul.mubr.bf16.gmra.mrb[0].mxu0 %v3880
      %v3984 = vpop.f32.mrb[0].mxu0
      %v3985 = vadd.f32 0.0, %v3984
      %v3986 = vpop.f32.mrb[0].mxu0
      %v3987 = vpop.f32.mrb[0].mxu0
      %v3988 = vadd.f32 0.0, %v3987
      %v3989 = vpop.f32.mrb[0].mxu0
      %3990 = vmatprep.mubr.bf16.mxu0 0
      %3991 = vmatmul.mubr.bf16.gmra.mrb[0].mxu0 %v3883
      %v3992 = vpop.f32.mrb[0].mxu0
      %v3993 = vadd.f32 0.0, %v3992
      %v3994 = vpop.f32.mrb[0].mxu0
      %v3995 = vpop.f32.mrb[0].mxu0
      %v3996 = vadd.f32 0.0, %v3995
      %v3997 = vpop.f32.mrb[0].mxu0
      %3998 = vmatprep.mubr.bf16.mxu0 0
      %3999 = vmatmul.mubr.bf16.gmra.mrb[0].mxu0 %v3886
      %v4000 = vpop.f32.mrb[0].mxu0
      %v4001 = vadd.f32 0.0, %v4000
      %v4002 = vpop.f32.mrb[0].mxu0
      %v4003 = vpop.f32.mrb[0].mxu0
      %v4004 = vadd.f32 0.0, %v4003
      %v4005 = vpop.f32.mrb[0].mxu0
      %4006 = vmatprep.mubr.bf16.mxu0 0
      %4007 = vmatmul.mubr.bf16.gmra.mrb[0].mxu0 %v3889
      %v4008 = vpop.f32.mrb[0].mxu0
      %v4009 = vadd.f32 0.0, %v4008
      %v4010 = vpop.f32.mrb[0].mxu0
      %v4011 = vpop.f32.mrb[0].mxu0
      %v4012 = vadd.f32 0.0, %v4011
      %v4013 = vpop.f32.mrb[0].mxu0
      %4014 = vmatprep.mubr.bf16.mxu0 0
      %4015 = vmatmul.mubr.bf16.gmra.mrb[0].mxu0 %v3892
      %v4016 = vpop.f32.mrb[0].mxu0
      %v4017 = vadd.f32 0.0, %v4016
      %v4018 = vpop.f32.mrb[0].mxu0
      %v4019 = vpop.f32.mrb[0].mxu0
      %v4020 = vadd.f32 0.0, %v4019
      %v4021 = vpop.f32.mrb[0].mxu0
      %4022 = vmatprep.mubr.bf16.mxu0 0
      %4023 = vmatmul.mubr.bf16.gmra.mrb[0].mxu0 %v3895
      %v4024 = vpop.f32.mrb[0].mxu0
      %v4025 = vadd.f32 0.0, %v4024
      %v4026 = vpop.f32.mrb[0].mxu0
      %v4027 = vpop.f32.mrb[0].mxu0
      %v4028 = vadd.f32 0.0, %v4027
      %v4029 = vpop.f32.mrb[0].mxu0
      %4030 = vmatprep.mubr.bf16.mxu0 0
      %4031 = vmatmul.mubr.bf16.gmra.mrb[0].mxu0 %v3898
      %v4032 = vpop.f32.mrb[0].mxu0
      %v4033 = vadd.f32 0.0, %v4032
      %v4034 = vpop.f32.mrb[0].mxu0
      %v4035 = vpop.f32.mrb[0].mxu0
      %v4036 = vadd.f32 0.0, %v4035
      %v4037 = vpop.f32.mrb[0].mxu0
      %4038 = vmatprep.mubr.bf16.mxu0 0
      %4039 = vmatmul.mubr.bf16.gmra.mrb[0].mxu0 %v3901
      %v4040 = vpop.f32.mrb[0].mxu0
      %v4041 = vadd.f32 0.0, %v4040
      %v4042 = vpop.f32.mrb[0].mxu0
      %v4043 = vpop.f32.mrb[0].mxu0
      %v4044 = vadd.f32 0.0, %v4043
      %v4045 = vpop.f32.mrb[0].mxu0
      %4046 = vmatprep.mubr.bf16.mxu0 0
      %4047 = vmatmul.mubr.bf16.gmra.mrb[0].mxu0 %v3904
      %v4048 = vpop.f32.mrb[0].mxu0
      %v4049 = vadd.f32 0.0, %v4048
      %v4050 = vpop.f32.mrb[0].mxu0
      %v4051 = vpop.f32.mrb[0].mxu0
      %v4052 = vadd.f32 0.0, %v4051
      %v4053 = vpop.f32.mrb[0].mxu0
      %4054 = vmatprep.mubr.bf16.mxu0 0
      %4055 = vmatmul.mubr.bf16.gmra.mrb[0].mxu0 %v3907
      %v4056 = vpop.f32.mrb[0].mxu0
      %v4057 = vadd.f32 0.0, %v4056
      %v4058 = vpop.f32.mrb[0].mxu0
      %v4059 = vpop.f32.mrb[0].mxu0
      %v4060 = vadd.f32 0.0, %v4059
      %v4061 = vpop.f32.mrb[0].mxu0
      %4062 = vmatprep.mubr.bf16.mxu0 0
      %4063 = vmatmul.mubr.bf16.gmra.mrb[0].mxu0 %v3910
      %v4064 = vpop.f32.mrb[0].mxu0
      %v4065 = vadd.f32 0.0, %v4064
      %v4066 = vpop.f32.mrb[0].mxu0
      %v4067 = vpop.f32.mrb[0].mxu0
      %v4068 = vadd.f32 0.0, %v4067
      %v4069 = vpop.f32.mrb[0].mxu0
      %4070 = vmatprep.mubr.bf16.mxu0 0
      %4071 = vmatmul.mubr.bf16.gmra.mrb[0].mxu0 %v3913
      %v4072 = vpop.f32.mrb[0].mxu0
      %v4073 = vadd.f32 0.0, %v4072
      %v4074 = vpop.f32.mrb[0].mxu0
      %v4075 = vpop.f32.mrb[0].mxu0
      %v4076 = vadd.f32 0.0, %v4075
      %v4077 = vpop.f32.mrb[0].mxu0
      %4078 = vdwg.mxu0
      %v4079 = vadd.f32 %v3716, %v3953
      %v4080 = vadd.f32 %v3717, %v3956
      %v4081 = vadd.f32 %v3718, %v3961
      %v4082 = vadd.f32 %v3719, %v3964
      %v4083 = vadd.f32 %v3720, %v3969
      %v4084 = vadd.f32 %v3721, %v3972
      %v4085 = vadd.f32 %v3722, %v3977
      %v4086 = vadd.f32 %v3723, %v3980
      %v4087 = vadd.f32 %v3724, %v3985
      %v4088 = vadd.f32 %v3725, %v3988
      %v4089 = vadd.f32 %v3726, %v3993
      %v4090 = vadd.f32 %v3727, %v3996
      %v4091 = vadd.f32 %v3728, %v4001
      %v4092 = vadd.f32 %v3729, %v4004
      %v4093 = vadd.f32 %v3730, %v4009
      %v4094 = vadd.f32 %v3731, %v4012
      %v4095 = vadd.f32 %v3732, %v4017
      %v4096 = vadd.f32 %v3733, %v4020
      %v4097 = vadd.f32 %v3734, %v4025
      %v4098 = vadd.f32 %v3735, %v4028
      %v4099 = vadd.f32 %v3736, %v4033
      %v4100 = vadd.f32 %v3737, %v4036
      %v4101 = vadd.f32 %v3738, %v4041
      %v4102 = vadd.f32 %v3739, %v4044
      %v4103 = vadd.f32 %v3740, %v4049
      %v4104 = vadd.f32 %v3741, %v4052
      %v4105 = vadd.f32 %v3742, %v4057
      %v4106 = vadd.f32 %v3743, %v4060
      %v4107 = vadd.f32 %v3744, %v4065
      %v4108 = vadd.f32 %v3745, %v4068
      %v4109 = vadd.f32 %v3746, %v4073
      %v4110 = vadd.f32 %v3747, %v4076
      %v4111 = vpack.c.bf16 %v3017, %v3081
      %s4112 = scalar_lea.vmem %s3, 6
      %v4113 = vld [vmem:[%s4112] sm:$0x3]
      %v4115 = vsel %vm566, %v4111, 0
      %v4118 = vsel %vm615, %v4113, 0
      %4120 = vmatprep.subr.bf16.mxu0 0
      %4121 = vmatpush1.bf16.msra.mxu0 %v4118
      %4122 = vmatprep.subr.bf16.mxu0 0
      %4123 = vmatpush1.bf16.msra.mxu0 0
      %4124 = vmatprep.subr.bf16.mxu0 0
      %4125 = vmatpush1.bf16.msra.mxu0 0
      %4126 = vmatprep.subr.bf16.mxu0 0
      %4127 = vmatpush1.bf16.msra.mxu0 0
      %4128 = vmatprep.subr.bf16.mxu0 0
      %4129 = vmatpush1.bf16.msra.mxu0 0
      %4130 = vmatprep.subr.bf16.mxu0 0
      %4131 = vmatpush1.bf16.msra.mxu0 0
      %4132 = vmatprep.subr.bf16.mxu0 0
      %4133 = vmatpush1.bf16.msra.mxu0 0
      %4134 = vmatprep.subr.bf16.mxu0 0
      %4135 = vmatpush1.bf16.msra.mxu0 0
      %4136 = vmatprep.subr.bf16.mxu0 0
      %4137 = vmatpush1.bf16.msra.mxu0 0
      %4138 = vmatprep.subr.bf16.mxu0 0
      %4139 = vmatpush1.bf16.msra.mxu0 0
      %4140 = vmatprep.subr.bf16.mxu0 0
      %4141 = vmatpush1.bf16.msra.mxu0 0
      %4142 = vmatprep.subr.bf16.mxu0 0
      %4143 = vmatpush1.bf16.msra.mxu0 0
      %4144 = vmatprep.subr.bf16.mxu0 0
      %4145 = vmatpush1.bf16.msra.mxu0 0
      %4146 = vmatprep.subr.bf16.mxu0 0
      %4147 = vmatpush1.bf16.msra.mxu0 0
      %4148 = vmatprep.subr.bf16.mxu0 0
      %4149 = vmatpush1.bf16.msra.mxu0 0
      %4150 = vmatprep.subr.bf16.mxu0 0
      %4151 = vmatpush1.bf16.msra.mxu0 0
      %4152 = vmatprep.mubr.bf16.mxu0 0
      %4153 = vmatmul.mubr.bf16.gmra.mrb[0].mxu0 %v3115
      %v4154 = vpop.f32.mrb[0].mxu0
      %v4155 = vadd.f32 0.0, %v4154
      %v4156 = vpop.f32.mrb[0].mxu0
      %v4157 = vpop.f32.mrb[0].mxu0
      %v4158 = vadd.f32 0.0, %v4157
      %v4159 = vpop.f32.mrb[0].mxu0
      %4160 = vmatprep.mubr.bf16.mxu0 0
      %4161 = vmatmul.mubr.bf16.gmra.mrb[0].mxu0 %v3118
      %v4162 = vpop.f32.mrb[0].mxu0
      %v4163 = vadd.f32 0.0, %v4162
      %v4164 = vpop.f32.mrb[0].mxu0
      %v4165 = vpop.f32.mrb[0].mxu0
      %v4166 = vadd.f32 0.0, %v4165
      %v4167 = vpop.f32.mrb[0].mxu0
      %4168 = vmatprep.mubr.bf16.mxu0 0
      %4169 = vmatmul.mubr.bf16.gmra.mrb[0].mxu0 %v3121
      %v4170 = vpop.f32.mrb[0].mxu0
      %v4171 = vadd.f32 0.0, %v4170
      %v4172 = vpop.f32.mrb[0].mxu0
      %v4173 = vpop.f32.mrb[0].mxu0
      %v4174 = vadd.f32 0.0, %v4173
      %v4175 = vpop.f32.mrb[0].mxu0
      %4176 = vmatprep.mubr.bf16.mxu0 0
      %4177 = vmatmul.mubr.bf16.gmra.mrb[0].mxu0 %v3124
      %v4178 = vpop.f32.mrb[0].mxu0
      %v4179 = vadd.f32 0.0, %v4178
      %v4180 = vpop.f32.mrb[0].mxu0
      %v4181 = vpop.f32.mrb[0].mxu0
      %v4182 = vadd.f32 0.0, %v4181
      %v4183 = vpop.f32.mrb[0].mxu0
      %4184 = vmatprep.mubr.bf16.mxu0 0
      %4185 = vmatmul.mubr.bf16.gmra.mrb[0].mxu0 %v3127
      %v4186 = vpop.f32.mrb[0].mxu0
      %v4187 = vadd.f32 0.0, %v4186
      %v4188 = vpop.f32.mrb[0].mxu0
      %v4189 = vpop.f32.mrb[0].mxu0
      %v4190 = vadd.f32 0.0, %v4189
      %v4191 = vpop.f32.mrb[0].mxu0
      %4192 = vmatprep.mubr.bf16.mxu0 0
      %4193 = vmatmul.mubr.bf16.gmra.mrb[0].mxu0 %v3130
      %v4194 = vpop.f32.mrb[0].mxu0
      %v4195 = vadd.f32 0.0, %v4194
      %v4196 = vpop.f32.mrb[0].mxu0
      %v4197 = vpop.f32.mrb[0].mxu0
      %v4198 = vadd.f32 0.0, %v4197
      %v4199 = vpop.f32.mrb[0].mxu0
      %4200 = vmatprep.mubr.bf16.mxu0 0
      %4201 = vmatmul.mubr.bf16.gmra.mrb[0].mxu0 %v3133
      %v4202 = vpop.f32.mrb[0].mxu0
      %v4203 = vadd.f32 0.0, %v4202
      %v4204 = vpop.f32.mrb[0].mxu0
      %v4205 = vpop.f32.mrb[0].mxu0
      %v4206 = vadd.f32 0.0, %v4205
      %v4207 = vpop.f32.mrb[0].mxu0
      %4208 = vmatprep.mubr.bf16.mxu0 0
      %4209 = vmatmul.mubr.bf16.gmra.mrb[0].mxu0 %v3136
      %v4210 = vpop.f32.mrb[0].mxu0
      %v4211 = vadd.f32 0.0, %v4210
      %v4212 = vpop.f32.mrb[0].mxu0
      %v4213 = vpop.f32.mrb[0].mxu0
      %v4214 = vadd.f32 0.0, %v4213
      %v4215 = vpop.f32.mrb[0].mxu0
      %4216 = vmatprep.mubr.bf16.mxu0 0
      %4217 = vmatmul.mubr.bf16.gmra.mrb[0].mxu0 %v3139
      %v4218 = vpop.f32.mrb[0].mxu0
      %v4219 = vadd.f32 0.0, %v4218
      %v4220 = vpop.f32.mrb[0].mxu0
      %v4221 = vpop.f32.mrb[0].mxu0
      %v4222 = vadd.f32 0.0, %v4221
      %v4223 = vpop.f32.mrb[0].mxu0
      %4224 = vmatprep.mubr.bf16.mxu0 0
      %4225 = vmatmul.mubr.bf16.gmra.mrb[0].mxu0 %v3142
      %v4226 = vpop.f32.mrb[0].mxu0
      %v4227 = vadd.f32 0.0, %v4226
      %v4228 = vpop.f32.mrb[0].mxu0
      %v4229 = vpop.f32.mrb[0].mxu0
      %v4230 = vadd.f32 0.0, %v4229
      %v4231 = vpop.f32.mrb[0].mxu0
      %4232 = vmatprep.mubr.bf16.mxu0 0
      %4233 = vmatmul.mubr.bf16.gmra.mrb[0].mxu0 %v3145
      %v4234 = vpop.f32.mrb[0].mxu0
      %v4235 = vadd.f32 0.0, %v4234
      %v4236 = vpop.f32.mrb[0].mxu0
      %v4237 = vpop.f32.mrb[0].mxu0
      %v4238 = vadd.f32 0.0, %v4237
      %v4239 = vpop.f32.mrb[0].mxu0
      %4240 = vmatprep.mubr.bf16.mxu0 0
      %4241 = vmatmul.mubr.bf16.gmra.mrb[0].mxu0 %v3148
      %v4242 = vpop.f32.mrb[0].mxu0
      %v4243 = vadd.f32 0.0, %v4242
      %v4244 = vpop.f32.mrb[0].mxu0
      %v4245 = vpop.f32.mrb[0].mxu0
      %v4246 = vadd.f32 0.0, %v4245
      %v4247 = vpop.f32.mrb[0].mxu0
      %4248 = vmatprep.mubr.bf16.mxu0 0
      %4249 = vmatmul.mubr.bf16.gmra.mrb[0].mxu0 %v3151
      %v4250 = vpop.f32.mrb[0].mxu0
      %v4251 = vadd.f32 0.0, %v4250
      %v4252 = vpop.f32.mrb[0].mxu0
      %v4253 = vpop.f32.mrb[0].mxu0
      %v4254 = vadd.f32 0.0, %v4253
      %v4255 = vpop.f32.mrb[0].mxu0
      %4256 = vmatprep.mubr.bf16.mxu0 0
      %4257 = vmatmul.mubr.bf16.gmra.mrb[0].mxu0 %v3154
      %v4258 = vpop.f32.mrb[0].mxu0
      %v4259 = vadd.f32 0.0, %v4258
      %v4260 = vpop.f32.mrb[0].mxu0
      %v4261 = vpop.f32.mrb[0].mxu0
      %v4262 = vadd.f32 0.0, %v4261
      %v4263 = vpop.f32.mrb[0].mxu0
      %4264 = vmatprep.mubr.bf16.mxu0 0
      %4265 = vmatmul.mubr.bf16.gmra.mrb[0].mxu0 %v3157
      %v4266 = vpop.f32.mrb[0].mxu0
      %v4267 = vadd.f32 0.0, %v4266
      %v4268 = vpop.f32.mrb[0].mxu0
      %v4269 = vpop.f32.mrb[0].mxu0
      %v4270 = vadd.f32 0.0, %v4269
      %v4271 = vpop.f32.mrb[0].mxu0
      %4272 = vmatprep.mubr.bf16.mxu0 0
      %4273 = vmatmul.mubr.bf16.gmra.mrb[0].mxu0 %v4115
      %v4274 = vpop.f32.mrb[0].mxu0
      %v4275 = vadd.f32 0.0, %v4274
      %v4276 = vpop.f32.mrb[0].mxu0
      %v4277 = vpop.f32.mrb[0].mxu0
      %v4278 = vadd.f32 0.0, %v4277
      %v4279 = vpop.f32.mrb[0].mxu0
      %4280 = vdwg.mxu0
      %v4281 = vadd.f32 %v4079, %v4155
      %v4282 = vadd.f32 %v4080, %v4158
      %v4283 = vadd.f32 %v4081, %v4163
      %v4284 = vadd.f32 %v4082, %v4166
      %v4285 = vadd.f32 %v4083, %v4171
      %v4286 = vadd.f32 %v4084, %v4174
      %v4287 = vadd.f32 %v4085, %v4179
      %v4288 = vadd.f32 %v4086, %v4182
      %v4289 = vadd.f32 %v4087, %v4187
      %v4290 = vadd.f32 %v4088, %v4190
      %v4291 = vadd.f32 %v4089, %v4195
      %v4292 = vadd.f32 %v4090, %v4198
      %v4293 = vadd.f32 %v4091, %v4203
      %v4294 = vadd.f32 %v4092, %v4206
      %v4295 = vadd.f32 %v4093, %v4211
      %v4296 = vadd.f32 %v4094, %v4214
      %v4297 = vadd.f32 %v4095, %v4219
      %v4298 = vadd.f32 %v4096, %v4222
      %v4299 = vadd.f32 %v4097, %v4227
      %v4300 = vadd.f32 %v4098, %v4230
      %v4301 = vadd.f32 %v4099, %v4235
      %v4302 = vadd.f32 %v4100, %v4238
      %v4303 = vadd.f32 %v4101, %v4243
      %v4304 = vadd.f32 %v4102, %v4246
      %v4305 = vadd.f32 %v4103, %v4251
      %v4306 = vadd.f32 %v4104, %v4254
      %v4307 = vadd.f32 %v4105, %v4259
      %v4308 = vadd.f32 %v4106, %v4262
      %v4309 = vadd.f32 %v4107, %v4267
      %v4310 = vadd.f32 %v4108, %v4270
      %v4311 = vadd.f32 %v4109, %v4275
      %v4312 = vadd.f32 %v4110, %v4278
      %v4315 = vrot.slane %v3081, 1
      %v4316 = vrot.slane %v3017, 1
      %v4317 = vsel %vm844, %v4315, %v4316
      %v4318 = vrot.slane %v3097, 1
      %v4319 = vsel %vm844, %v4316, %v4318
      %v4322 = vpack.c.bf16 %v4319, %v4317
      %s4323 = scalar_lea.vmem %s3, 8
      %v4324 = vld [vmem:[%s4323] sm:$0x3]
      %v4326 = vsel %vm566, %v4322, 0
      %v4329 = vsel %vm615, %v4324, 0
      %4331 = vmatprep.subr.bf16.mxu0 0
      %4332 = vmatpush1.bf16.msra.mxu0 %v4329
      %4333 = vmatprep.subr.bf16.mxu0 0
      %4334 = vmatpush1.bf16.msra.mxu0 0
      %4335 = vmatprep.subr.bf16.mxu0 0
      %4336 = vmatpush1.bf16.msra.mxu0 0
      %4337 = vmatprep.subr.bf16.mxu0 0
      %4338 = vmatpush1.bf16.msra.mxu0 0
      %4339 = vmatprep.subr.bf16.mxu0 0
      %4340 = vmatpush1.bf16.msra.mxu0 0
      %4341 = vmatprep.subr.bf16.mxu0 0
      %4342 = vmatpush1.bf16.msra.mxu0 0
      %4343 = vmatprep.subr.bf16.mxu0 0
      %4344 = vmatpush1.bf16.msra.mxu0 0
      %4345 = vmatprep.subr.bf16.mxu0 0
      %4346 = vmatpush1.bf16.msra.mxu0 0
      %4347 = vmatprep.subr.bf16.mxu0 0
      %4348 = vmatpush1.bf16.msra.mxu0 0
      %4349 = vmatprep.subr.bf16.mxu0 0
      %4350 = vmatpush1.bf16.msra.mxu0 0
      %4351 = vmatprep.subr.bf16.mxu0 0
      %4352 = vmatpush1.bf16.msra.mxu0 0
      %4353 = vmatprep.subr.bf16.mxu0 0
      %4354 = vmatpush1.bf16.msra.mxu0 0
      %4355 = vmatprep.subr.bf16.mxu0 0
      %4356 = vmatpush1.bf16.msra.mxu0 0
      %4357 = vmatprep.subr.bf16.mxu0 0
      %4358 = vmatpush1.bf16.msra.mxu0 0
      %4359 = vmatprep.subr.bf16.mxu0 0
      %4360 = vmatpush1.bf16.msra.mxu0 0
      %4361 = vmatprep.subr.bf16.mxu0 0
      %4362 = vmatpush1.bf16.msra.mxu0 0
      %4363 = vmatprep.mubr.bf16.mxu0 0
      %4364 = vmatmul.mubr.bf16.gmra.mrb[0].mxu0 %v3508
      %v4365 = vpop.f32.mrb[0].mxu0
      %v4366 = vadd.f32 0.0, %v4365
      %v4367 = vpop.f32.mrb[0].mxu0
      %v4368 = vpop.f32.mrb[0].mxu0
      %v4369 = vadd.f32 0.0, %v4368
      %v4370 = vpop.f32.mrb[0].mxu0
      %4371 = vmatprep.mubr.bf16.mxu0 0
      %4372 = vmatmul.mubr.bf16.gmra.mrb[0].mxu0 %v3511
      %v4373 = vpop.f32.mrb[0].mxu0
      %v4374 = vadd.f32 0.0, %v4373
      %v4375 = vpop.f32.mrb[0].mxu0
      %v4376 = vpop.f32.mrb[0].mxu0
      %v4377 = vadd.f32 0.0, %v4376
      %v4378 = vpop.f32.mrb[0].mxu0
      %4379 = vmatprep.mubr.bf16.mxu0 0
      %4380 = vmatmul.mubr.bf16.gmra.mrb[0].mxu0 %v3514
      %v4381 = vpop.f32.mrb[0].mxu0
      %v4382 = vadd.f32 0.0, %v4381
      %v4383 = vpop.f32.mrb[0].mxu0
      %v4384 = vpop.f32.mrb[0].mxu0
      %v4385 = vadd.f32 0.0, %v4384
      %v4386 = vpop.f32.mrb[0].mxu0
      %4387 = vmatprep.mubr.bf16.mxu0 0
      %4388 = vmatmul.mubr.bf16.gmra.mrb[0].mxu0 %v3517
      %v4389 = vpop.f32.mrb[0].mxu0
      %v4390 = vadd.f32 0.0, %v4389
      %v4391 = vpop.f32.mrb[0].mxu0
      %v4392 = vpop.f32.mrb[0].mxu0
      %v4393 = vadd.f32 0.0, %v4392
      %v4394 = vpop.f32.mrb[0].mxu0
      %4395 = vmatprep.mubr.bf16.mxu0 0
      %4396 = vmatmul.mubr.bf16.gmra.mrb[0].mxu0 %v3520
      %v4397 = vpop.f32.mrb[0].mxu0
      %v4398 = vadd.f32 0.0, %v4397
      %v4399 = vpop.f32.mrb[0].mxu0
      %v4400 = vpop.f32.mrb[0].mxu0
      %v4401 = vadd.f32 0.0, %v4400
      %v4402 = vpop.f32.mrb[0].mxu0
      %4403 = vmatprep.mubr.bf16.mxu0 0
      %4404 = vmatmul.mubr.bf16.gmra.mrb[0].mxu0 %v3523
      %v4405 = vpop.f32.mrb[0].mxu0
      %v4406 = vadd.f32 0.0, %v4405
      %v4407 = vpop.f32.mrb[0].mxu0
      %v4408 = vpop.f32.mrb[0].mxu0
      %v4409 = vadd.f32 0.0, %v4408
      %v4410 = vpop.f32.mrb[0].mxu0
      %4411 = vmatprep.mubr.bf16.mxu0 0
      %4412 = vmatmul.mubr.bf16.gmra.mrb[0].mxu0 %v3526
      %v4413 = vpop.f32.mrb[0].mxu0
      %v4414 = vadd.f32 0.0, %v4413
      %v4415 = vpop.f32.mrb[0].mxu0
      %v4416 = vpop.f32.mrb[0].mxu0
      %v4417 = vadd.f32 0.0, %v4416
      %v4418 = vpop.f32.mrb[0].mxu0
      %4419 = vmatprep.mubr.bf16.mxu0 0
      %4420 = vmatmul.mubr.bf16.gmra.mrb[0].mxu0 %v3529
      %v4421 = vpop.f32.mrb[0].mxu0
      %v4422 = vadd.f32 0.0, %v4421
      %v4423 = vpop.f32.mrb[0].mxu0
      %v4424 = vpop.f32.mrb[0].mxu0
      %v4425 = vadd.f32 0.0, %v4424
      %v4426 = vpop.f32.mrb[0].mxu0
      %4427 = vmatprep.mubr.bf16.mxu0 0
      %4428 = vmatmul.mubr.bf16.gmra.mrb[0].mxu0 %v3532
      %v4429 = vpop.f32.mrb[0].mxu0
      %v4430 = vadd.f32 0.0, %v4429
      %v4431 = vpop.f32.mrb[0].mxu0
      %v4432 = vpop.f32.mrb[0].mxu0
      %v4433 = vadd.f32 0.0, %v4432
      %v4434 = vpop.f32.mrb[0].mxu0
      %4435 = vmatprep.mubr.bf16.mxu0 0
      %4436 = vmatmul.mubr.bf16.gmra.mrb[0].mxu0 %v3535
      %v4437 = vpop.f32.mrb[0].mxu0
      %v4438 = vadd.f32 0.0, %v4437
      %v4439 = vpop.f32.mrb[0].mxu0
      %v4440 = vpop.f32.mrb[0].mxu0
      %v4441 = vadd.f32 0.0, %v4440
      %v4442 = vpop.f32.mrb[0].mxu0
      %4443 = vmatprep.mubr.bf16.mxu0 0
      %4444 = vmatmul.mubr.bf16.gmra.mrb[0].mxu0 %v3538
      %v4445 = vpop.f32.mrb[0].mxu0
      %v4446 = vadd.f32 0.0, %v4445
      %v4447 = vpop.f32.mrb[0].mxu0
      %v4448 = vpop.f32.mrb[0].mxu0
      %v4449 = vadd.f32 0.0, %v4448
      %v4450 = vpop.f32.mrb[0].mxu0
      %4451 = vmatprep.mubr.bf16.mxu0 0
      %4452 = vmatmul.mubr.bf16.gmra.mrb[0].mxu0 %v3541
      %v4453 = vpop.f32.mrb[0].mxu0
      %v4454 = vadd.f32 0.0, %v4453
      %v4455 = vpop.f32.mrb[0].mxu0
      %v4456 = vpop.f32.mrb[0].mxu0
      %v4457 = vadd.f32 0.0, %v4456
      %v4458 = vpop.f32.mrb[0].mxu0
      %4459 = vmatprep.mubr.bf16.mxu0 0
      %4460 = vmatmul.mubr.bf16.gmra.mrb[0].mxu0 %v3544
      %v4461 = vpop.f32.mrb[0].mxu0
      %v4462 = vadd.f32 0.0, %v4461
      %v4463 = vpop.f32.mrb[0].mxu0
      %v4464 = vpop.f32.mrb[0].mxu0
      %v4465 = vadd.f32 0.0, %v4464
      %v4466 = vpop.f32.mrb[0].mxu0
      %4467 = vmatprep.mubr.bf16.mxu0 0
      %4468 = vmatmul.mubr.bf16.gmra.mrb[0].mxu0 %v3547
      %v4469 = vpop.f32.mrb[0].mxu0
      %v4470 = vadd.f32 0.0, %v4469
      %v4471 = vpop.f32.mrb[0].mxu0
      %v4472 = vpop.f32.mrb[0].mxu0
      %v4473 = vadd.f32 0.0, %v4472
      %v4474 = vpop.f32.mrb[0].mxu0
      %4475 = vmatprep.mubr.bf16.mxu0 0
      %4476 = vmatmul.mubr.bf16.gmra.mrb[0].mxu0 %v3550
      %v4477 = vpop.f32.mrb[0].mxu0
      %v4478 = vadd.f32 0.0, %v4477
      %v4479 = vpop.f32.mrb[0].mxu0
      %v4480 = vpop.f32.mrb[0].mxu0
      %v4481 = vadd.f32 0.0, %v4480
      %v4482 = vpop.f32.mrb[0].mxu0
      %4483 = vmatprep.mubr.bf16.mxu0 0
      %4484 = vmatmul.mubr.bf16.gmra.mrb[0].mxu0 %v4326
      %v4485 = vpop.f32.mrb[0].mxu0
      %v4486 = vadd.f32 0.0, %v4485
      %v4487 = vpop.f32.mrb[0].mxu0
      %v4488 = vpop.f32.mrb[0].mxu0
      %v4489 = vadd.f32 0.0, %v4488
      %v4490 = vpop.f32.mrb[0].mxu0
      %4491 = vdwg.mxu0
      %v4492 = vadd.f32 %v4281, %v4366
      %v4493 = vadd.f32 %v4282, %v4369
      %v4494 = vadd.f32 %v4283, %v4374
      %v4495 = vadd.f32 %v4284, %v4377
      %v4496 = vadd.f32 %v4285, %v4382
      %v4497 = vadd.f32 %v4286, %v4385
      %v4498 = vadd.f32 %v4287, %v4390
      %v4499 = vadd.f32 %v4288, %v4393
      %v4500 = vadd.f32 %v4289, %v4398
      %v4501 = vadd.f32 %v4290, %v4401
      %v4502 = vadd.f32 %v4291, %v4406
      %v4503 = vadd.f32 %v4292, %v4409
      %v4504 = vadd.f32 %v4293, %v4414
      %v4505 = vadd.f32 %v4294, %v4417
      %v4506 = vadd.f32 %v4295, %v4422
      %v4507 = vadd.f32 %v4296, %v4425
      %v4508 = vadd.f32 %v4297, %v4430
      %v4509 = vadd.f32 %v4298, %v4433
      %v4510 = vadd.f32 %v4299, %v4438
      %v4511 = vadd.f32 %v4300, %v4441
      %v4512 = vadd.f32 %v4301, %v4446
      %v4513 = vadd.f32 %v4302, %v4449
      %v4514 = vadd.f32 %v4303, %v4454
      %v4515 = vadd.f32 %v4304, %v4457
      %v4516 = vadd.f32 %v4305, %v4462
      %v4517 = vadd.f32 %v4306, %v4465
      %v4518 = vadd.f32 %v4307, %v4470
      %v4519 = vadd.f32 %v4308, %v4473
      %v4520 = vadd.f32 %v4309, %v4478
      %v4521 = vadd.f32 %v4310, %v4481
      %v4522 = vadd.f32 %v4311, %v4486
      %v4523 = vadd.f32 %v4312, %v4489
      %v4524 = vrot.slane %v3081, 2
      %v4525 = vrot.slane %v3017, 2
      %v4526 = vsel %vm1219, %v4524, %v4525
      %v4527 = vrot.slane %v3097, 2
      %v4528 = vsel %vm1219, %v4525, %v4527
      %v4531 = vpack.c.bf16 %v4528, %v4526
      %s4532 = scalar_lea.vmem %s3, 10
      %v4533 = vld [vmem:[%s4532] sm:$0x3]
      %v4535 = vsel %vm566, %v4531, 0
      %v4538 = vsel %vm615, %v4533, 0
      %4540 = vmatprep.subr.bf16.mxu0 0
      %4541 = vmatpush1.bf16.msra.mxu0 %v4538
      %4542 = vmatprep.subr.bf16.mxu0 0
      %4543 = vmatpush1.bf16.msra.mxu0 0
      %4544 = vmatprep.subr.bf16.mxu0 0
      %4545 = vmatpush1.bf16.msra.mxu0 0
      %4546 = vmatprep.subr.bf16.mxu0 0
      %4547 = vmatpush1.bf16.msra.mxu0 0
      %4548 = vmatprep.subr.bf16.mxu0 0
      %4549 = vmatpush1.bf16.msra.mxu0 0
      %4550 = vmatprep.subr.bf16.mxu0 0
      %4551 = vmatpush1.bf16.msra.mxu0 0
      %4552 = vmatprep.subr.bf16.mxu0 0
      %4553 = vmatpush1.bf16.msra.mxu0 0
      %4554 = vmatprep.subr.bf16.mxu0 0
      %4555 = vmatpush1.bf16.msra.mxu0 0
      %4556 = vmatprep.subr.bf16.mxu0 0
      %4557 = vmatpush1.bf16.msra.mxu0 0
      %4558 = vmatprep.subr.bf16.mxu0 0
      %4559 = vmatpush1.bf16.msra.mxu0 0
      %4560 = vmatprep.subr.bf16.mxu0 0
      %4561 = vmatpush1.bf16.msra.mxu0 0
      %4562 = vmatprep.subr.bf16.mxu0 0
      %4563 = vmatpush1.bf16.msra.mxu0 0
      %4564 = vmatprep.subr.bf16.mxu0 0
      %4565 = vmatpush1.bf16.msra.mxu0 0
      %4566 = vmatprep.subr.bf16.mxu0 0
      %4567 = vmatpush1.bf16.msra.mxu0 0
      %4568 = vmatprep.subr.bf16.mxu0 0
      %4569 = vmatpush1.bf16.msra.mxu0 0
      %4570 = vmatprep.subr.bf16.mxu0 0
      %4571 = vmatpush1.bf16.msra.mxu0 0
      %4572 = vmatprep.mubr.bf16.mxu0 0
      %4573 = vmatmul.mubr.bf16.gmra.mrb[0].mxu0 %v3871
      %v4574 = vpop.f32.mrb[0].mxu0
      %v4575 = vadd.f32 0.0, %v4574
      %v4576 = vpop.f32.mrb[0].mxu0
      %v4577 = vpop.f32.mrb[0].mxu0
      %v4578 = vadd.f32 0.0, %v4577
      %v4579 = vpop.f32.mrb[0].mxu0
      %4580 = vmatprep.mubr.bf16.mxu0 0
      %4581 = vmatmul.mubr.bf16.gmra.mrb[0].mxu0 %v3874
      %v4582 = vpop.f32.mrb[0].mxu0
      %v4583 = vadd.f32 0.0, %v4582
      %v4584 = vpop.f32.mrb[0].mxu0
      %v4585 = vpop.f32.mrb[0].mxu0
      %v4586 = vadd.f32 0.0, %v4585
      %v4587 = vpop.f32.mrb[0].mxu0
      %4588 = vmatprep.mubr.bf16.mxu0 0
      %4589 = vmatmul.mubr.bf16.gmra.mrb[0].mxu0 %v3877
      %v4590 = vpop.f32.mrb[0].mxu0
      %v4591 = vadd.f32 0.0, %v4590
      %v4592 = vpop.f32.mrb[0].mxu0
      %v4593 = vpop.f32.mrb[0].mxu0
      %v4594 = vadd.f32 0.0, %v4593
      %v4595 = vpop.f32.mrb[0].mxu0
      %4596 = vmatprep.mubr.bf16.mxu0 0
      %4597 = vmatmul.mubr.bf16.gmra.mrb[0].mxu0 %v3880
      %v4598 = vpop.f32.mrb[0].mxu0
      %v4599 = vadd.f32 0.0, %v4598
      %v4600 = vpop.f32.mrb[0].mxu0
      %v4601 = vpop.f32.mrb[0].mxu0
      %v4602 = vadd.f32 0.0, %v4601
      %v4603 = vpop.f32.mrb[0].mxu0
      %4604 = vmatprep.mubr.bf16.mxu0 0
      %4605 = vmatmul.mubr.bf16.gmra.mrb[0].mxu0 %v3883
      %v4606 = vpop.f32.mrb[0].mxu0
      %v4607 = vadd.f32 0.0, %v4606
      %v4608 = vpop.f32.mrb[0].mxu0
      %v4609 = vpop.f32.mrb[0].mxu0
      %v4610 = vadd.f32 0.0, %v4609
      %v4611 = vpop.f32.mrb[0].mxu0
      %4612 = vmatprep.mubr.bf16.mxu0 0
      %4613 = vmatmul.mubr.bf16.gmra.mrb[0].mxu0 %v3886
      %v4614 = vpop.f32.mrb[0].mxu0
      %v4615 = vadd.f32 0.0, %v4614
      %v4616 = vpop.f32.mrb[0].mxu0
      %v4617 = vpop.f32.mrb[0].mxu0
      %v4618 = vadd.f32 0.0, %v4617
      %v4619 = vpop.f32.mrb[0].mxu0
      %4620 = vmatprep.mubr.bf16.mxu0 0
      %4621 = vmatmul.mubr.bf16.gmra.mrb[0].mxu0 %v3889
      %v4622 = vpop.f32.mrb[0].mxu0
      %v4623 = vadd.f32 0.0, %v4622
      %v4624 = vpop.f32.mrb[0].mxu0
      %v4625 = vpop.f32.mrb[0].mxu0
      %v4626 = vadd.f32 0.0, %v4625
      %v4627 = vpop.f32.mrb[0].mxu0
      %4628 = vmatprep.mubr.bf16.mxu0 0
      %4629 = vmatmul.mubr.bf16.gmra.mrb[0].mxu0 %v3892
      %v4630 = vpop.f32.mrb[0].mxu0
      %v4631 = vadd.f32 0.0, %v4630
      %v4632 = vpop.f32.mrb[0].mxu0
      %v4633 = vpop.f32.mrb[0].mxu0
      %v4634 = vadd.f32 0.0, %v4633
      %v4635 = vpop.f32.mrb[0].mxu0
      %4636 = vmatprep.mubr.bf16.mxu0 0
      %4637 = vmatmul.mubr.bf16.gmra.mrb[0].mxu0 %v3895
      %v4638 = vpop.f32.mrb[0].mxu0
      %v4639 = vadd.f32 0.0, %v4638
      %v4640 = vpop.f32.mrb[0].mxu0
      %v4641 = vpop.f32.mrb[0].mxu0
      %v4642 = vadd.f32 0.0, %v4641
      %v4643 = vpop.f32.mrb[0].mxu0
      %4644 = vmatprep.mubr.bf16.mxu0 0
      %4645 = vmatmul.mubr.bf16.gmra.mrb[0].mxu0 %v3898
      %v4646 = vpop.f32.mrb[0].mxu0
      %v4647 = vadd.f32 0.0, %v4646
      %v4648 = vpop.f32.mrb[0].mxu0
      %v4649 = vpop.f32.mrb[0].mxu0
      %v4650 = vadd.f32 0.0, %v4649
      %v4651 = vpop.f32.mrb[0].mxu0
      %4652 = vmatprep.mubr.bf16.mxu0 0
      %4653 = vmatmul.mubr.bf16.gmra.mrb[0].mxu0 %v3901
      %v4654 = vpop.f32.mrb[0].mxu0
      %v4655 = vadd.f32 0.0, %v4654
      %v4656 = vpop.f32.mrb[0].mxu0
      %v4657 = vpop.f32.mrb[0].mxu0
      %v4658 = vadd.f32 0.0, %v4657
      %v4659 = vpop.f32.mrb[0].mxu0
      %4660 = vmatprep.mubr.bf16.mxu0 0
      %4661 = vmatmul.mubr.bf16.gmra.mrb[0].mxu0 %v3904
      %v4662 = vpop.f32.mrb[0].mxu0
      %v4663 = vadd.f32 0.0, %v4662
      %v4664 = vpop.f32.mrb[0].mxu0
      %v4665 = vpop.f32.mrb[0].mxu0
      %v4666 = vadd.f32 0.0, %v4665
      %v4667 = vpop.f32.mrb[0].mxu0
      %4668 = vmatprep.mubr.bf16.mxu0 0
      %4669 = vmatmul.mubr.bf16.gmra.mrb[0].mxu0 %v3907
      %v4670 = vpop.f32.mrb[0].mxu0
      %v4671 = vadd.f32 0.0, %v4670
      %v4672 = vpop.f32.mrb[0].mxu0
      %v4673 = vpop.f32.mrb[0].mxu0
      %v4674 = vadd.f32 0.0, %v4673
      %v4675 = vpop.f32.mrb[0].mxu0
      %4676 = vmatprep.mubr.bf16.mxu0 0
      %4677 = vmatmul.mubr.bf16.gmra.mrb[0].mxu0 %v3910
      %v4678 = vpop.f32.mrb[0].mxu0
      %v4679 = vadd.f32 0.0, %v4678
      %v4680 = vpop.f32.mrb[0].mxu0
      %v4681 = vpop.f32.mrb[0].mxu0
      %v4682 = vadd.f32 0.0, %v4681
      %v4683 = vpop.f32.mrb[0].mxu0
      %4684 = vmatprep.mubr.bf16.mxu0 0
      %4685 = vmatmul.mubr.bf16.gmra.mrb[0].mxu0 %v3913
      %v4686 = vpop.f32.mrb[0].mxu0
      %v4687 = vadd.f32 0.0, %v4686
      %v4688 = vpop.f32.mrb[0].mxu0
      %v4689 = vpop.f32.mrb[0].mxu0
      %v4690 = vadd.f32 0.0, %v4689
      %v4691 = vpop.f32.mrb[0].mxu0
      %4692 = vmatprep.mubr.bf16.mxu0 0
      %4693 = vmatmul.mubr.bf16.gmra.mrb[0].mxu0 %v4535
      %v4694 = vpop.f32.mrb[0].mxu0
      %v4695 = vadd.f32 0.0, %v4694
      %v4696 = vpop.f32.mrb[0].mxu0
      %v4697 = vpop.f32.mrb[0].mxu0
      %v4698 = vadd.f32 0.0, %v4697
      %v4699 = vpop.f32.mrb[0].mxu0
      %4700 = vdwg.mxu0
      %v4701 = vadd.f32 %v4492, %v4575
      %v4702 = vadd.f32 %v4493, %v4578
      %v4703 = vadd.f32 %v4494, %v4583
      %v4704 = vadd.f32 %v4495, %v4586
      %v4705 = vadd.f32 %v4496, %v4591
      %v4706 = vadd.f32 %v4497, %v4594
      %v4707 = vadd.f32 %v4498, %v4599
      %v4708 = vadd.f32 %v4499, %v4602
      %v4709 = vadd.f32 %v4500, %v4607
      %v4710 = vadd.f32 %v4501, %v4610
      %v4711 = vadd.f32 %v4502, %v4615
      %v4712 = vadd.f32 %v4503, %v4618
      %v4713 = vadd.f32 %v4504, %v4623
      %v4714 = vadd.f32 %v4505, %v4626
      %v4715 = vadd.f32 %v4506, %v4631
      %v4716 = vadd.f32 %v4507, %v4634
      %v4717 = vadd.f32 %v4508, %v4639
      %v4718 = vadd.f32 %v4509, %v4642
      %v4719 = vadd.f32 %v4510, %v4647
      %v4720 = vadd.f32 %v4511, %v4650
      %v4721 = vadd.f32 %v4512, %v4655
      %v4722 = vadd.f32 %v4513, %v4658
      %v4723 = vadd.f32 %v4514, %v4663
      %v4724 = vadd.f32 %v4515, %v4666
      %v4725 = vadd.f32 %v4516, %v4671
      %v4726 = vadd.f32 %v4517, %v4674
      %v4727 = vadd.f32 %v4518, %v4679
      %v4728 = vadd.f32 %v4519, %v4682
      %v4729 = vadd.f32 %v4520, %v4687
      %v4730 = vadd.f32 %v4521, %v4690
      %v4731 = vadd.f32 %v4522, %v4695
      %v4732 = vadd.f32 %v4523, %v4698
      %s4733 = scalar_lea.vmem %s3, 12
      %v4734 = vld [vmem:[%s4733] sm:$0x3]
      %v4736 = vsel %vm615, %v4734, 0
      %4738 = vmatprep.subr.bf16.mxu0 0
      %4739 = vmatpush1.bf16.msra.mxu0 %v4736
      %4740 = vmatprep.subr.bf16.mxu0 0
      %4741 = vmatpush1.bf16.msra.mxu0 0
      %4742 = vmatprep.subr.bf16.mxu0 0
      %4743 = vmatpush1.bf16.msra.mxu0 0
      %4744 = vmatprep.subr.bf16.mxu0 0
      %4745 = vmatpush1.bf16.msra.mxu0 0
      %4746 = vmatprep.subr.bf16.mxu0 0
      %4747 = vmatpush1.bf16.msra.mxu0 0
      %4748 = vmatprep.subr.bf16.mxu0 0
      %4749 = vmatpush1.bf16.msra.mxu0 0
      %4750 = vmatprep.subr.bf16.mxu0 0
      %4751 = vmatpush1.bf16.msra.mxu0 0
      %4752 = vmatprep.subr.bf16.mxu0 0
      %4753 = vmatpush1.bf16.msra.mxu0 0
      %4754 = vmatprep.subr.bf16.mxu0 0
      %4755 = vmatpush1.bf16.msra.mxu0 0
      %4756 = vmatprep.subr.bf16.mxu0 0
      %4757 = vmatpush1.bf16.msra.mxu0 0
      %4758 = vmatprep.subr.bf16.mxu0 0
      %4759 = vmatpush1.bf16.msra.mxu0 0
      %4760 = vmatprep.subr.bf16.mxu0 0
      %4761 = vmatpush1.bf16.msra.mxu0 0
      %4762 = vmatprep.subr.bf16.mxu0 0
      %4763 = vmatpush1.bf16.msra.mxu0 0
      %4764 = vmatprep.subr.bf16.mxu0 0
      %4765 = vmatpush1.bf16.msra.mxu0 0
      %4766 = vmatprep.subr.bf16.mxu0 0
      %4767 = vmatpush1.bf16.msra.mxu0 0
      %4768 = vmatprep.subr.bf16.mxu0 0
      %4769 = vmatpush1.bf16.msra.mxu0 0
      %4770 = vmatprep.mubr.bf16.mxu0 0
      %4771 = vmatmul.mubr.bf16.gmra.mrb[0].mxu0 %v3118
      %v4772 = vpop.f32.mrb[0].mxu0
      %v4773 = vadd.f32 0.0, %v4772
      %v4774 = vpop.f32.mrb[0].mxu0
      %v4775 = vpop.f32.mrb[0].mxu0
      %v4776 = vadd.f32 0.0, %v4775
      %v4777 = vpop.f32.mrb[0].mxu0
      %4778 = vmatprep.mubr.bf16.mxu0 0
      %4779 = vmatmul.mubr.bf16.gmra.mrb[0].mxu0 %v3121
      %v4780 = vpop.f32.mrb[0].mxu0
      %v4781 = vadd.f32 0.0, %v4780
      %v4782 = vpop.f32.mrb[0].mxu0
      %v4783 = vpop.f32.mrb[0].mxu0
      %v4784 = vadd.f32 0.0, %v4783
      %v4785 = vpop.f32.mrb[0].mxu0
      %4786 = vmatprep.mubr.bf16.mxu0 0
      %4787 = vmatmul.mubr.bf16.gmra.mrb[0].mxu0 %v3124
      %v4788 = vpop.f32.mrb[0].mxu0
      %v4789 = vadd.f32 0.0, %v4788
      %v4790 = vpop.f32.mrb[0].mxu0
      %v4791 = vpop.f32.mrb[0].mxu0
      %v4792 = vadd.f32 0.0, %v4791
      %v4793 = vpop.f32.mrb[0].mxu0
      %4794 = vmatprep.mubr.bf16.mxu0 0
      %4795 = vmatmul.mubr.bf16.gmra.mrb[0].mxu0 %v3127
      %v4796 = vpop.f32.mrb[0].mxu0
      %v4797 = vadd.f32 0.0, %v4796
      %v4798 = vpop.f32.mrb[0].mxu0
      %v4799 = vpop.f32.mrb[0].mxu0
      %v4800 = vadd.f32 0.0, %v4799
      %v4801 = vpop.f32.mrb[0].mxu0
      %4802 = vmatprep.mubr.bf16.mxu0 0
      %4803 = vmatmul.mubr.bf16.gmra.mrb[0].mxu0 %v3130
      %v4804 = vpop.f32.mrb[0].mxu0
      %v4805 = vadd.f32 0.0, %v4804
      %v4806 = vpop.f32.mrb[0].mxu0
      %v4807 = vpop.f32.mrb[0].mxu0
      %v4808 = vadd.f32 0.0, %v4807
      %v4809 = vpop.f32.mrb[0].mxu0
      %4810 = vmatprep.mubr.bf16.mxu0 0
      %4811 = vmatmul.mubr.bf16.gmra.mrb[0].mxu0 %v3133
      %v4812 = vpop.f32.mrb[0].mxu0
      %v4813 = vadd.f32 0.0, %v4812
      %v4814 = vpop.f32.mrb[0].mxu0
      %v4815 = vpop.f32.mrb[0].mxu0
      %v4816 = vadd.f32 0.0, %v4815
      %v4817 = vpop.f32.mrb[0].mxu0
      %4818 = vmatprep.mubr.bf16.mxu0 0
      %4819 = vmatmul.mubr.bf16.gmra.mrb[0].mxu0 %v3136
      %v4820 = vpop.f32.mrb[0].mxu0
      %v4821 = vadd.f32 0.0, %v4820
      %v4822 = vpop.f32.mrb[0].mxu0
      %v4823 = vpop.f32.mrb[0].mxu0
      %v4824 = vadd.f32 0.0, %v4823
      %v4825 = vpop.f32.mrb[0].mxu0
      %4826 = vmatprep.mubr.bf16.mxu0 0
      %4827 = vmatmul.mubr.bf16.gmra.mrb[0].mxu0 %v3139
      %v4828 = vpop.f32.mrb[0].mxu0
      %v4829 = vadd.f32 0.0, %v4828
      %v4830 = vpop.f32.mrb[0].mxu0
      %v4831 = vpop.f32.mrb[0].mxu0
      %v4832 = vadd.f32 0.0, %v4831
      %v4833 = vpop.f32.mrb[0].mxu0
      %4834 = vmatprep.mubr.bf16.mxu0 0
      %4835 = vmatmul.mubr.bf16.gmra.mrb[0].mxu0 %v3142
      %v4836 = vpop.f32.mrb[0].mxu0
      %v4837 = vadd.f32 0.0, %v4836
      %v4838 = vpop.f32.mrb[0].mxu0
      %v4839 = vpop.f32.mrb[0].mxu0
      %v4840 = vadd.f32 0.0, %v4839
      %v4841 = vpop.f32.mrb[0].mxu0
      %4842 = vmatprep.mubr.bf16.mxu0 0
      %4843 = vmatmul.mubr.bf16.gmra.mrb[0].mxu0 %v3145
      %v4844 = vpop.f32.mrb[0].mxu0
      %v4845 = vadd.f32 0.0, %v4844
      %v4846 = vpop.f32.mrb[0].mxu0
      %v4847 = vpop.f32.mrb[0].mxu0
      %v4848 = vadd.f32 0.0, %v4847
      %v4849 = vpop.f32.mrb[0].mxu0
      %4850 = vmatprep.mubr.bf16.mxu0 0
      %4851 = vmatmul.mubr.bf16.gmra.mrb[0].mxu0 %v3148
      %v4852 = vpop.f32.mrb[0].mxu0
      %v4853 = vadd.f32 0.0, %v4852
      %v4854 = vpop.f32.mrb[0].mxu0
      %v4855 = vpop.f32.mrb[0].mxu0
      %v4856 = vadd.f32 0.0, %v4855
      %v4857 = vpop.f32.mrb[0].mxu0
      %4858 = vmatprep.mubr.bf16.mxu0 0
      %4859 = vmatmul.mubr.bf16.gmra.mrb[0].mxu0 %v3151
      %v4860 = vpop.f32.mrb[0].mxu0
      %v4861 = vadd.f32 0.0, %v4860
      %v4862 = vpop.f32.mrb[0].mxu0
      %v4863 = vpop.f32.mrb[0].mxu0
      %v4864 = vadd.f32 0.0, %v4863
      %v4865 = vpop.f32.mrb[0].mxu0
      %4866 = vmatprep.mubr.bf16.mxu0 0
      %4867 = vmatmul.mubr.bf16.gmra.mrb[0].mxu0 %v3154
      %v4868 = vpop.f32.mrb[0].mxu0
      %v4869 = vadd.f32 0.0, %v4868
      %v4870 = vpop.f32.mrb[0].mxu0
      %v4871 = vpop.f32.mrb[0].mxu0
      %v4872 = vadd.f32 0.0, %v4871
      %v4873 = vpop.f32.mrb[0].mxu0
      %4874 = vmatprep.mubr.bf16.mxu0 0
      %4875 = vmatmul.mubr.bf16.gmra.mrb[0].mxu0 %v3157
      %v4876 = vpop.f32.mrb[0].mxu0
      %v4877 = vadd.f32 0.0, %v4876
      %v4878 = vpop.f32.mrb[0].mxu0
      %v4879 = vpop.f32.mrb[0].mxu0
      %v4880 = vadd.f32 0.0, %v4879
      %v4881 = vpop.f32.mrb[0].mxu0
      %4882 = vmatprep.mubr.bf16.mxu0 0
      %4883 = vmatmul.mubr.bf16.gmra.mrb[0].mxu0 %v4115
      %v4884 = vpop.f32.mrb[0].mxu0
      %v4885 = vadd.f32 0.0, %v4884
      %v4886 = vpop.f32.mrb[0].mxu0
      %v4887 = vpop.f32.mrb[0].mxu0
      %v4888 = vadd.f32 0.0, %v4887
      %v4889 = vpop.f32.mrb[0].mxu0
      %4890 = vmatprep.mubr.bf16.mxu0 0
      %4891 = vmatmul.mubr.bf16.gmra.mrb[0].mxu0 %v568
      %v4892 = vpop.f32.mrb[0].mxu0
      %v4893 = vadd.f32 0.0, %v4892
      %v4894 = vpop.f32.mrb[0].mxu0
      %v4895 = vpop.f32.mrb[0].mxu0
      %v4896 = vadd.f32 0.0, %v4895
      %v4897 = vpop.f32.mrb[0].mxu0
      %4898 = vdwg.mxu0
      %v4899 = vadd.f32 %v4701, %v4773
      %v4900 = vadd.f32 %v4702, %v4776
      %v4901 = vadd.f32 %v4703, %v4781
      %v4902 = vadd.f32 %v4704, %v4784
      %v4903 = vadd.f32 %v4705, %v4789
      %v4904 = vadd.f32 %v4706, %v4792
      %v4905 = vadd.f32 %v4707, %v4797
      %v4906 = vadd.f32 %v4708, %v4800
      %v4907 = vadd.f32 %v4709, %v4805
      %v4908 = vadd.f32 %v4710, %v4808
      %v4909 = vadd.f32 %v4711, %v4813
      %v4910 = vadd.f32 %v4712, %v4816
      %v4911 = vadd.f32 %v4713, %v4821
      %v4912 = vadd.f32 %v4714, %v4824
      %v4913 = vadd.f32 %v4715, %v4829
      %v4914 = vadd.f32 %v4716, %v4832
      %v4915 = vadd.f32 %v4717, %v4837
      %v4916 = vadd.f32 %v4718, %v4840
      %v4917 = vadd.f32 %v4719, %v4845
      %v4918 = vadd.f32 %v4720, %v4848
      %v4919 = vadd.f32 %v4721, %v4853
      %v4920 = vadd.f32 %v4722, %v4856
      %v4921 = vadd.f32 %v4723, %v4861
      %v4922 = vadd.f32 %v4724, %v4864
      %v4923 = vadd.f32 %v4725, %v4869
      %v4924 = vadd.f32 %v4726, %v4872
      %v4925 = vadd.f32 %v4727, %v4877
      %v4926 = vadd.f32 %v4728, %v4880
      %v4927 = vadd.f32 %v4729, %v4885
      %v4928 = vadd.f32 %v4730, %v4888
      %v4929 = vadd.f32 %v4731, %v4893
      %v4930 = vadd.f32 %v4732, %v4896
      %s4931 = scalar_lea.vmem %s3, 14
      %v4932 = vld [vmem:[%s4931] sm:$0x3]
      %v4934 = vsel %vm615, %v4932, 0
      %4936 = vmatprep.subr.bf16.mxu0 0
      %4937 = vmatpush1.bf16.msra.mxu0 %v4934
      %4938 = vmatprep.subr.bf16.mxu0 0
      %4939 = vmatpush1.bf16.msra.mxu0 0
      %4940 = vmatprep.subr.bf16.mxu0 0
      %4941 = vmatpush1.bf16.msra.mxu0 0
      %4942 = vmatprep.subr.bf16.mxu0 0
      %4943 = vmatpush1.bf16.msra.mxu0 0
      %4944 = vmatprep.subr.bf16.mxu0 0
      %4945 = vmatpush1.bf16.msra.mxu0 0
      %4946 = vmatprep.subr.bf16.mxu0 0
      %4947 = vmatpush1.bf16.msra.mxu0 0
      %4948 = vmatprep.subr.bf16.mxu0 0
      %4949 = vmatpush1.bf16.msra.mxu0 0
      %4950 = vmatprep.subr.bf16.mxu0 0
      %4951 = vmatpush1.bf16.msra.mxu0 0
      %4952 = vmatprep.subr.bf16.mxu0 0
      %4953 = vmatpush1.bf16.msra.mxu0 0
      %4954 = vmatprep.subr.bf16.mxu0 0
      %4955 = vmatpush1.bf16.msra.mxu0 0
      %4956 = vmatprep.subr.bf16.mxu0 0
      %4957 = vmatpush1.bf16.msra.mxu0 0
      %4958 = vmatprep.subr.bf16.mxu0 0
      %4959 = vmatpush1.bf16.msra.mxu0 0
      %4960 = vmatprep.subr.bf16.mxu0 0
      %4961 = vmatpush1.bf16.msra.mxu0 0
      %4962 = vmatprep.subr.bf16.mxu0 0
      %4963 = vmatpush1.bf16.msra.mxu0 0
      %4964 = vmatprep.subr.bf16.mxu0 0
      %4965 = vmatpush1.bf16.msra.mxu0 0
      %4966 = vmatprep.subr.bf16.mxu0 0
      %4967 = vmatpush1.bf16.msra.mxu0 0
      %4968 = vmatprep.mubr.bf16.mxu0 0
      %4969 = vmatmul.mubr.bf16.gmra.mrb[0].mxu0 %v3511
      %v4970 = vpop.f32.mrb[0].mxu0
      %v4971 = vadd.f32 0.0, %v4970
      %v4972 = vpop.f32.mrb[0].mxu0
      %v4973 = vpop.f32.mrb[0].mxu0
      %v4974 = vadd.f32 0.0, %v4973
      %v4975 = vpop.f32.mrb[0].mxu0
      %4976 = vmatprep.mubr.bf16.mxu0 0
      %4977 = vmatmul.mubr.bf16.gmra.mrb[0].mxu0 %v3514
      %v4978 = vpop.f32.mrb[0].mxu0
      %v4979 = vadd.f32 0.0, %v4978
      %v4980 = vpop.f32.mrb[0].mxu0
      %v4981 = vpop.f32.mrb[0].mxu0
      %v4982 = vadd.f32 0.0, %v4981
      %v4983 = vpop.f32.mrb[0].mxu0
      %4984 = vmatprep.mubr.bf16.mxu0 0
      %4985 = vmatmul.mubr.bf16.gmra.mrb[0].mxu0 %v3517
      %v4986 = vpop.f32.mrb[0].mxu0
      %v4987 = vadd.f32 0.0, %v4986
      %v4988 = vpop.f32.mrb[0].mxu0
      %v4989 = vpop.f32.mrb[0].mxu0
      %v4990 = vadd.f32 0.0, %v4989
      %v4991 = vpop.f32.mrb[0].mxu0
      %4992 = vmatprep.mubr.bf16.mxu0 0
      %4993 = vmatmul.mubr.bf16.gmra.mrb[0].mxu0 %v3520
      %v4994 = vpop.f32.mrb[0].mxu0
      %v4995 = vadd.f32 0.0, %v4994
      %v4996 = vpop.f32.mrb[0].mxu0
      %v4997 = vpop.f32.mrb[0].mxu0
      %v4998 = vadd.f32 0.0, %v4997
      %v4999 = vpop.f32.mrb[0].mxu0
      %5000 = vmatprep.mubr.bf16.mxu0 0
      %5001 = vmatmul.mubr.bf16.gmra.mrb[0].mxu0 %v3523
      %v5002 = vpop.f32.mrb[0].mxu0
      %v5003 = vadd.f32 0.0, %v5002
      %v5004 = vpop.f32.mrb[0].mxu0
      %v5005 = vpop.f32.mrb[0].mxu0
      %v5006 = vadd.f32 0.0, %v5005
      %v5007 = vpop.f32.mrb[0].mxu0
      %5008 = vmatprep.mubr.bf16.mxu0 0
      %5009 = vmatmul.mubr.bf16.gmra.mrb[0].mxu0 %v3526
      %v5010 = vpop.f32.mrb[0].mxu0
      %v5011 = vadd.f32 0.0, %v5010
      %v5012 = vpop.f32.mrb[0].mxu0
      %v5013 = vpop.f32.mrb[0].mxu0
      %v5014 = vadd.f32 0.0, %v5013
      %v5015 = vpop.f32.mrb[0].mxu0
      %5016 = vmatprep.mubr.bf16.mxu0 0
      %5017 = vmatmul.mubr.bf16.gmra.mrb[0].mxu0 %v3529
      %v5018 = vpop.f32.mrb[0].mxu0
      %v5019 = vadd.f32 0.0, %v5018
      %v5020 = vpop.f32.mrb[0].mxu0
      %v5021 = vpop.f32.mrb[0].mxu0
      %v5022 = vadd.f32 0.0, %v5021
      %v5023 = vpop.f32.mrb[0].mxu0
      %5024 = vmatprep.mubr.bf16.mxu0 0
      %5025 = vmatmul.mubr.bf16.gmra.mrb[0].mxu0 %v3532
      %v5026 = vpop.f32.mrb[0].mxu0
      %v5027 = vadd.f32 0.0, %v5026
      %v5028 = vpop.f32.mrb[0].mxu0
      %v5029 = vpop.f32.mrb[0].mxu0
      %v5030 = vadd.f32 0.0, %v5029
      %v5031 = vpop.f32.mrb[0].mxu0
      %5032 = vmatprep.mubr.bf16.mxu0 0
      %5033 = vmatmul.mubr.bf16.gmra.mrb[0].mxu0 %v3535
      %v5034 = vpop.f32.mrb[0].mxu0
      %v5035 = vadd.f32 0.0, %v5034
      %v5036 = vpop.f32.mrb[0].mxu0
      %v5037 = vpop.f32.mrb[0].mxu0
      %v5038 = vadd.f32 0.0, %v5037
      %v5039 = vpop.f32.mrb[0].mxu0
      %5040 = vmatprep.mubr.bf16.mxu0 0
      %5041 = vmatmul.mubr.bf16.gmra.mrb[0].mxu0 %v3538
      %v5042 = vpop.f32.mrb[0].mxu0
      %v5043 = vadd.f32 0.0, %v5042
      %v5044 = vpop.f32.mrb[0].mxu0
      %v5045 = vpop.f32.mrb[0].mxu0
      %v5046 = vadd.f32 0.0, %v5045
      %v5047 = vpop.f32.mrb[0].mxu0
      %5048 = vmatprep.mubr.bf16.mxu0 0
      %5049 = vmatmul.mubr.bf16.gmra.mrb[0].mxu0 %v3541
      %v5050 = vpop.f32.mrb[0].mxu0
      %v5051 = vadd.f32 0.0, %v5050
      %v5052 = vpop.f32.mrb[0].mxu0
      %v5053 = vpop.f32.mrb[0].mxu0
      %v5054 = vadd.f32 0.0, %v5053
      %v5055 = vpop.f32.mrb[0].mxu0
      %5056 = vmatprep.mubr.bf16.mxu0 0
      %5057 = vmatmul.mubr.bf16.gmra.mrb[0].mxu0 %v3544
      %v5058 = vpop.f32.mrb[0].mxu0
      %v5059 = vadd.f32 0.0, %v5058
      %v5060 = vpop.f32.mrb[0].mxu0
      %v5061 = vpop.f32.mrb[0].mxu0
      %v5062 = vadd.f32 0.0, %v5061
      %v5063 = vpop.f32.mrb[0].mxu0
      %5064 = vmatprep.mubr.bf16.mxu0 0
      %5065 = vmatmul.mubr.bf16.gmra.mrb[0].mxu0 %v3547
      %v5066 = vpop.f32.mrb[0].mxu0
      %v5067 = vadd.f32 0.0, %v5066
      %v5068 = vpop.f32.mrb[0].mxu0
      %v5069 = vpop.f32.mrb[0].mxu0
      %v5070 = vadd.f32 0.0, %v5069
      %v5071 = vpop.f32.mrb[0].mxu0
      %5072 = vmatprep.mubr.bf16.mxu0 0
      %5073 = vmatmul.mubr.bf16.gmra.mrb[0].mxu0 %v3550
      %v5074 = vpop.f32.mrb[0].mxu0
      %v5075 = vadd.f32 0.0, %v5074
      %v5076 = vpop.f32.mrb[0].mxu0
      %v5077 = vpop.f32.mrb[0].mxu0
      %v5078 = vadd.f32 0.0, %v5077
      %v5079 = vpop.f32.mrb[0].mxu0
      %5080 = vmatprep.mubr.bf16.mxu0 0
      %5081 = vmatmul.mubr.bf16.gmra.mrb[0].mxu0 %v4326
      %v5082 = vpop.f32.mrb[0].mxu0
      %v5083 = vadd.f32 0.0, %v5082
      %v5084 = vpop.f32.mrb[0].mxu0
      %v5085 = vpop.f32.mrb[0].mxu0
      %v5086 = vadd.f32 0.0, %v5085
      %v5087 = vpop.f32.mrb[0].mxu0
      %5088 = vmatprep.mubr.bf16.mxu0 0
      %5089 = vmatmul.mubr.bf16.gmra.mrb[0].mxu0 %v976
      %v5090 = vpop.f32.mrb[0].mxu0
      %v5091 = vadd.f32 0.0, %v5090
      %v5092 = vpop.f32.mrb[0].mxu0
      %v5093 = vpop.f32.mrb[0].mxu0
      %v5094 = vadd.f32 0.0, %v5093
      %v5095 = vpop.f32.mrb[0].mxu0
      %5096 = vdwg.mxu0
      %v5097 = vadd.f32 %v4899, %v4971
      %v5098 = vadd.f32 %v4900, %v4974
      %v5099 = vadd.f32 %v4901, %v4979
      %v5100 = vadd.f32 %v4902, %v4982
      %v5101 = vadd.f32 %v4903, %v4987
      %v5102 = vadd.f32 %v4904, %v4990
      %v5103 = vadd.f32 %v4905, %v4995
      %v5104 = vadd.f32 %v4906, %v4998
      %v5105 = vadd.f32 %v4907, %v5003
      %v5106 = vadd.f32 %v4908, %v5006
      %v5107 = vadd.f32 %v4909, %v5011
      %v5108 = vadd.f32 %v4910, %v5014
      %v5109 = vadd.f32 %v4911, %v5019
      %v5110 = vadd.f32 %v4912, %v5022
      %v5111 = vadd.f32 %v4913, %v5027
      %v5112 = vadd.f32 %v4914, %v5030
      %v5113 = vadd.f32 %v4915, %v5035
      %v5114 = vadd.f32 %v4916, %v5038
      %v5115 = vadd.f32 %v4917, %v5043
      %v5116 = vadd.f32 %v4918, %v5046
      %v5117 = vadd.f32 %v4919, %v5051
      %v5118 = vadd.f32 %v4920, %v5054
      %v5119 = vadd.f32 %v4921, %v5059
      %v5120 = vadd.f32 %v4922, %v5062
      %v5121 = vadd.f32 %v4923, %v5067
      %v5122 = vadd.f32 %v4924, %v5070
      %v5123 = vadd.f32 %v4925, %v5075
      %v5124 = vadd.f32 %v4926, %v5078
      %v5125 = vadd.f32 %v4927, %v5083
      %v5126 = vadd.f32 %v4928, %v5086
      %v5127 = vadd.f32 %v4929, %v5091
      %v5128 = vadd.f32 %v4930, %v5094
      %s5129 = scalar_lea.vmem %s3, 16
      %v5130 = vld [vmem:[%s5129] sm:$0x3]
      %v5132 = vsel %vm615, %v5130, 0
      %5134 = vmatprep.subr.bf16.mxu0 0
      %5135 = vmatpush1.bf16.msra.mxu0 %v5132
      %5136 = vmatprep.subr.bf16.mxu0 0
      %5137 = vmatpush1.bf16.msra.mxu0 0
      %5138 = vmatprep.subr.bf16.mxu0 0
      %5139 = vmatpush1.bf16.msra.mxu0 0
      %5140 = vmatprep.subr.bf16.mxu0 0
      %5141 = vmatpush1.bf16.msra.mxu0 0
      %5142 = vmatprep.subr.bf16.mxu0 0
      %5143 = vmatpush1.bf16.msra.mxu0 0
      %5144 = vmatprep.subr.bf16.mxu0 0
      %5145 = vmatpush1.bf16.msra.mxu0 0
      %5146 = vmatprep.subr.bf16.mxu0 0
      %5147 = vmatpush1.bf16.msra.mxu0 0
      %5148 = vmatprep.subr.bf16.mxu0 0
      %5149 = vmatpush1.bf16.msra.mxu0 0
      %5150 = vmatprep.subr.bf16.mxu0 0
      %5151 = vmatpush1.bf16.msra.mxu0 0
      %5152 = vmatprep.subr.bf16.mxu0 0
      %5153 = vmatpush1.bf16.msra.mxu0 0
      %5154 = vmatprep.subr.bf16.mxu0 0
      %5155 = vmatpush1.bf16.msra.mxu0 0
      %5156 = vmatprep.subr.bf16.mxu0 0
      %5157 = vmatpush1.bf16.msra.mxu0 0
      %5158 = vmatprep.subr.bf16.mxu0 0
      %5159 = vmatpush1.bf16.msra.mxu0 0
      %5160 = vmatprep.subr.bf16.mxu0 0
      %5161 = vmatpush1.bf16.msra.mxu0 0
      %5162 = vmatprep.subr.bf16.mxu0 0
      %5163 = vmatpush1.bf16.msra.mxu0 0
      %5164 = vmatprep.subr.bf16.mxu0 0
      %5165 = vmatpush1.bf16.msra.mxu0 0
      %5166 = vmatprep.mubr.bf16.mxu0 0
      %5167 = vmatmul.mubr.bf16.gmra.mrb[0].mxu0 %v3874
      %v5168 = vpop.f32.mrb[0].mxu0
      %v5169 = vadd.f32 0.0, %v5168
      %v5170 = vpop.f32.mrb[0].mxu0
      %v5171 = vpop.f32.mrb[0].mxu0
      %v5172 = vadd.f32 0.0, %v5171
      %v5173 = vpop.f32.mrb[0].mxu0
      %5174 = vmatprep.mubr.bf16.mxu0 0
      %5175 = vmatmul.mubr.bf16.gmra.mrb[0].mxu0 %v3877
      %v5176 = vpop.f32.mrb[0].mxu0
      %v5177 = vadd.f32 0.0, %v5176
      %v5178 = vpop.f32.mrb[0].mxu0
      %v5179 = vpop.f32.mrb[0].mxu0
      %v5180 = vadd.f32 0.0, %v5179
      %v5181 = vpop.f32.mrb[0].mxu0
      %5182 = vmatprep.mubr.bf16.mxu0 0
      %5183 = vmatmul.mubr.bf16.gmra.mrb[0].mxu0 %v3880
      %v5184 = vpop.f32.mrb[0].mxu0
      %v5185 = vadd.f32 0.0, %v5184
      %v5186 = vpop.f32.mrb[0].mxu0
      %v5187 = vpop.f32.mrb[0].mxu0
      %v5188 = vadd.f32 0.0, %v5187
      %v5189 = vpop.f32.mrb[0].mxu0
      %5190 = vmatprep.mubr.bf16.mxu0 0
      %5191 = vmatmul.mubr.bf16.gmra.mrb[0].mxu0 %v3883
      %v5192 = vpop.f32.mrb[0].mxu0
      %v5193 = vadd.f32 0.0, %v5192
      %v5194 = vpop.f32.mrb[0].mxu0
      %v5195 = vpop.f32.mrb[0].mxu0
      %v5196 = vadd.f32 0.0, %v5195
      %v5197 = vpop.f32.mrb[0].mxu0
      %5198 = vmatprep.mubr.bf16.mxu0 0
      %5199 = vmatmul.mubr.bf16.gmra.mrb[0].mxu0 %v3886
      %v5200 = vpop.f32.mrb[0].mxu0
      %v5201 = vadd.f32 0.0, %v5200
      %v5202 = vpop.f32.mrb[0].mxu0
      %v5203 = vpop.f32.mrb[0].mxu0
      %v5204 = vadd.f32 0.0, %v5203
      %v5205 = vpop.f32.mrb[0].mxu0
      %5206 = vmatprep.mubr.bf16.mxu0 0
      %5207 = vmatmul.mubr.bf16.gmra.mrb[0].mxu0 %v3889
      %v5208 = vpop.f32.mrb[0].mxu0
      %v5209 = vadd.f32 0.0, %v5208
      %v5210 = vpop.f32.mrb[0].mxu0
      %v5211 = vpop.f32.mrb[0].mxu0
      %v5212 = vadd.f32 0.0, %v5211
      %v5213 = vpop.f32.mrb[0].mxu0
      %5214 = vmatprep.mubr.bf16.mxu0 0
      %5215 = vmatmul.mubr.bf16.gmra.mrb[0].mxu0 %v3892
      %v5216 = vpop.f32.mrb[0].mxu0
      %v5217 = vadd.f32 0.0, %v5216
      %v5218 = vpop.f32.mrb[0].mxu0
      %v5219 = vpop.f32.mrb[0].mxu0
      %v5220 = vadd.f32 0.0, %v5219
      %v5221 = vpop.f32.mrb[0].mxu0
      %5222 = vmatprep.mubr.bf16.mxu0 0
      %5223 = vmatmul.mubr.bf16.gmra.mrb[0].mxu0 %v3895
      %v5224 = vpop.f32.mrb[0].mxu0
      %v5225 = vadd.f32 0.0, %v5224
      %v5226 = vpop.f32.mrb[0].mxu0
      %v5227 = vpop.f32.mrb[0].mxu0
      %v5228 = vadd.f32 0.0, %v5227
      %v5229 = vpop.f32.mrb[0].mxu0
      %5230 = vmatprep.mubr.bf16.mxu0 0
      %5231 = vmatmul.mubr.bf16.gmra.mrb[0].mxu0 %v3898
      %v5232 = vpop.f32.mrb[0].mxu0
      %v5233 = vadd.f32 0.0, %v5232
      %v5234 = vpop.f32.mrb[0].mxu0
      %v5235 = vpop.f32.mrb[0].mxu0
      %v5236 = vadd.f32 0.0, %v5235
      %v5237 = vpop.f32.mrb[0].mxu0
      %5238 = vmatprep.mubr.bf16.mxu0 0
      %5239 = vmatmul.mubr.bf16.gmra.mrb[0].mxu0 %v3901
      %v5240 = vpop.f32.mrb[0].mxu0
      %v5241 = vadd.f32 0.0, %v5240
      %v5242 = vpop.f32.mrb[0].mxu0
      %v5243 = vpop.f32.mrb[0].mxu0
      %v5244 = vadd.f32 0.0, %v5243
      %v5245 = vpop.f32.mrb[0].mxu0
      %5246 = vmatprep.mubr.bf16.mxu0 0
      %5247 = vmatmul.mubr.bf16.gmra.mrb[0].mxu0 %v3904
      %v5248 = vpop.f32.mrb[0].mxu0
      %v5249 = vadd.f32 0.0, %v5248
      %v5250 = vpop.f32.mrb[0].mxu0
      %v5251 = vpop.f32.mrb[0].mxu0
      %v5252 = vadd.f32 0.0, %v5251
      %v5253 = vpop.f32.mrb[0].mxu0
      %5254 = vmatprep.mubr.bf16.mxu0 0
      %5255 = vmatmul.mubr.bf16.gmra.mrb[0].mxu0 %v3907
      %v5256 = vpop.f32.mrb[0].mxu0
      %v5257 = vadd.f32 0.0, %v5256
      %v5258 = vpop.f32.mrb[0].mxu0
      %v5259 = vpop.f32.mrb[0].mxu0
      %v5260 = vadd.f32 0.0, %v5259
      %v5261 = vpop.f32.mrb[0].mxu0
      %5262 = vmatprep.mubr.bf16.mxu0 0
      %5263 = vmatmul.mubr.bf16.gmra.mrb[0].mxu0 %v3910
      %v5264 = vpop.f32.mrb[0].mxu0
      %v5265 = vadd.f32 0.0, %v5264
      %v5266 = vpop.f32.mrb[0].mxu0
      %v5267 = vpop.f32.mrb[0].mxu0
      %v5268 = vadd.f32 0.0, %v5267
      %v5269 = vpop.f32.mrb[0].mxu0
      %5270 = vmatprep.mubr.bf16.mxu0 0
      %5271 = vmatmul.mubr.bf16.gmra.mrb[0].mxu0 %v3913
      %v5272 = vpop.f32.mrb[0].mxu0
      %v5273 = vadd.f32 0.0, %v5272
      %v5274 = vpop.f32.mrb[0].mxu0
      %v5275 = vpop.f32.mrb[0].mxu0
      %v5276 = vadd.f32 0.0, %v5275
      %v5277 = vpop.f32.mrb[0].mxu0
      %5278 = vmatprep.mubr.bf16.mxu0 0
      %5279 = vmatmul.mubr.bf16.gmra.mrb[0].mxu0 %v4535
      %v5280 = vpop.f32.mrb[0].mxu0
      %v5281 = vadd.f32 0.0, %v5280
      %v5282 = vpop.f32.mrb[0].mxu0
      %v5283 = vpop.f32.mrb[0].mxu0
      %v5284 = vadd.f32 0.0, %v5283
      %v5285 = vpop.f32.mrb[0].mxu0
      %5286 = vmatprep.mubr.bf16.mxu0 0
      %5287 = vmatmul.mubr.bf16.gmra.mrb[0].mxu0 %v1351
      %v5288 = vpop.f32.mrb[0].mxu0
      %v5289 = vadd.f32 0.0, %v5288
      %v5290 = vpop.f32.mrb[0].mxu0
      %v5291 = vpop.f32.mrb[0].mxu0
      %v5292 = vadd.f32 0.0, %v5291
      %v5293 = vpop.f32.mrb[0].mxu0
      %5294 = vdwg.mxu0
      %v5295 = vadd.f32 %v5097, %v5169
      %v5296 = vadd.f32 %v5098, %v5172
      %v5297 = vadd.f32 %v5099, %v5177
      %v5298 = vadd.f32 %v5100, %v5180
      %v5299 = vadd.f32 %v5101, %v5185
      %v5300 = vadd.f32 %v5102, %v5188
      %v5301 = vadd.f32 %v5103, %v5193
      %v5302 = vadd.f32 %v5104, %v5196
      %v5303 = vadd.f32 %v5105, %v5201
      %v5304 = vadd.f32 %v5106, %v5204
      %v5305 = vadd.f32 %v5107, %v5209
      %v5306 = vadd.f32 %v5108, %v5212
      %v5307 = vadd.f32 %v5109, %v5217
      %v5308 = vadd.f32 %v5110, %v5220
      %v5309 = vadd.f32 %v5111, %v5225
      %v5310 = vadd.f32 %v5112, %v5228
      %v5311 = vadd.f32 %v5113, %v5233
      %v5312 = vadd.f32 %v5114, %v5236
      %v5313 = vadd.f32 %v5115, %v5241
      %v5314 = vadd.f32 %v5116, %v5244
      %v5315 = vadd.f32 %v5117, %v5249
      %v5316 = vadd.f32 %v5118, %v5252
      %v5317 = vadd.f32 %v5119, %v5257
      %v5318 = vadd.f32 %v5120, %v5260
      %v5319 = vadd.f32 %v5121, %v5265
      %v5320 = vadd.f32 %v5122, %v5268
      %v5321 = vadd.f32 %v5123, %v5273
      %v5322 = vadd.f32 %v5124, %v5276
      %v5323 = vadd.f32 %v5125, %v5281
      %v5324 = vadd.f32 %v5126, %v5284
      %v5325 = vadd.f32 %v5127, %v5289
      %v5326 = vadd.f32 %v5128, %v5292
      %vm5327 = vcmask 64512
      %5328 = vst.msk [vmem:[%s244] sm:$0xff] %vm5327, %v5295
      %5329 = vst.msk [vmem:[%s244 + $0x8] sm:$0xff] %vm5327, %v5296
      %5330 = vst.msk [vmem:[%s244 + $0x10] sm:$0xff] %vm5327, %v5297
      %5331 = vst.msk [vmem:[%s244 + $0x18] sm:$0xff] %vm5327, %v5298
      %5332 = vst.msk [vmem:[%s244 + $0x20] sm:$0xff] %vm5327, %v5299
      %5333 = vst.msk [vmem:[%s244 + $0x28] sm:$0xff] %vm5327, %v5300
      %5334 = vst.msk [vmem:[%s244 + $0x30] sm:$0xff] %vm5327, %v5301
      %5335 = vst.msk [vmem:[%s244 + $0x38] sm:$0xff] %vm5327, %v5302
      %5336 = vst.msk [vmem:[%s244 + $0x40] sm:$0xff] %vm5327, %v5303
      %5337 = vst.msk [vmem:[%s244 + $0x48] sm:$0xff] %vm5327, %v5304
      %5338 = vst.msk [vmem:[%s244 + $0x50] sm:$0xff] %vm5327, %v5305
      %5339 = vst.msk [vmem:[%s244 + $0x58] sm:$0xff] %vm5327, %v5306
      %5340 = vst.msk [vmem:[%s244 + $0x60] sm:$0xff] %vm5327, %v5307
      %5341 = vst.msk [vmem:[%s244 + $0x68] sm:$0xff] %vm5327, %v5308
      %5342 = vst.msk [vmem:[%s244 + $0x70] sm:$0xff] %vm5327, %v5309
      %5343 = vst.msk [vmem:[%s244 + $0x78] sm:$0xff] %vm5327, %v5310
      %5344 = vst.msk [vmem:[%s244 + $0x80] sm:$0xff] %vm5327, %v5311
      %5345 = vst.msk [vmem:[%s244 + $0x88] sm:$0xff] %vm5327, %v5312
      %5346 = vst.msk [vmem:[%s244 + $0x90] sm:$0xff] %vm5327, %v5313
      %5347 = vst.msk [vmem:[%s244 + $0x98] sm:$0xff] %vm5327, %v5314
      %5348 = vst.msk [vmem:[%s244 + $0xa0] sm:$0xff] %vm5327, %v5315
      %5349 = vst.msk [vmem:[%s244 + $0xa8] sm:$0xff] %vm5327, %v5316
      %5350 = vst.msk [vmem:[%s244 + $0xb0] sm:$0xff] %vm5327, %v5317
      %5351 = vst.msk [vmem:[%s244 + $0xb8] sm:$0xff] %vm5327, %v5318
      %5352 = vst.msk [vmem:[%s244 + $0xc0] sm:$0xff] %vm5327, %v5319
      %5353 = vst.msk [vmem:[%s244 + $0xc8] sm:$0xff] %vm5327, %v5320
      %5354 = vst.msk [vmem:[%s244 + $0xd0] sm:$0xff] %vm5327, %v5321
      %5355 = vst.msk [vmem:[%s244 + $0xd8] sm:$0xff] %vm5327, %v5322
      %5356 = vst.msk [vmem:[%s244 + $0xe0] sm:$0xff] %vm5327, %v5323
      %5357 = vst.msk [vmem:[%s244 + $0xe8] sm:$0xff] %vm5327, %v5324
      %5358 = vst.msk [vmem:[%s244 + $0xf0] sm:$0xff] %vm5327, %v5325
      %5359 = vst.msk [vmem:[%s244 + $0xf8] sm:$0xff] %vm5327, %v5326
      %p5360 = scmp.lt.s32.totalorder %s16, 1
      %s5361 = scalar_select %p5360, %s16, 1
      %s5362 = smul.addr %s5361, 32
      %s5363 = smul.addr %s5362, 8
      %s5364 = scalar_lea.vmem %s5, %s5363
      // Predicated region
      $region41: #{_lambda_.1} parent=39 // pred_check
        %p5365 = pneg %p149
      $region42: #{_lambda_.1} parent=39 // pred_check_branch
        %5367 = sbr.rel (%p5365) target = $region44
      $region43: #{_lambda_.1} parent=39 // pred_region
        _
      $region44: #{_lambda_.1} parent=39 // pred_fallthru
        _
    $region40: #{_lambda_.1} parent=5 // pred_fallthru
      _
    %p5368 = scmp.le.s32.totalorder 2, %s11
    // Predicated region
    $region45: #{_lambda_.1} parent=5 // pred_check
      %p5369 = pneg %p5368
    $region46: #{_lambda_.1} parent=5 // pred_check_branch
      %5371 = sbr.rel (%p5369) target = $region48
    $region47: #{_lambda_.1} parent=5 // pred_region
      %s5372 = ssub.s32 %s11, 2
      // Predicated region
      $region49: #{_lambda_.1} parent=47 // pred_check
        %p5373 = pneg %p155
      $region50: #{_lambda_.1} parent=47 // pred_check_branch
        %5375 = sbr.rel (%p5373) target = $region52
      $region51: #{_lambda_.1} parent=47 // pred_region
        %p5376 = scmp.lt.s32.totalorder %s17, 1
        %s5377 = scalar_select %p5376, %s17, 1
        %s5378 = smul.addr %s5377, 32
        %s5379 = smul.addr %s5378, 8
        %s5380 = scalar_lea.vmem %s5, %s5379
      $region52: #{_lambda_.1} parent=47 // pred_fallthru
        _
    $region48: #{_lambda_.1} parent=5 // pred_fallthru
      _
  $region6: #{_lambda_.1} parent=0 // loop_footer
    %s15 = sadd.s32 1, %s11
  $region7: #{_lambda_.1} parent=0 // loop_footer_branch
    %10 = sbr.rel target = $region3
  $region8: #{_lambda_.1} parent=0 // loop_exit
    _

</llo_original>
